<compile_context>
chip_gen: v7x
topology: tpu7x:2x2x1
jax: 0.10.0
libtpu: 0.0.40
codegen_flags: <defaults>
</compile_context>

<pallas_src>
import jax
import jax.numpy as jnp
from jax import lax
from jax.experimental import pallas as pl
from jax.experimental.pallas import tpu as pltpu

# ----------------------------- configuration --------------------------------
N_TOKEN = 50
N_HEAD = 2
D_MODEL = 32          # = n_head * d_head
D_HEAD = 16
D_INNER = 64
N_LAYER = 3           # naive fixed-point iterations standing in for the DEQ solver
MEM_LEN = 8
LOCAL_SIZE = 0        # module arg; attention uses (local_size or 1000)
LN_EPS = 1e-5         # F.layer_norm default eps (no affine params in this module)
V_PAD = 128           # lane-dense padded vocab for the tied output projection


# ------------------------ fused DEQ decoder kernel --------------------------
def _make_fused_kernel(*, n_head, d_head, d_model, qlen, mlen, tgt_len, n_iter):
    hd = n_head * d_head          # == d_model (module adds inject(3*d_model) onto qkv(3*hd))
    klen = mlen + qlen
    scale = 1.0 / (d_head ** 0.5)
    has_mem = mlen > 0
    bf16 = jnp.bfloat16

    def kernel(*refs):
        if has_mem:
            emb_ref, zhist_ref, uhist_ref = refs[:3]
            rest = refs[3:]
        else:
            emb_ref = refs[0]
            zhist_ref = uhist_ref = None
            rest = refs[1:]
        (w_inj_ref, b_inj_ref, wqkv_ref, rwb_ref, g2u_ref, bias_ref,
         wo_ref, bo_ref, w1_ref, b1_ref, w2_ref, b2_ref,
         wout_ref, bout_ref, zu_ref, logits_ref) = rest

        emb = emb_ref[0]                                              # (qlen, D) f32

        # ---------------- loop-invariant precompute (hoisted) ----------------
        # inject_conv (1x1 conv): u_now = emb @ W_inj^T + b  (f32: it is also a mem output)
        u_now = jnp.dot(emb, w_inj_ref[...],
                        preferred_element_type=jnp.float32) + b_inj_ref[...]   # (qlen, 3D)
        # injected-u bias for the fused QKV matmul; 1/sqrt(d_head) folded into the q part
        u_bias = jnp.concatenate([u_now[:, :hd] * scale, u_now[:, hd:]], axis=1)

        wqkv = wqkv_ref[...]                     # (D, 3*hd) bf16, q columns pre-scaled
        g2u = g2u_ref[...]                       # (qlen, hd, H*klen) bf16 (pre-skewed pos)
        rwb = rwb_ref[...]                       # (1, hd) f32, pre-scaled r_w_bias
        bias_all = bias_ref[...]                 # (qlen, H*klen) f32: scale*rrb.rsh + mask
        bo = bo_ref[...]
        w1, b1 = w1_ref[...], b1_ref[...]
        w2, b2 = w2_ref[...], b2_ref[...]
        wo_heads = [wo_ref[n] for n in range(n_head)]                 # (d_head, D) bf16
        bias_heads = [bias_all[:, n * klen:(n + 1) * klen] for n in range(n_head)]

        # memory rows are constant across the whole DEQ loop -> project their K/V once
        if has_mem:
            zh_b = zhist_ref[0].astype(bf16)
            kv_hist = (jnp.dot(zh_b, wqkv[:, hd:], preferred_element_type=jnp.float32)
                       + uhist_ref[0][:, hd:])                        # (mlen, 2*hd)
            k_hist_b = kv_hist[:, :hd].astype(bf16)
            v_hist_b = kv_hist[:, hd:].astype(bf16)

        # ---------------- one weight-tied TransformerDecoder step -------------------
        def deq_step(_, z):
            z_b = z.astype(bf16)
            # fused QKV projection of the qlen new rows (q pre-scaled, u injected)
            qkv = jnp.dot(z_b, wqkv, preferred_element_type=jnp.float32) + u_bias
            q = qkv[:, :hd]                                           # scale*(z Wq + u_q)
            k_new_b = qkv[:, hd:2 * hd].astype(bf16)
            v_new_b = qkv[:, 2 * hd:].astype(bf16)
            if has_mem:
                k_b = jnp.concatenate([k_hist_b, k_new_b], axis=0)    # (klen, hd)
                v_b = jnp.concatenate([v_hist_b, v_new_b], axis=0)
            else:
                k_b, v_b = k_new_b, v_new_b

            # BD term for ALL heads in ONE batched contraction against the pre-skewed,
            # block-diagonal-over-heads positional tensor (rel-shift baked in host-side;
            # its zero-filled entries coincide exactly with the -1e30 masked region).
            bd = lax.dot_general(q.astype(bf16)[:, None, :], g2u,
                                 (((2,), (1,)), ((0,), (0,))),
                                 preferred_element_type=jnp.float32)[:, 0, :]  # (qlen,H*klen)

            rwq_b = (q + rwb).astype(bf16)
            attn = None
            for n in range(n_head):
                c0 = n * d_head
                # AC[i, j] = scale * (q_i + r_w_bias) . k_j
                ac = lax.dot_general(rwq_b[:, c0:c0 + d_head], k_b[:, c0:c0 + d_head],
                                     (((1,), (1,)), ((), ())),
                                     preferred_element_type=jnp.float32)       # (qlen,klen)
                # bias_heads folds scale*(r_r_bias . r_shift) + causal mask (-1e30)
                s = ac + bd[:, n * klen:(n + 1) * klen] + bias_heads[n]
                s = s - jnp.max(s, axis=-1, keepdims=True)
                e = jnp.exp(s)
                p = e * pl.reciprocal(jnp.sum(e, axis=-1, keepdims=True), approx=True)
                pv = jnp.dot(p.astype(bf16), v_b[:, c0:c0 + d_head],
                             preferred_element_type=jnp.float32)               # (qlen, Dh)
                # o_net folded per head: accumulate directly, no head concat
                ho = jnp.dot(pv.astype(bf16), wo_heads[n],
                             preferred_element_type=jnp.float32)               # (qlen, D)
                attn = ho if attn is None else attn + ho

            out1 = attn + bo + z
            mu = jnp.mean(out1, axis=-1, keepdims=True)
            xc = out1 - mu
            var = jnp.mean(xc * xc, axis=-1, keepdims=True)
            x = xc * lax.rsqrt(var + LN_EPS)                                   # post-LN (attn)

            h = jnp.maximum(jnp.dot(x.astype(bf16), w1,
                                    preferred_element_type=jnp.float32) + b1, 0.0)
            y = jnp.dot(h.astype(bf16), w2,
                        preferred_element_type=jnp.float32) + b2 + x
            mu2 = jnp.mean(y, axis=-1, keepdims=True)
            yc = y - mu2
            var2 = jnp.mean(yc * yc, axis=-1, keepdims=True)
            return yc * lax.rsqrt(var2 + LN_EPS)                               # post-LN (FFN)

        z0 = jnp.zeros((qlen, d_model), jnp.float32)
        # TODO(synk): the real model runs get_deq's root solver (Anderson/Broyden) + jac_reg;
        # the fixed point is approximated by n_iter naive iterations here.
        z_star = lax.fori_loop(0, n_iter, deq_step, z0, unroll=True)

        # packed, lane-dense output slab: [z_star | u_now]  (D + 3D = 128 lanes)
        zu_ref[0] = jnp.concatenate([z_star, u_now], axis=1).astype(zu_ref.dtype)

        # tied output projection (ProjectedAdaptiveLogSoftmax head), lane-dense (V_PAD)
        z_pred_b = z_star[qlen - tgt_len:, :].astype(bf16)
        logits_ref[0] = (jnp.dot(z_pred_b, wout_ref[...],
                                 preferred_element_type=jnp.float32)
                         + bout_ref[...]).astype(logits_ref.dtype)

    return kernel


def _rep_spec(shape):
    nd = len(shape)
    return pl.BlockSpec(shape, lambda b, _nd=nd: (0,) * _nd)


def fused_deq_forward(word_emb, z_hist, u_hist, params, *, tgt_len, n_iter=N_LAYER):
    """word_emb: (B, qlen, D) scaled embeddings; z_hist/u_hist: (B, mlen, D)/(B, mlen, 3D).
    Returns (z_now (B,qlen,D), u_now (B,qlen,3D), logits_padded (B,tgt_len,V_PAD))."""
    B, qlen, d_model = word_emb.shape
    mlen = z_hist.shape[1]
    klen = mlen + qlen
    n_head, d_head = N_HEAD, D_HEAD
    hd = n_head * d_head
    scale = 1.0 / (d_head ** 0.5)

    # -------- host-side (DEQ-loop- and batch-invariant) precompute -------------------
    pos_rows = positional_embedding_rows(klen, d_model)                   # (klen, D)
    r = pos_rows @ params['w_r_t']                                        # (klen, hd)
    r_heads = r.reshape(klen, n_head, d_head).transpose(1, 0, 2)          # (H, klen, Dh)

    # pre-skewed (_rel_shift baked in) positional vectors: rsh[n,i,j,:] = r_n[qlen-1-i+j];
    # zero outside [0, klen) -- those entries lie exactly in the causal-masked region
    # (j > i + mlen) where the constant bias adds -1e30, so they never contribute.
    i_idx = jnp.arange(qlen)[:, None]
    j_idx = jnp.arange(klen)[None, :]
    src = qlen - 1 - i_idx + j_idx                                        # (qlen, klen)
    valid = (src >= 0) & (src < klen)
    rsh = jnp.take(r_heads, jnp.clip(src, 0, klen - 1), axis=1)           # (H,qlen,klen,Dh)
    rsh = jnp.where(valid[None, :, :, None], rsh, 0.0)

    # block-diagonal-over-heads, q-indexed tensor for the in-loop BD contraction:
    #   g2u[i, n*Dh + h, n*klen + j] = rsh[n, i, j, h]
    g2u = jnp.zeros((qlen, hd, n_head * klen), jnp.float32)
    for n in range(n_head):
        g2u = g2u.at[:, n * d_head:(n + 1) * d_head,
                     n * klen:(n + 1) * klen].set(jnp.transpose(rsh[n], (0, 2, 1)))
    g2u = g2u.astype(jnp.bfloat16)

    # constant attention bias: scale*(r_r_bias . r_shift) + causal/local mask (-1e30),
    # heads stacked along lanes (m = n*klen + j)
    bd_rr = jnp.einsum('nd,nijd->nij', params['r_r_bias'], rsh) * scale   # (H,qlen,klen)
    local = LOCAL_SIZE if LOCAL_SIZE else 1000
    mask = j_idx > i_idx + mlen                                           # causal
    if klen > local:    # locality term statically elided when inactive (klen <= local)
        mask = mask | (j_idx <= i_idx + mlen - local)
    bias = bd_rr + jnp.where(mask, -1e30, 0.0)[None]
    bias_all = jnp.transpose(bias, (1, 0, 2)).reshape(qlen, n_head * klen)

    # fused QKV weight with 1/sqrt(d_head) folded into the q columns; bf16 MXU operands
    qscale = jnp.concatenate([jnp.full((hd,), scale, jnp.float32),
                              jnp.ones((2 * hd,), jnp.float32)])
    wqkv = (params['w_qkv_t'] * qscale[None, :]).astype(jnp.bfloat16)     # (D, 3*hd)
    rwb = (params['r_w_bias'].reshape(1, hd) * scale).astype(jnp.float32)
    wo_h = params['w_o_t'].reshape(n_head, d_head, d_model).astype(jnp.bfloat16)

    # tied output projection, padded to a lane-dense (multiple-of-128) vocab
    wout = jnp.zeros((d_model, V_PAD), jnp.float32).at[:, :N_TOKEN].set(
        jnp.transpose(params['emb'])).astype(jnp.bfloat16)
    bout = jnp.zeros((1, V_PAD), jnp.float32).at[:, :N_TOKEN].set(params['crit_bias'])

    kernel = _make_fused_kernel(n_head=n_head, d_head=d_head, d_model=d_model,
                                qlen=qlen, mlen=mlen, tgt_len=tgt_len, n_iter=n_iter)

    data_specs = [pl.BlockSpec((1, qlen, d_model), lambda b: (b, 0, 0))]
    inputs = [word_emb]
    if mlen > 0:
        data_specs += [pl.BlockSpec((1, mlen, d_model), lambda b: (b, 0, 0)),
                       pl.BlockSpec((1, mlen, 3 * d_model), lambda b: (b, 0, 0))]
        inputs += [z_hist, u_hist]

    weights = [params['w_inj_t'], params['b_inj'], wqkv, rwb, g2u, bias_all,
               wo_h, params['b_o'],
               params['w_ff1_t'].astype(jnp.bfloat16), params['b_ff1'],
               params['w_ff2_t'].astype(jnp.bfloat16), params['b_ff2'],
               wout, bout]
    weight_specs = [_rep_spec(w.shape) for w in weights]

    zu, logits_pad = pl.pallas_call(
        kernel,
        out_shape=(jax.ShapeDtypeStruct((B, qlen, 4 * d_model), jnp.float32),
                   jax.ShapeDtypeStruct((B, tgt_len, V_PAD), jnp.float32)),
        grid=(B,),
        in_specs=data_specs + weight_specs,
        out_specs=(pl.BlockSpec((1, qlen, 4 * d_model), lambda b: (b, 0, 0)),
                   pl.BlockSpec((1, tgt_len, V_PAD), lambda b: (b, 0, 0))),
        compiler_params=pltpu.CompilerParams(dimension_semantics=("parallel",)),
    )(*inputs, *weights)

    z_now = zu[:, :, :d_model]
    u_now = zu[:, :, d_model:]
    return z_now, u_now, logits_pad


# --------------------------------- glue --------------------------------------
def positional_embedding_rows(klen, d_model):
    # PositionalEmbedding: pos_seq = [klen-1, ..., 0]; rows are per-position vectors.
    pos_seq = jnp.arange(klen - 1, -1, -1.0, dtype=jnp.float32)              # (klen,)
    inv_freq = 1.0 / (10000.0 ** (jnp.arange(0.0, d_model, 2.0,
                                              dtype=jnp.float32) / d_model))
    sinusoid = pos_seq[:, None] * inv_freq[None, :]                          # (klen, D/2)
    return jnp.concatenate([jnp.sin(sinusoid), jnp.cos(sinusoid)], axis=1)   # (klen, D)


def init_params(key):
    """Deterministic synthetic parameters (kernel layouts; *_t = PyTorch weight transposed)."""
    ks = jax.random.split(key, 10)

    def nrm(k, shape, scale=0.05):
        return jax.random.normal(k, shape, jnp.float32) * scale

    p = {}
    p['emb'] = nrm(ks[0], (N_TOKEN, D_MODEL), 0.02)            # word_emb (tied to crit)
    p['w_inj_t'] = nrm(ks[1], (D_MODEL, 3 * D_MODEL))          # inject_conv weight^T
    p['b_inj'] = jnp.zeros((1, 3 * D_MODEL), jnp.float32)
    p['w_qkv_t'] = nrm(ks[2], (D_MODEL, 3 * N_HEAD * D_HEAD))  # qkv_net weight^T (no bias)
    p['w_r_t'] = nrm(ks[3], (D_MODEL, N_HEAD * D_HEAD))        # r_net weight^T (no bias)
    p['r_w_bias'] = jax.random.uniform(ks[4], (N_HEAD, D_HEAD), jnp.float32, -0.05, 0.05)
    p['r_r_bias'] = jax.random.uniform(ks[5], (N_HEAD, D_HEAD), jnp.float32, -0.05, 0.05)
    p['w_o_t'] = nrm(ks[6], (N_HEAD * D_HEAD, D_MODEL))        # o_net weight^T
    p['b_o'] = jnp.zeros((1, D_MODEL), jnp.float32)
    p['w_ff1_t'] = nrm(ks[7], (D_MODEL, D_INNER))              # ff1_net weight^T
    p['b_ff1'] = jnp.zeros((1, D_INNER), jnp.float32)
    p['w_ff2_t'] = nrm(ks[8], (D_INNER, D_MODEL))              # ff2_net weight^T
    p['b_ff2'] = jnp.zeros((1, D_MODEL), jnp.float32)
    p['crit_bias'] = jnp.zeros((1, N_TOKEN), jnp.float32)      # output softmax bias
    return p


def deq_transformer_lm_forward(params, data, target, mems=None):
    """data, target: (B, L) int32; mems (module layout): [(B, D, M), (B, 3D, M)] or None."""
    B, qlen = data.shape
    tgt_len = target.shape[-1]

    if mems is None or mems[0].size == 0:
        z_hist = jnp.zeros((B, 0, D_MODEL), jnp.float32)
        u_hist = jnp.zeros((B, 0, 3 * D_MODEL), jnp.float32)
    else:
        z_hist = jnp.transpose(mems[0], (0, 2, 1))   # -> row layout (B, M, C)
        u_hist = jnp.transpose(mems[1], (0, 2, 1))
    mlen = z_hist.shape[1]

    # AdaptiveEmbedding (div_val=1, no cutoffs): lookup + sqrt(d_model); iodrop = id (eval)
    word_emb = jnp.take(params['emb'], data, axis=0) * (D_MODEL ** 0.5)      # (B, L, D)

    # One fused Pallas kernel: inject_conv + N_LAYER DEQ iterations + tied projection.
    z_now, u_now, logits_pad = fused_deq_forward(word_emb, z_hist, u_hist, params,
                                                 tgt_len=tgt_len)

    jac_loss = jnp.zeros((B, 1), jnp.float32)
    sradius = jnp.zeros((B, 1), jnp.float32)

    # ProjectedAdaptiveLogSoftmax (cutoffs=[], tied weight); padded vocab columns dropped.
    # NOTE: pl.reciprocal(approx=True) in the kernel softmax and bf16 MXU operands give a
    # small relative error vs the f32 PyTorch reference (inference-grade).
    logits = logits_pad[..., :N_TOKEN]                                       # (B, T, V)
    logp = jax.nn.log_softmax(logits, axis=-1)
    nll = -jnp.take_along_axis(logp, target[..., None], axis=-1)[..., 0]     # (B, T)
    # TODO(synk): fp_correction gamma-weights losses over intermediate DEQ iterates;
    # only the final iterate's mean NLL is returned here.
    loss = jnp.mean(nll)

    # _update_mems (returned in the module's (B, C, L) layout)
    z_cat = jnp.concatenate([z_hist, z_now], axis=1)
    u_cat = jnp.concatenate([u_hist, u_now], axis=1)
    end_idx = mlen + qlen
    beg_idx = max(0, end_idx - MEM_LEN)
    new_mems = [jnp.transpose(z_cat[:, beg_idx:end_idx, :], (0, 2, 1)),
                jnp.transpose(u_cat[:, beg_idx:end_idx, :], (0, 2, 1))]
    return loss, jac_loss, sradius, new_mems


if __name__ == "__main__":
    key = jax.random.PRNGKey(0)
    pkey, dkey, tkey, d2key, t2key = jax.random.split(key, 5)
    params = init_params(pkey)

    B, L = 2, 8
    data = jax.random.randint(dkey, (B, L), 0, N_TOKEN, dtype=jnp.int32)
    target = jax.random.randint(tkey, (B, L), 0, N_TOKEN, dtype=jnp.int32)

    fwd = jax.jit(deq_transformer_lm_forward)

    # step 1: no memory (mlen = 0)
    loss, jac_loss, sradius, mems = fwd(params, data, target)
    jax.block_until_ready(loss)
    assert mems[0].shape == (B, D_MODEL, MEM_LEN)
    assert mems[1].shape == (B, 3 * D_MODEL, MEM_LEN)
    assert bool(jnp.isfinite(loss))

    # step 2: with Transformer-XL style memory (mlen = MEM_LEN), exercises klen > qlen
    data2 = jax.random.randint(d2key, (B, L), 0, N_TOKEN, dtype=jnp.int32)
    target2 = jax.random.randint(t2key, (B, L), 0, N_TOKEN, dtype=jnp.int32)
    loss2, _, _, mems2 = fwd(params, data2, target2, mems)
    jax.block_until_ready(loss2)
    jax.block_until_ready(mems2[0])
    jax.block_until_ready(mems2[1])
    assert mems2[0].shape == (B, D_MODEL, MEM_LEN)
    assert mems2[1].shape == (B, 3 * D_MODEL, MEM_LEN)
    assert bool(jnp.isfinite(loss2))

    print("KERNEL_OK")
</pallas_src>

<mosaic_0001>
module attributes {stable_mosaic.version = 11 : i64} {
  func.func @kernel(%arg0: i32, %arg1: memref<1x8x32xf32, #tpu.memory_space<vmem>>, %arg2: memref<32x96xf32, #tpu.memory_space<vmem>>, %arg3: memref<1x96xf32, #tpu.memory_space<vmem>>, %arg4: memref<32x96xbf16, #tpu.memory_space<vmem>>, %arg5: memref<1x32xf32, #tpu.memory_space<vmem>>, %arg6: memref<8x32x16xbf16, #tpu.memory_space<vmem>>, %arg7: memref<8x16xf32, #tpu.memory_space<vmem>>, %arg8: memref<2x16x32xbf16, #tpu.memory_space<vmem>>, %arg9: memref<1x32xf32, #tpu.memory_space<vmem>>, %arg10: memref<32x64xbf16, #tpu.memory_space<vmem>>, %arg11: memref<1x64xf32, #tpu.memory_space<vmem>>, %arg12: memref<64x32xbf16, #tpu.memory_space<vmem>>, %arg13: memref<1x32xf32, #tpu.memory_space<vmem>>, %arg14: memref<32x128xbf16, #tpu.memory_space<vmem>>, %arg15: memref<1x128xf32, #tpu.memory_space<vmem>>, %arg16: memref<1x8x128xf32, #tpu.memory_space<vmem>>, %arg17: memref<1x8x128xf32, #tpu.memory_space<vmem>>) attributes {dimension_semantics = [#tpu.dimension_semantics<parallel>], iteration_bounds = array<i64: 2>, scalar_prefetch = 0 : i64, scratch_operands = 0 : i64, tpu.core_type = #tpu.core_type<tc>, window_params = [{transform_indices = @transform_0, window_bounds = array<i64: 1, 8, 32>}, {pipeline_mode = #tpu.pipeline_mode<synchronous>, transform_indices = @transform_1, window_bounds = array<i64: 32, 96>}, {pipeline_mode = #tpu.pipeline_mode<synchronous>, transform_indices = @transform_2, window_bounds = array<i64: 1, 96>}, {pipeline_mode = #tpu.pipeline_mode<synchronous>, transform_indices = @transform_3, window_bounds = array<i64: 32, 96>}, {pipeline_mode = #tpu.pipeline_mode<synchronous>, transform_indices = @transform_4, window_bounds = array<i64: 1, 32>}, {pipeline_mode = #tpu.pipeline_mode<synchronous>, transform_indices = @transform_5, window_bounds = array<i64: 8, 32, 16>}, {pipeline_mode = #tpu.pipeline_mode<synchronous>, transform_indices = @transform_6, window_bounds = array<i64: 8, 16>}, {pipeline_mode = #tpu.pipeline_mode<synchronous>, transform_indices = @transform_7, window_bounds = array<i64: 2, 16, 32>}, {pipeline_mode = #tpu.pipeline_mode<synchronous>, transform_indices = @transform_8, window_bounds = array<i64: 1, 32>}, {pipeline_mode = #tpu.pipeline_mode<synchronous>, transform_indices = @transform_9, window_bounds = array<i64: 32, 64>}, {pipeline_mode = #tpu.pipeline_mode<synchronous>, transform_indices = @transform_10, window_bounds = array<i64: 1, 64>}, {pipeline_mode = #tpu.pipeline_mode<synchronous>, transform_indices = @transform_11, window_bounds = array<i64: 64, 32>}, {pipeline_mode = #tpu.pipeline_mode<synchronous>, transform_indices = @transform_12, window_bounds = array<i64: 1, 32>}, {pipeline_mode = #tpu.pipeline_mode<synchronous>, transform_indices = @transform_13, window_bounds = array<i64: 32, 128>}, {pipeline_mode = #tpu.pipeline_mode<synchronous>, transform_indices = @transform_14, window_bounds = array<i64: 1, 128>}, {transform_indices = @transform_15, window_bounds = array<i64: 1, 8, 128>}, {transform_indices = @transform_16, window_bounds = array<i64: 1, 8, 128>}]} {
    %c0 = arith.constant 0 : index
    %c0_0 = arith.constant 0 : index
    %c0_1 = arith.constant 0 : index
    %0 = vector.load %arg1[%c0, %c0_0, %c0_1] : memref<1x8x32xf32, #tpu.memory_space<vmem>>, vector<1x8x32xf32>
    %1 = vector.shape_cast %0 : vector<1x8x32xf32> to vector<8x32xf32>
    %c0_2 = arith.constant 0 : index
    %c0_3 = arith.constant 0 : index
    %2 = vector.load %arg2[%c0_2, %c0_3] : memref<32x96xf32, #tpu.memory_space<vmem>>, vector<32x96xf32>
    %cst = arith.constant dense<0.000000e+00> : vector<8x96xf32>
    %3 = tpu.matmul %1, %2, %cst {dimension_numbers = #tpu.dot_dimension_numbers<[1], [0], [0], [1], [0, 0, 1, 1], [], []>} : vector<8x32xf32>, vector<32x96xf32>, vector<8x96xf32> -> vector<8x96xf32>
    %c0_4 = arith.constant 0 : index
    %c0_5 = arith.constant 0 : index
    %4 = vector.load %arg3[%c0_4, %c0_5] : memref<1x96xf32, #tpu.memory_space<vmem>>, vector<1x96xf32>
    %5 = vector.broadcast %4 : vector<1x96xf32> to vector<8x96xf32>
    %6 = arith.addf %3, %5 : vector<8x96xf32>
    %7 = vector.extract_strided_slice %6 {offsets = [0, 0], sizes = [8, 32], strides = [1, 1]} : vector<8x96xf32> to vector<8x32xf32>
    %cst_6 = arith.constant 2.500000e-01 : f32
    %8 = vector.broadcast %cst_6 : f32 to vector<8x32xf32>
    %9 = arith.mulf %7, %8 : vector<8x32xf32>
    %10 = vector.extract_strided_slice %6 {offsets = [0, 32], sizes = [8, 64], strides = [1, 1]} : vector<8x96xf32> to vector<8x64xf32>
    %11 = tpu.concatenate %9, %10 in 1 : vector<8x32xf32>, vector<8x64xf32> -> vector<8x96xf32>
    %c0_7 = arith.constant 0 : index
    %c0_8 = arith.constant 0 : index
    %12 = vector.load %arg4[%c0_7, %c0_8] : memref<32x96xbf16, #tpu.memory_space<vmem>>, vector<32x96xbf16>
    %c0_9 = arith.constant 0 : index
    %c0_10 = arith.constant 0 : index
    %c0_11 = arith.constant 0 : index
    %13 = vector.load %arg6[%c0_9, %c0_10, %c0_11] : memref<8x32x16xbf16, #tpu.memory_space<vmem>>, vector<8x32x16xbf16>
    %c0_12 = arith.constant 0 : index
    %c0_13 = arith.constant 0 : index
    %14 = vector.load %arg5[%c0_12, %c0_13] : memref<1x32xf32, #tpu.memory_space<vmem>>, vector<1x32xf32>
    %c0_14 = arith.constant 0 : index
    %c0_15 = arith.constant 0 : index
    %15 = vector.load %arg7[%c0_14, %c0_15] : memref<8x16xf32, #tpu.memory_space<vmem>>, vector<8x16xf32>
    %c0_16 = arith.constant 0 : index
    %c0_17 = arith.constant 0 : index
    %16 = vector.load %arg9[%c0_16, %c0_17] : memref<1x32xf32, #tpu.memory_space<vmem>>, vector<1x32xf32>
    %c0_18 = arith.constant 0 : index
    %c0_19 = arith.constant 0 : index
    %17 = vector.load %arg10[%c0_18, %c0_19] : memref<32x64xbf16, #tpu.memory_space<vmem>>, vector<32x64xbf16>
    %c0_20 = arith.constant 0 : index
    %c0_21 = arith.constant 0 : index
    %18 = vector.load %arg11[%c0_20, %c0_21] : memref<1x64xf32, #tpu.memory_space<vmem>>, vector<1x64xf32>
    %c0_22 = arith.constant 0 : index
    %c0_23 = arith.constant 0 : index
    %19 = vector.load %arg12[%c0_22, %c0_23] : memref<64x32xbf16, #tpu.memory_space<vmem>>, vector<64x32xbf16>
    %c0_24 = arith.constant 0 : index
    %c0_25 = arith.constant 0 : index
    %20 = vector.load %arg13[%c0_24, %c0_25] : memref<1x32xf32, #tpu.memory_space<vmem>>, vector<1x32xf32>
    %c0_26 = arith.constant 0 : index
    %c0_27 = arith.constant 0 : index
    %c0_28 = arith.constant 0 : index
    %21 = vector.load %arg8[%c0_26, %c0_27, %c0_28] : memref<2x16x32xbf16, #tpu.memory_space<vmem>>, vector<1x16x32xbf16>
    %22 = vector.shape_cast %21 : vector<1x16x32xbf16> to vector<16x32xbf16>
    %c1 = arith.constant 1 : index
    %c0_29 = arith.constant 0 : index
    %c0_30 = arith.constant 0 : index
    %23 = vector.load %arg8[%c1, %c0_29, %c0_30] : memref<2x16x32xbf16, #tpu.memory_space<vmem>>, vector<1x16x32xbf16>
    %24 = vector.shape_cast %23 : vector<1x16x32xbf16> to vector<16x32xbf16>
    %25 = vector.extract_strided_slice %15 {offsets = [0, 0], sizes = [8, 8], strides = [1, 1]} : vector<8x16xf32> to vector<8x8xf32>
    %26 = vector.extract_strided_slice %15 {offsets = [0, 8], sizes = [8, 8], strides = [1, 1]} : vector<8x16xf32> to vector<8x8xf32>
    %cst_31 = arith.constant 0.000000e+00 : f32
    %27 = vector.broadcast %cst_31 : f32 to vector<8x32xf32>
    %c0_i32 = arith.constant 0 : i32
    %28 = arith.truncf %27 : vector<8x32xf32> to vector<8x32xbf16>
    %cst_32 = arith.constant dense<0.000000e+00> : vector<8x96xf32>
    %29 = tpu.matmul %28, %12, %cst_32 {dimension_numbers = #tpu.dot_dimension_numbers<[1], [0], [0], [1], [0, 0, 1, 1], [], []>} : vector<8x32xbf16>, vector<32x96xbf16>, vector<8x96xf32> -> vector<8x96xf32>
    %30 = arith.addf %29, %11 : vector<8x96xf32>
    %31 = vector.extract_strided_slice %30 {offsets = [0, 0], sizes = [8, 32], strides = [1, 1]} : vector<8x96xf32> to vector<8x32xf32>
    %32 = vector.extract_strided_slice %30 {offsets = [0, 32], sizes = [8, 32], strides = [1, 1]} : vector<8x96xf32> to vector<8x32xf32>
    %33 = arith.truncf %32 : vector<8x32xf32> to vector<8x32xbf16>
    %34 = vector.extract_strided_slice %30 {offsets = [0, 64], sizes = [8, 32], strides = [1, 1]} : vector<8x96xf32> to vector<8x32xf32>
    %35 = arith.truncf %34 : vector<8x32xf32> to vector<8x32xbf16>
    %36 = arith.truncf %31 : vector<8x32xf32> to vector<8x32xbf16>
    %37 = vector.shape_cast %36 : vector<8x32xbf16> to vector<8x1x32xbf16>
    %cst_33 = arith.constant dense<0.000000e+00> : vector<8x1x16xf32>
    %38 = tpu.matmul %37, %13, %cst_33 {dimension_numbers = #tpu.dot_dimension_numbers<[2], [1], [1], [2], [0, 0, 0, 1, 1, 2], [0], [0]>} : vector<8x1x32xbf16>, vector<8x32x16xbf16>, vector<8x1x16xf32> -> vector<8x1x16xf32>
    %39 = vector.shape_cast %38 : vector<8x1x16xf32> to vector<8x16xf32>
    %40 = vector.broadcast %14 : vector<1x32xf32> to vector<8x32xf32>
    %41 = arith.addf %31, %40 : vector<8x32xf32>
    %42 = arith.truncf %41 : vector<8x32xf32> to vector<8x32xbf16>
    %43 = vector.extract_strided_slice %42 {offsets = [0, 0], sizes = [8, 16], strides = [1, 1]} : vector<8x32xbf16> to vector<8x16xbf16>
    %44 = vector.extract_strided_slice %33 {offsets = [0, 0], sizes = [8, 16], strides = [1, 1]} : vector<8x32xbf16> to vector<8x16xbf16>
    %cst_34 = arith.constant dense<0.000000e+00> : vector<8x8xf32>
    %45 = tpu.matmul %43, %44, %cst_34 {dimension_numbers = #tpu.dot_dimension_numbers<[1], [1], [0], [0], [0, 0, 1, 0], [], []>} : vector<8x16xbf16>, vector<8x16xbf16>, vector<8x8xf32> -> vector<8x8xf32>
    %46 = vector.extract_strided_slice %39 {offsets = [0, 0], sizes = [8, 8], strides = [1, 1]} : vector<8x16xf32> to vector<8x8xf32>
    %47 = arith.addf %45, %46 : vector<8x8xf32>
    %48 = arith.addf %47, %25 : vector<8x8xf32>
    %cst_35 = arith.constant dense<0xFF800000> : vector<8xf32>
    %49 = vector.multi_reduction <maximumf>, %48, %cst_35 [1] : vector<8x8xf32> to vector<8xf32>
    %50 = vector.shape_cast %49 : vector<8xf32> to vector<8x1xf32>
    %51 = vector.broadcast %50 : vector<8x1xf32> to vector<8x8xf32>
    %52 = arith.subf %48, %51 : vector<8x8xf32>
    %53 = math.exp %52 : vector<8x8xf32>
    %cst_36 = arith.constant dense<0.000000e+00> : vector<8xf32>
    %54 = vector.multi_reduction <add>, %53, %cst_36 [1] : vector<8x8xf32> to vector<8xf32>
    %55 = vector.shape_cast %54 : vector<8xf32> to vector<8x1xf32>
    %56 = tpu.reciprocal %55 {approx = true} : vector<8x1xf32> -> vector<8x1xf32>
    %57 = vector.broadcast %56 : vector<8x1xf32> to vector<8x8xf32>
    %58 = arith.mulf %53, %57 : vector<8x8xf32>
    %59 = arith.truncf %58 : vector<8x8xf32> to vector<8x8xbf16>
    %60 = vector.extract_strided_slice %35 {offsets = [0, 0], sizes = [8, 16], strides = [1, 1]} : vector<8x32xbf16> to vector<8x16xbf16>
    %cst_37 = arith.constant dense<0.000000e+00> : vector<8x16xf32>
    %61 = tpu.matmul %59, %60, %cst_37 {dimension_numbers = #tpu.dot_dimension_numbers<[1], [0], [0], [1], [0, 0, 1, 1], [], []>} : vector<8x8xbf16>, vector<8x16xbf16>, vector<8x16xf32> -> vector<8x16xf32>
    %62 = arith.truncf %61 : vector<8x16xf32> to vector<8x16xbf16>
    %cst_38 = arith.constant dense<0.000000e+00> : vector<8x32xf32>
    %63 = tpu.matmul %62, %22, %cst_38 {dimension_numbers = #tpu.dot_dimension_numbers<[1], [0], [0], [1], [0, 0, 1, 1], [], []>} : vector<8x16xbf16>, vector<16x32xbf16>, vector<8x32xf32> -> vector<8x32xf32>
    %64 = vector.extract_strided_slice %42 {offsets = [0, 16], sizes = [8, 16], strides = [1, 1]} : vector<8x32xbf16> to vector<8x16xbf16>
    %65 = vector.extract_strided_slice %33 {offsets = [0, 16], sizes = [8, 16], strides = [1, 1]} : vector<8x32xbf16> to vector<8x16xbf16>
    %cst_39 = arith.constant dense<0.000000e+00> : vector<8x8xf32>
    %66 = tpu.matmul %64, %65, %cst_39 {dimension_numbers = #tpu.dot_dimension_numbers<[1], [1], [0], [0], [0, 0, 1, 0], [], []>} : vector<8x16xbf16>, vector<8x16xbf16>, vector<8x8xf32> -> vector<8x8xf32>
    %67 = vector.extract_strided_slice %39 {offsets = [0, 8], sizes = [8, 8], strides = [1, 1]} : vector<8x16xf32> to vector<8x8xf32>
    %68 = arith.addf %66, %67 : vector<8x8xf32>
    %69 = arith.addf %68, %26 : vector<8x8xf32>
    %cst_40 = arith.constant dense<0xFF800000> : vector<8xf32>
    %70 = vector.multi_reduction <maximumf>, %69, %cst_40 [1] : vector<8x8xf32> to vector<8xf32>
    %71 = vector.shape_cast %70 : vector<8xf32> to vector<8x1xf32>
    %72 = vector.broadcast %71 : vector<8x1xf32> to vector<8x8xf32>
    %73 = arith.subf %69, %72 : vector<8x8xf32>
    %74 = math.exp %73 : vector<8x8xf32>
    %cst_41 = arith.constant dense<0.000000e+00> : vector<8xf32>
    %75 = vector.multi_reduction <add>, %74, %cst_41 [1] : vector<8x8xf32> to vector<8xf32>
    %76 = vector.shape_cast %75 : vector<8xf32> to vector<8x1xf32>
    %77 = tpu.reciprocal %76 {approx = true} : vector<8x1xf32> -> vector<8x1xf32>
    %78 = vector.broadcast %77 : vector<8x1xf32> to vector<8x8xf32>
    %79 = arith.mulf %74, %78 : vector<8x8xf32>
    %80 = arith.truncf %79 : vector<8x8xf32> to vector<8x8xbf16>
    %81 = vector.extract_strided_slice %35 {offsets = [0, 16], sizes = [8, 16], strides = [1, 1]} : vector<8x32xbf16> to vector<8x16xbf16>
    %cst_42 = arith.constant dense<0.000000e+00> : vector<8x16xf32>
    %82 = tpu.matmul %80, %81, %cst_42 {dimension_numbers = #tpu.dot_dimension_numbers<[1], [0], [0], [1], [0, 0, 1, 1], [], []>} : vector<8x8xbf16>, vector<8x16xbf16>, vector<8x16xf32> -> vector<8x16xf32>
    %83 = arith.truncf %82 : vector<8x16xf32> to vector<8x16xbf16>
    %cst_43 = arith.constant dense<0.000000e+00> : vector<8x32xf32>
    %84 = tpu.matmul %83, %24, %cst_43 {dimension_numbers = #tpu.dot_dimension_numbers<[1], [0], [0], [1], [0, 0, 1, 1], [], []>} : vector<8x16xbf16>, vector<16x32xbf16>, vector<8x32xf32> -> vector<8x32xf32>
    %85 = arith.addf %63, %84 : vector<8x32xf32>
    %86 = vector.broadcast %16 : vector<1x32xf32> to vector<8x32xf32>
    %87 = arith.addf %85, %86 : vector<8x32xf32>
    %88 = arith.addf %87, %27 : vector<8x32xf32>
    %cst_44 = arith.constant dense<0.000000e+00> : vector<8xf32>
    %89 = vector.multi_reduction <add>, %88, %cst_44 [1] : vector<8x32xf32> to vector<8xf32>
    %90 = vector.shape_cast %89 : vector<8xf32> to vector<8x1xf32>
    %cst_45 = arith.constant 3.200000e+01 : f32
    %91 = vector.broadcast %cst_45 : f32 to vector<8x1xf32>
    %92 = arith.divf %90, %91 : vector<8x1xf32>
    %93 = vector.broadcast %92 : vector<8x1xf32> to vector<8x32xf32>
    %94 = arith.subf %88, %93 : vector<8x32xf32>
    %95 = arith.mulf %94, %94 : vector<8x32xf32>
    %cst_46 = arith.constant dense<0.000000e+00> : vector<8xf32>
    %96 = vector.multi_reduction <add>, %95, %cst_46 [1] : vector<8x32xf32> to vector<8xf32>
    %97 = vector.shape_cast %96 : vector<8xf32> to vector<8x1xf32>
    %cst_47 = arith.constant 3.200000e+01 : f32
    %98 = vector.broadcast %cst_47 : f32 to vector<8x1xf32>
    %99 = arith.divf %97, %98 : vector<8x1xf32>
    %cst_48 = arith.constant 9.99999974E-6 : f32
    %100 = vector.broadcast %cst_48 : f32 to vector<8x1xf32>
    %101 = arith.addf %99, %100 : vector<8x1xf32>
    %102 = math.rsqrt %101 : vector<8x1xf32>
    %103 = vector.broadcast %102 : vector<8x1xf32> to vector<8x32xf32>
    %104 = arith.mulf %94, %103 : vector<8x32xf32>
    %105 = arith.truncf %104 : vector<8x32xf32> to vector<8x32xbf16>
    %cst_49 = arith.constant dense<0.000000e+00> : vector<8x64xf32>
    %106 = tpu.matmul %105, %17, %cst_49 {dimension_numbers = #tpu.dot_dimension_numbers<[1], [0], [0], [1], [0, 0, 1, 1], [], []>} : vector<8x32xbf16>, vector<32x64xbf16>, vector<8x64xf32> -> vector<8x64xf32>
    %107 = vector.broadcast %18 : vector<1x64xf32> to vector<8x64xf32>
    %108 = arith.addf %106, %107 : vector<8x64xf32>
    %cst_50 = arith.constant 0.000000e+00 : f32
    %109 = vector.broadcast %cst_50 : f32 to vector<8x64xf32>
    %110 = arith.maximumf %108, %109 : vector<8x64xf32>
    %111 = arith.truncf %110 : vector<8x64xf32> to vector<8x64xbf16>
    %cst_51 = arith.constant dense<0.000000e+00> : vector<8x32xf32>
    %112 = tpu.matmul %111, %19, %cst_51 {dimension_numbers = #tpu.dot_dimension_numbers<[1], [0], [0], [1], [0, 0, 1, 1], [], []>} : vector<8x64xbf16>, vector<64x32xbf16>, vector<8x32xf32> -> vector<8x32xf32>
    %113 = vector.broadcast %20 : vector<1x32xf32> to vector<8x32xf32>
    %114 = arith.addf %112, %113 : vector<8x32xf32>
    %115 = arith.addf %114, %104 : vector<8x32xf32>
    %cst_52 = arith.constant dense<0.000000e+00> : vector<8xf32>
    %116 = vector.multi_reduction <add>, %115, %cst_52 [1] : vector<8x32xf32> to vector<8xf32>
    %117 = vector.shape_cast %116 : vector<8xf32> to vector<8x1xf32>
    %cst_53 = arith.constant 3.200000e+01 : f32
    %118 = vector.broadcast %cst_53 : f32 to vector<8x1xf32>
    %119 = arith.divf %117, %118 : vector<8x1xf32>
    %120 = vector.broadcast %119 : vector<8x1xf32> to vector<8x32xf32>
    %121 = arith.subf %115, %120 : vector<8x32xf32>
    %122 = arith.mulf %121, %121 : vector<8x32xf32>
    %cst_54 = arith.constant dense<0.000000e+00> : vector<8xf32>
    %123 = vector.multi_reduction <add>, %122, %cst_54 [1] : vector<8x32xf32> to vector<8xf32>
    %124 = vector.shape_cast %123 : vector<8xf32> to vector<8x1xf32>
    %cst_55 = arith.constant 3.200000e+01 : f32
    %125 = vector.broadcast %cst_55 : f32 to vector<8x1xf32>
    %126 = arith.divf %124, %125 : vector<8x1xf32>
    %cst_56 = arith.constant 9.99999974E-6 : f32
    %127 = vector.broadcast %cst_56 : f32 to vector<8x1xf32>
    %128 = arith.addf %126, %127 : vector<8x1xf32>
    %129 = math.rsqrt %128 : vector<8x1xf32>
    %130 = vector.broadcast %129 : vector<8x1xf32> to vector<8x32xf32>
    %131 = arith.mulf %121, %130 : vector<8x32xf32>
    %c1_i32 = arith.constant 1 : i32
    %132 = arith.truncf %131 : vector<8x32xf32> to vector<8x32xbf16>
    %cst_57 = arith.constant dense<0.000000e+00> : vector<8x96xf32>
    %133 = tpu.matmul %132, %12, %cst_57 {dimension_numbers = #tpu.dot_dimension_numbers<[1], [0], [0], [1], [0, 0, 1, 1], [], []>} : vector<8x32xbf16>, vector<32x96xbf16>, vector<8x96xf32> -> vector<8x96xf32>
    %134 = arith.addf %133, %11 : vector<8x96xf32>
    %135 = vector.extract_strided_slice %134 {offsets = [0, 0], sizes = [8, 32], strides = [1, 1]} : vector<8x96xf32> to vector<8x32xf32>
    %136 = vector.extract_strided_slice %134 {offsets = [0, 32], sizes = [8, 32], strides = [1, 1]} : vector<8x96xf32> to vector<8x32xf32>
    %137 = arith.truncf %136 : vector<8x32xf32> to vector<8x32xbf16>
    %138 = vector.extract_strided_slice %134 {offsets = [0, 64], sizes = [8, 32], strides = [1, 1]} : vector<8x96xf32> to vector<8x32xf32>
    %139 = arith.truncf %138 : vector<8x32xf32> to vector<8x32xbf16>
    %140 = arith.truncf %135 : vector<8x32xf32> to vector<8x32xbf16>
    %141 = vector.shape_cast %140 : vector<8x32xbf16> to vector<8x1x32xbf16>
    %cst_58 = arith.constant dense<0.000000e+00> : vector<8x1x16xf32>
    %142 = tpu.matmul %141, %13, %cst_58 {dimension_numbers = #tpu.dot_dimension_numbers<[2], [1], [1], [2], [0, 0, 0, 1, 1, 2], [0], [0]>} : vector<8x1x32xbf16>, vector<8x32x16xbf16>, vector<8x1x16xf32> -> vector<8x1x16xf32>
    %143 = vector.shape_cast %142 : vector<8x1x16xf32> to vector<8x16xf32>
    %144 = vector.broadcast %14 : vector<1x32xf32> to vector<8x32xf32>
    %145 = arith.addf %135, %144 : vector<8x32xf32>
    %146 = arith.truncf %145 : vector<8x32xf32> to vector<8x32xbf16>
    %147 = vector.extract_strided_slice %146 {offsets = [0, 0], sizes = [8, 16], strides = [1, 1]} : vector<8x32xbf16> to vector<8x16xbf16>
    %148 = vector.extract_strided_slice %137 {offsets = [0, 0], sizes = [8, 16], strides = [1, 1]} : vector<8x32xbf16> to vector<8x16xbf16>
    %cst_59 = arith.constant dense<0.000000e+00> : vector<8x8xf32>
    %149 = tpu.matmul %147, %148, %cst_59 {dimension_numbers = #tpu.dot_dimension_numbers<[1], [1], [0], [0], [0, 0, 1, 0], [], []>} : vector<8x16xbf16>, vector<8x16xbf16>, vector<8x8xf32> -> vector<8x8xf32>
    %150 = vector.extract_strided_slice %143 {offsets = [0, 0], sizes = [8, 8], strides = [1, 1]} : vector<8x16xf32> to vector<8x8xf32>
    %151 = arith.addf %149, %150 : vector<8x8xf32>
    %152 = arith.addf %151, %25 : vector<8x8xf32>
    %cst_60 = arith.constant dense<0xFF800000> : vector<8xf32>
    %153 = vector.multi_reduction <maximumf>, %152, %cst_60 [1] : vector<8x8xf32> to vector<8xf32>
    %154 = vector.shape_cast %153 : vector<8xf32> to vector<8x1xf32>
    %155 = vector.broadcast %154 : vector<8x1xf32> to vector<8x8xf32>
    %156 = arith.subf %152, %155 : vector<8x8xf32>
    %157 = math.exp %156 : vector<8x8xf32>
    %cst_61 = arith.constant dense<0.000000e+00> : vector<8xf32>
    %158 = vector.multi_reduction <add>, %157, %cst_61 [1] : vector<8x8xf32> to vector<8xf32>
    %159 = vector.shape_cast %158 : vector<8xf32> to vector<8x1xf32>
    %160 = tpu.reciprocal %159 {approx = true} : vector<8x1xf32> -> vector<8x1xf32>
    %161 = vector.broadcast %160 : vector<8x1xf32> to vector<8x8xf32>
    %162 = arith.mulf %157, %161 : vector<8x8xf32>
    %163 = arith.truncf %162 : vector<8x8xf32> to vector<8x8xbf16>
    %164 = vector.extract_strided_slice %139 {offsets = [0, 0], sizes = [8, 16], strides = [1, 1]} : vector<8x32xbf16> to vector<8x16xbf16>
    %cst_62 = arith.constant dense<0.000000e+00> : vector<8x16xf32>
    %165 = tpu.matmul %163, %164, %cst_62 {dimension_numbers = #tpu.dot_dimension_numbers<[1], [0], [0], [1], [0, 0, 1, 1], [], []>} : vector<8x8xbf16>, vector<8x16xbf16>, vector<8x16xf32> -> vector<8x16xf32>
    %166 = arith.truncf %165 : vector<8x16xf32> to vector<8x16xbf16>
    %cst_63 = arith.constant dense<0.000000e+00> : vector<8x32xf32>
    %167 = tpu.matmul %166, %22, %cst_63 {dimension_numbers = #tpu.dot_dimension_numbers<[1], [0], [0], [1], [0, 0, 1, 1], [], []>} : vector<8x16xbf16>, vector<16x32xbf16>, vector<8x32xf32> -> vector<8x32xf32>
    %168 = vector.extract_strided_slice %146 {offsets = [0, 16], sizes = [8, 16], strides = [1, 1]} : vector<8x32xbf16> to vector<8x16xbf16>
    %169 = vector.extract_strided_slice %137 {offsets = [0, 16], sizes = [8, 16], strides = [1, 1]} : vector<8x32xbf16> to vector<8x16xbf16>
    %cst_64 = arith.constant dense<0.000000e+00> : vector<8x8xf32>
    %170 = tpu.matmul %168, %169, %cst_64 {dimension_numbers = #tpu.dot_dimension_numbers<[1], [1], [0], [0], [0, 0, 1, 0], [], []>} : vector<8x16xbf16>, vector<8x16xbf16>, vector<8x8xf32> -> vector<8x8xf32>
    %171 = vector.extract_strided_slice %143 {offsets = [0, 8], sizes = [8, 8], strides = [1, 1]} : vector<8x16xf32> to vector<8x8xf32>
    %172 = arith.addf %170, %171 : vector<8x8xf32>
    %173 = arith.addf %172, %26 : vector<8x8xf32>
    %cst_65 = arith.constant dense<0xFF800000> : vector<8xf32>
    %174 = vector.multi_reduction <maximumf>, %173, %cst_65 [1] : vector<8x8xf32> to vector<8xf32>
    %175 = vector.shape_cast %174 : vector<8xf32> to vector<8x1xf32>
    %176 = vector.broadcast %175 : vector<8x1xf32> to vector<8x8xf32>
    %177 = arith.subf %173, %176 : vector<8x8xf32>
    %178 = math.exp %177 : vector<8x8xf32>
    %cst_66 = arith.constant dense<0.000000e+00> : vector<8xf32>
    %179 = vector.multi_reduction <add>, %178, %cst_66 [1] : vector<8x8xf32> to vector<8xf32>
    %180 = vector.shape_cast %179 : vector<8xf32> to vector<8x1xf32>
    %181 = tpu.reciprocal %180 {approx = true} : vector<8x1xf32> -> vector<8x1xf32>
    %182 = vector.broadcast %181 : vector<8x1xf32> to vector<8x8xf32>
    %183 = arith.mulf %178, %182 : vector<8x8xf32>
    %184 = arith.truncf %183 : vector<8x8xf32> to vector<8x8xbf16>
    %185 = vector.extract_strided_slice %139 {offsets = [0, 16], sizes = [8, 16], strides = [1, 1]} : vector<8x32xbf16> to vector<8x16xbf16>
    %cst_67 = arith.constant dense<0.000000e+00> : vector<8x16xf32>
    %186 = tpu.matmul %184, %185, %cst_67 {dimension_numbers = #tpu.dot_dimension_numbers<[1], [0], [0], [1], [0, 0, 1, 1], [], []>} : vector<8x8xbf16>, vector<8x16xbf16>, vector<8x16xf32> -> vector<8x16xf32>
    %187 = arith.truncf %186 : vector<8x16xf32> to vector<8x16xbf16>
    %cst_68 = arith.constant dense<0.000000e+00> : vector<8x32xf32>
    %188 = tpu.matmul %187, %24, %cst_68 {dimension_numbers = #tpu.dot_dimension_numbers<[1], [0], [0], [1], [0, 0, 1, 1], [], []>} : vector<8x16xbf16>, vector<16x32xbf16>, vector<8x32xf32> -> vector<8x32xf32>
    %189 = arith.addf %167, %188 : vector<8x32xf32>
    %190 = vector.broadcast %16 : vector<1x32xf32> to vector<8x32xf32>
    %191 = arith.addf %189, %190 : vector<8x32xf32>
    %192 = arith.addf %191, %131 : vector<8x32xf32>
    %cst_69 = arith.constant dense<0.000000e+00> : vector<8xf32>
    %193 = vector.multi_reduction <add>, %192, %cst_69 [1] : vector<8x32xf32> to vector<8xf32>
    %194 = vector.shape_cast %193 : vector<8xf32> to vector<8x1xf32>
    %cst_70 = arith.constant 3.200000e+01 : f32
    %195 = vector.broadcast %cst_70 : f32 to vector<8x1xf32>
    %196 = arith.divf %194, %195 : vector<8x1xf32>
    %197 = vector.broadcast %196 : vector<8x1xf32> to vector<8x32xf32>
    %198 = arith.subf %192, %197 : vector<8x32xf32>
    %199 = arith.mulf %198, %198 : vector<8x32xf32>
    %cst_71 = arith.constant dense<0.000000e+00> : vector<8xf32>
    %200 = vector.multi_reduction <add>, %199, %cst_71 [1] : vector<8x32xf32> to vector<8xf32>
    %201 = vector.shape_cast %200 : vector<8xf32> to vector<8x1xf32>
    %cst_72 = arith.constant 3.200000e+01 : f32
    %202 = vector.broadcast %cst_72 : f32 to vector<8x1xf32>
    %203 = arith.divf %201, %202 : vector<8x1xf32>
    %cst_73 = arith.constant 9.99999974E-6 : f32
    %204 = vector.broadcast %cst_73 : f32 to vector<8x1xf32>
    %205 = arith.addf %203, %204 : vector<8x1xf32>
    %206 = math.rsqrt %205 : vector<8x1xf32>
    %207 = vector.broadcast %206 : vector<8x1xf32> to vector<8x32xf32>
    %208 = arith.mulf %198, %207 : vector<8x32xf32>
    %209 = arith.truncf %208 : vector<8x32xf32> to vector<8x32xbf16>
    %cst_74 = arith.constant dense<0.000000e+00> : vector<8x64xf32>
    %210 = tpu.matmul %209, %17, %cst_74 {dimension_numbers = #tpu.dot_dimension_numbers<[1], [0], [0], [1], [0, 0, 1, 1], [], []>} : vector<8x32xbf16>, vector<32x64xbf16>, vector<8x64xf32> -> vector<8x64xf32>
    %211 = vector.broadcast %18 : vector<1x64xf32> to vector<8x64xf32>
    %212 = arith.addf %210, %211 : vector<8x64xf32>
    %cst_75 = arith.constant 0.000000e+00 : f32
    %213 = vector.broadcast %cst_75 : f32 to vector<8x64xf32>
    %214 = arith.maximumf %212, %213 : vector<8x64xf32>
    %215 = arith.truncf %214 : vector<8x64xf32> to vector<8x64xbf16>
    %cst_76 = arith.constant dense<0.000000e+00> : vector<8x32xf32>
    %216 = tpu.matmul %215, %19, %cst_76 {dimension_numbers = #tpu.dot_dimension_numbers<[1], [0], [0], [1], [0, 0, 1, 1], [], []>} : vector<8x64xbf16>, vector<64x32xbf16>, vector<8x32xf32> -> vector<8x32xf32>
    %217 = vector.broadcast %20 : vector<1x32xf32> to vector<8x32xf32>
    %218 = arith.addf %216, %217 : vector<8x32xf32>
    %219 = arith.addf %218, %208 : vector<8x32xf32>
    %cst_77 = arith.constant dense<0.000000e+00> : vector<8xf32>
    %220 = vector.multi_reduction <add>, %219, %cst_77 [1] : vector<8x32xf32> to vector<8xf32>
    %221 = vector.shape_cast %220 : vector<8xf32> to vector<8x1xf32>
    %cst_78 = arith.constant 3.200000e+01 : f32
    %222 = vector.broadcast %cst_78 : f32 to vector<8x1xf32>
    %223 = arith.divf %221, %222 : vector<8x1xf32>
    %224 = vector.broadcast %223 : vector<8x1xf32> to vector<8x32xf32>
    %225 = arith.subf %219, %224 : vector<8x32xf32>
    %226 = arith.mulf %225, %225 : vector<8x32xf32>
    %cst_79 = arith.constant dense<0.000000e+00> : vector<8xf32>
    %227 = vector.multi_reduction <add>, %226, %cst_79 [1] : vector<8x32xf32> to vector<8xf32>
    %228 = vector.shape_cast %227 : vector<8xf32> to vector<8x1xf32>
    %cst_80 = arith.constant 3.200000e+01 : f32
    %229 = vector.broadcast %cst_80 : f32 to vector<8x1xf32>
    %230 = arith.divf %228, %229 : vector<8x1xf32>
    %cst_81 = arith.constant 9.99999974E-6 : f32
    %231 = vector.broadcast %cst_81 : f32 to vector<8x1xf32>
    %232 = arith.addf %230, %231 : vector<8x1xf32>
    %233 = math.rsqrt %232 : vector<8x1xf32>
    %234 = vector.broadcast %233 : vector<8x1xf32> to vector<8x32xf32>
    %235 = arith.mulf %225, %234 : vector<8x32xf32>
    %c2_i32 = arith.constant 2 : i32
    %236 = arith.truncf %235 : vector<8x32xf32> to vector<8x32xbf16>
    %cst_82 = arith.constant dense<0.000000e+00> : vector<8x96xf32>
    %237 = tpu.matmul %236, %12, %cst_82 {dimension_numbers = #tpu.dot_dimension_numbers<[1], [0], [0], [1], [0, 0, 1, 1], [], []>} : vector<8x32xbf16>, vector<32x96xbf16>, vector<8x96xf32> -> vector<8x96xf32>
    %238 = arith.addf %237, %11 : vector<8x96xf32>
    %239 = vector.extract_strided_slice %238 {offsets = [0, 0], sizes = [8, 32], strides = [1, 1]} : vector<8x96xf32> to vector<8x32xf32>
    %240 = vector.extract_strided_slice %238 {offsets = [0, 32], sizes = [8, 32], strides = [1, 1]} : vector<8x96xf32> to vector<8x32xf32>
    %241 = arith.truncf %240 : vector<8x32xf32> to vector<8x32xbf16>
    %242 = vector.extract_strided_slice %238 {offsets = [0, 64], sizes = [8, 32], strides = [1, 1]} : vector<8x96xf32> to vector<8x32xf32>
    %243 = arith.truncf %242 : vector<8x32xf32> to vector<8x32xbf16>
    %244 = arith.truncf %239 : vector<8x32xf32> to vector<8x32xbf16>
    %245 = vector.shape_cast %244 : vector<8x32xbf16> to vector<8x1x32xbf16>
    %cst_83 = arith.constant dense<0.000000e+00> : vector<8x1x16xf32>
    %246 = tpu.matmul %245, %13, %cst_83 {dimension_numbers = #tpu.dot_dimension_numbers<[2], [1], [1], [2], [0, 0, 0, 1, 1, 2], [0], [0]>} : vector<8x1x32xbf16>, vector<8x32x16xbf16>, vector<8x1x16xf32> -> vector<8x1x16xf32>
    %247 = vector.shape_cast %246 : vector<8x1x16xf32> to vector<8x16xf32>
    %248 = vector.broadcast %14 : vector<1x32xf32> to vector<8x32xf32>
    %249 = arith.addf %239, %248 : vector<8x32xf32>
    %250 = arith.truncf %249 : vector<8x32xf32> to vector<8x32xbf16>
    %251 = vector.extract_strided_slice %250 {offsets = [0, 0], sizes = [8, 16], strides = [1, 1]} : vector<8x32xbf16> to vector<8x16xbf16>
    %252 = vector.extract_strided_slice %241 {offsets = [0, 0], sizes = [8, 16], strides = [1, 1]} : vector<8x32xbf16> to vector<8x16xbf16>
    %cst_84 = arith.constant dense<0.000000e+00> : vector<8x8xf32>
    %253 = tpu.matmul %251, %252, %cst_84 {dimension_numbers = #tpu.dot_dimension_numbers<[1], [1], [0], [0], [0, 0, 1, 0], [], []>} : vector<8x16xbf16>, vector<8x16xbf16>, vector<8x8xf32> -> vector<8x8xf32>
    %254 = vector.extract_strided_slice %247 {offsets = [0, 0], sizes = [8, 8], strides = [1, 1]} : vector<8x16xf32> to vector<8x8xf32>
    %255 = arith.addf %253, %254 : vector<8x8xf32>
    %256 = arith.addf %255, %25 : vector<8x8xf32>
    %cst_85 = arith.constant dense<0xFF800000> : vector<8xf32>
    %257 = vector.multi_reduction <maximumf>, %256, %cst_85 [1] : vector<8x8xf32> to vector<8xf32>
    %258 = vector.shape_cast %257 : vector<8xf32> to vector<8x1xf32>
    %259 = vector.broadcast %258 : vector<8x1xf32> to vector<8x8xf32>
    %260 = arith.subf %256, %259 : vector<8x8xf32>
    %261 = math.exp %260 : vector<8x8xf32>
    %cst_86 = arith.constant dense<0.000000e+00> : vector<8xf32>
    %262 = vector.multi_reduction <add>, %261, %cst_86 [1] : vector<8x8xf32> to vector<8xf32>
    %263 = vector.shape_cast %262 : vector<8xf32> to vector<8x1xf32>
    %264 = tpu.reciprocal %263 {approx = true} : vector<8x1xf32> -> vector<8x1xf32>
    %265 = vector.broadcast %264 : vector<8x1xf32> to vector<8x8xf32>
    %266 = arith.mulf %261, %265 : vector<8x8xf32>
    %267 = arith.truncf %266 : vector<8x8xf32> to vector<8x8xbf16>
    %268 = vector.extract_strided_slice %243 {offsets = [0, 0], sizes = [8, 16], strides = [1, 1]} : vector<8x32xbf16> to vector<8x16xbf16>
    %cst_87 = arith.constant dense<0.000000e+00> : vector<8x16xf32>
    %269 = tpu.matmul %267, %268, %cst_87 {dimension_numbers = #tpu.dot_dimension_numbers<[1], [0], [0], [1], [0, 0, 1, 1], [], []>} : vector<8x8xbf16>, vector<8x16xbf16>, vector<8x16xf32> -> vector<8x16xf32>
    %270 = arith.truncf %269 : vector<8x16xf32> to vector<8x16xbf16>
    %cst_88 = arith.constant dense<0.000000e+00> : vector<8x32xf32>
    %271 = tpu.matmul %270, %22, %cst_88 {dimension_numbers = #tpu.dot_dimension_numbers<[1], [0], [0], [1], [0, 0, 1, 1], [], []>} : vector<8x16xbf16>, vector<16x32xbf16>, vector<8x32xf32> -> vector<8x32xf32>
    %272 = vector.extract_strided_slice %250 {offsets = [0, 16], sizes = [8, 16], strides = [1, 1]} : vector<8x32xbf16> to vector<8x16xbf16>
    %273 = vector.extract_strided_slice %241 {offsets = [0, 16], sizes = [8, 16], strides = [1, 1]} : vector<8x32xbf16> to vector<8x16xbf16>
    %cst_89 = arith.constant dense<0.000000e+00> : vector<8x8xf32>
    %274 = tpu.matmul %272, %273, %cst_89 {dimension_numbers = #tpu.dot_dimension_numbers<[1], [1], [0], [0], [0, 0, 1, 0], [], []>} : vector<8x16xbf16>, vector<8x16xbf16>, vector<8x8xf32> -> vector<8x8xf32>
    %275 = vector.extract_strided_slice %247 {offsets = [0, 8], sizes = [8, 8], strides = [1, 1]} : vector<8x16xf32> to vector<8x8xf32>
    %276 = arith.addf %274, %275 : vector<8x8xf32>
    %277 = arith.addf %276, %26 : vector<8x8xf32>
    %cst_90 = arith.constant dense<0xFF800000> : vector<8xf32>
    %278 = vector.multi_reduction <maximumf>, %277, %cst_90 [1] : vector<8x8xf32> to vector<8xf32>
    %279 = vector.shape_cast %278 : vector<8xf32> to vector<8x1xf32>
    %280 = vector.broadcast %279 : vector<8x1xf32> to vector<8x8xf32>
    %281 = arith.subf %277, %280 : vector<8x8xf32>
    %282 = math.exp %281 : vector<8x8xf32>
    %cst_91 = arith.constant dense<0.000000e+00> : vector<8xf32>
    %283 = vector.multi_reduction <add>, %282, %cst_91 [1] : vector<8x8xf32> to vector<8xf32>
    %284 = vector.shape_cast %283 : vector<8xf32> to vector<8x1xf32>
    %285 = tpu.reciprocal %284 {approx = true} : vector<8x1xf32> -> vector<8x1xf32>
    %286 = vector.broadcast %285 : vector<8x1xf32> to vector<8x8xf32>
    %287 = arith.mulf %282, %286 : vector<8x8xf32>
    %288 = arith.truncf %287 : vector<8x8xf32> to vector<8x8xbf16>
    %289 = vector.extract_strided_slice %243 {offsets = [0, 16], sizes = [8, 16], strides = [1, 1]} : vector<8x32xbf16> to vector<8x16xbf16>
    %cst_92 = arith.constant dense<0.000000e+00> : vector<8x16xf32>
    %290 = tpu.matmul %288, %289, %cst_92 {dimension_numbers = #tpu.dot_dimension_numbers<[1], [0], [0], [1], [0, 0, 1, 1], [], []>} : vector<8x8xbf16>, vector<8x16xbf16>, vector<8x16xf32> -> vector<8x16xf32>
    %291 = arith.truncf %290 : vector<8x16xf32> to vector<8x16xbf16>
    %cst_93 = arith.constant dense<0.000000e+00> : vector<8x32xf32>
    %292 = tpu.matmul %291, %24, %cst_93 {dimension_numbers = #tpu.dot_dimension_numbers<[1], [0], [0], [1], [0, 0, 1, 1], [], []>} : vector<8x16xbf16>, vector<16x32xbf16>, vector<8x32xf32> -> vector<8x32xf32>
    %293 = arith.addf %271, %292 : vector<8x32xf32>
    %294 = vector.broadcast %16 : vector<1x32xf32> to vector<8x32xf32>
    %295 = arith.addf %293, %294 : vector<8x32xf32>
    %296 = arith.addf %295, %235 : vector<8x32xf32>
    %cst_94 = arith.constant dense<0.000000e+00> : vector<8xf32>
    %297 = vector.multi_reduction <add>, %296, %cst_94 [1] : vector<8x32xf32> to vector<8xf32>
    %298 = vector.shape_cast %297 : vector<8xf32> to vector<8x1xf32>
    %cst_95 = arith.constant 3.200000e+01 : f32
    %299 = vector.broadcast %cst_95 : f32 to vector<8x1xf32>
    %300 = arith.divf %298, %299 : vector<8x1xf32>
    %301 = vector.broadcast %300 : vector<8x1xf32> to vector<8x32xf32>
    %302 = arith.subf %296, %301 : vector<8x32xf32>
    %303 = arith.mulf %302, %302 : vector<8x32xf32>
    %cst_96 = arith.constant dense<0.000000e+00> : vector<8xf32>
    %304 = vector.multi_reduction <add>, %303, %cst_96 [1] : vector<8x32xf32> to vector<8xf32>
    %305 = vector.shape_cast %304 : vector<8xf32> to vector<8x1xf32>
    %cst_97 = arith.constant 3.200000e+01 : f32
    %306 = vector.broadcast %cst_97 : f32 to vector<8x1xf32>
    %307 = arith.divf %305, %306 : vector<8x1xf32>
    %cst_98 = arith.constant 9.99999974E-6 : f32
    %308 = vector.broadcast %cst_98 : f32 to vector<8x1xf32>
    %309 = arith.addf %307, %308 : vector<8x1xf32>
    %310 = math.rsqrt %309 : vector<8x1xf32>
    %311 = vector.broadcast %310 : vector<8x1xf32> to vector<8x32xf32>
    %312 = arith.mulf %302, %311 : vector<8x32xf32>
    %313 = arith.truncf %312 : vector<8x32xf32> to vector<8x32xbf16>
    %cst_99 = arith.constant dense<0.000000e+00> : vector<8x64xf32>
    %314 = tpu.matmul %313, %17, %cst_99 {dimension_numbers = #tpu.dot_dimension_numbers<[1], [0], [0], [1], [0, 0, 1, 1], [], []>} : vector<8x32xbf16>, vector<32x64xbf16>, vector<8x64xf32> -> vector<8x64xf32>
    %315 = vector.broadcast %18 : vector<1x64xf32> to vector<8x64xf32>
    %316 = arith.addf %314, %315 : vector<8x64xf32>
    %cst_100 = arith.constant 0.000000e+00 : f32
    %317 = vector.broadcast %cst_100 : f32 to vector<8x64xf32>
    %318 = arith.maximumf %316, %317 : vector<8x64xf32>
    %319 = arith.truncf %318 : vector<8x64xf32> to vector<8x64xbf16>
    %cst_101 = arith.constant dense<0.000000e+00> : vector<8x32xf32>
    %320 = tpu.matmul %319, %19, %cst_101 {dimension_numbers = #tpu.dot_dimension_numbers<[1], [0], [0], [1], [0, 0, 1, 1], [], []>} : vector<8x64xbf16>, vector<64x32xbf16>, vector<8x32xf32> -> vector<8x32xf32>
    %321 = vector.broadcast %20 : vector<1x32xf32> to vector<8x32xf32>
    %322 = arith.addf %320, %321 : vector<8x32xf32>
    %323 = arith.addf %322, %312 : vector<8x32xf32>
    %cst_102 = arith.constant dense<0.000000e+00> : vector<8xf32>
    %324 = vector.multi_reduction <add>, %323, %cst_102 [1] : vector<8x32xf32> to vector<8xf32>
    %325 = vector.shape_cast %324 : vector<8xf32> to vector<8x1xf32>
    %cst_103 = arith.constant 3.200000e+01 : f32
    %326 = vector.broadcast %cst_103 : f32 to vector<8x1xf32>
    %327 = arith.divf %325, %326 : vector<8x1xf32>
    %328 = vector.broadcast %327 : vector<8x1xf32> to vector<8x32xf32>
    %329 = arith.subf %323, %328 : vector<8x32xf32>
    %330 = arith.mulf %329, %329 : vector<8x32xf32>
    %cst_104 = arith.constant dense<0.000000e+00> : vector<8xf32>
    %331 = vector.multi_reduction <add>, %330, %cst_104 [1] : vector<8x32xf32> to vector<8xf32>
    %332 = vector.shape_cast %331 : vector<8xf32> to vector<8x1xf32>
    %cst_105 = arith.constant 3.200000e+01 : f32
    %333 = vector.broadcast %cst_105 : f32 to vector<8x1xf32>
    %334 = arith.divf %332, %333 : vector<8x1xf32>
    %cst_106 = arith.constant 9.99999974E-6 : f32
    %335 = vector.broadcast %cst_106 : f32 to vector<8x1xf32>
    %336 = arith.addf %334, %335 : vector<8x1xf32>
    %337 = math.rsqrt %336 : vector<8x1xf32>
    %338 = vector.broadcast %337 : vector<8x1xf32> to vector<8x32xf32>
    %339 = arith.mulf %329, %338 : vector<8x32xf32>
    %340 = tpu.concatenate %339, %6 in 1 : vector<8x32xf32>, vector<8x96xf32> -> vector<8x128xf32>
    %c0_107 = arith.constant 0 : index
    %c0_108 = arith.constant 0 : index
    %c0_109 = arith.constant 0 : index
    %341 = vector.load %arg16[%c0_107, %c0_108, %c0_109] : memref<1x8x128xf32, #tpu.memory_space<vmem>>, vector<1x8x128xf32>
    %342 = vector.shape_cast %341 : vector<1x8x128xf32> to vector<8x128xf32>
    %343 = vector.shape_cast %340 : vector<8x128xf32> to vector<1x8x128xf32>
    tpu.vector_store %arg16[%c0_107, %c0_108, %c0_109], %343 {strides = array<i32>} : memref<1x8x128xf32, #tpu.memory_space<vmem>>, vector<1x8x128xf32>,
    %344 = arith.truncf %339 : vector<8x32xf32> to vector<8x32xbf16>
    %c0_110 = arith.constant 0 : index
    %c0_111 = arith.constant 0 : index
    %345 = vector.load %arg14[%c0_110, %c0_111] : memref<32x128xbf16, #tpu.memory_space<vmem>>, vector<32x128xbf16>
    %cst_112 = arith.constant dense<0.000000e+00> : vector<8x128xf32>
    %346 = tpu.matmul %344, %345, %cst_112 {dimension_numbers = #tpu.dot_dimension_numbers<[1], [0], [0], [1], [0, 0, 1, 1], [], []>} : vector<8x32xbf16>, vector<32x128xbf16>, vector<8x128xf32> -> vector<8x128xf32>
    %c0_113 = arith.constant 0 : index
    %c0_114 = arith.constant 0 : index
    %347 = vector.load %arg15[%c0_113, %c0_114] : memref<1x128xf32, #tpu.memory_space<vmem>>, vector<1x128xf32>
    %348 = vector.broadcast %347 : vector<1x128xf32> to vector<8x128xf32>
    %349 = arith.addf %346, %348 : vector<8x128xf32>
    %c0_115 = arith.constant 0 : index
    %c0_116 = arith.constant 0 : index
    %c0_117 = arith.constant 0 : index
    %350 = vector.load %arg17[%c0_115, %c0_116, %c0_117] : memref<1x8x128xf32, #tpu.memory_space<vmem>>, vector<1x8x128xf32>
    %351 = vector.shape_cast %350 : vector<1x8x128xf32> to vector<8x128xf32>
    %352 = vector.shape_cast %349 : vector<8x128xf32> to vector<1x8x128xf32>
    tpu.vector_store %arg17[%c0_115, %c0_116, %c0_117], %352 {strides = array<i32>} : memref<1x8x128xf32, #tpu.memory_space<vmem>>, vector<1x8x128xf32>,
    return
  }
  func.func @transform_0(%arg0: i32) -> (i32, i32, i32) {
    %c0_i32 = arith.constant 0 : i32
    %c0_i32_0 = arith.constant 0 : i32
    %c0_i32_1 = arith.constant 0 : i32
    return %arg0, %c0_i32, %c0_i32_0 : i32, i32, i32
  }
  func.func @transform_1(%arg0: i32) -> (i32, i32) {
    %c0_i32 = arith.constant 0 : i32
    %c0_i32_0 = arith.constant 0 : i32
    %c0_i32_1 = arith.constant 0 : i32
    return %c0_i32, %c0_i32_0 : i32, i32
  }
  func.func @transform_2(%arg0: i32) -> (i32, i32) {
    %c0_i32 = arith.constant 0 : i32
    %c0_i32_0 = arith.constant 0 : i32
    %c0_i32_1 = arith.constant 0 : i32
    return %c0_i32, %c0_i32_0 : i32, i32
  }
  func.func @transform_3(%arg0: i32) -> (i32, i32) {
    %c0_i32 = arith.constant 0 : i32
    %c0_i32_0 = arith.constant 0 : i32
    %c0_i32_1 = arith.constant 0 : i32
    return %c0_i32, %c0_i32_0 : i32, i32
  }
  func.func @transform_4(%arg0: i32) -> (i32, i32) {
    %c0_i32 = arith.constant 0 : i32
    %c0_i32_0 = arith.constant 0 : i32
    %c0_i32_1 = arith.constant 0 : i32
    return %c0_i32, %c0_i32_0 : i32, i32
  }
  func.func @transform_5(%arg0: i32) -> (i32, i32, i32) {
    %c0_i32 = arith.constant 0 : i32
    %c0_i32_0 = arith.constant 0 : i32
    %c0_i32_1 = arith.constant 0 : i32
    %c0_i32_2 = arith.constant 0 : i32
    return %c0_i32, %c0_i32_0, %c0_i32_1 : i32, i32, i32
  }
  func.func @transform_6(%arg0: i32) -> (i32, i32) {
    %c0_i32 = arith.constant 0 : i32
    %c0_i32_0 = arith.constant 0 : i32
    %c0_i32_1 = arith.constant 0 : i32
    return %c0_i32, %c0_i32_0 : i32, i32
  }
  func.func @transform_7(%arg0: i32) -> (i32, i32, i32) {
    %c0_i32 = arith.constant 0 : i32
    %c0_i32_0 = arith.constant 0 : i32
    %c0_i32_1 = arith.constant 0 : i32
    %c0_i32_2 = arith.constant 0 : i32
    return %c0_i32, %c0_i32_0, %c0_i32_1 : i32, i32, i32
  }
  func.func @transform_8(%arg0: i32) -> (i32, i32) {
    %c0_i32 = arith.constant 0 : i32
    %c0_i32_0 = arith.constant 0 : i32
    %c0_i32_1 = arith.constant 0 : i32
    return %c0_i32, %c0_i32_0 : i32, i32
  }
  func.func @transform_9(%arg0: i32) -> (i32, i32) {
    %c0_i32 = arith.constant 0 : i32
    %c0_i32_0 = arith.constant 0 : i32
    %c0_i32_1 = arith.constant 0 : i32
    return %c0_i32, %c0_i32_0 : i32, i32
  }
  func.func @transform_10(%arg0: i32) -> (i32, i32) {
    %c0_i32 = arith.constant 0 : i32
    %c0_i32_0 = arith.constant 0 : i32
    %c0_i32_1 = arith.constant 0 : i32
    return %c0_i32, %c0_i32_0 : i32, i32
  }
  func.func @transform_11(%arg0: i32) -> (i32, i32) {
    %c0_i32 = arith.constant 0 : i32
    %c0_i32_0 = arith.constant 0 : i32
    %c0_i32_1 = arith.constant 0 : i32
    return %c0_i32, %c0_i32_0 : i32, i32
  }
  func.func @transform_12(%arg0: i32) -> (i32, i32) {
    %c0_i32 = arith.constant 0 : i32
    %c0_i32_0 = arith.constant 0 : i32
    %c0_i32_1 = arith.constant 0 : i32
    return %c0_i32, %c0_i32_0 : i32, i32
  }
  func.func @transform_13(%arg0: i32) -> (i32, i32) {
    %c0_i32 = arith.constant 0 : i32
    %c0_i32_0 = arith.constant 0 : i32
    %c0_i32_1 = arith.constant 0 : i32
    return %c0_i32, %c0_i32_0 : i32, i32
  }
  func.func @transform_14(%arg0: i32) -> (i32, i32) {
    %c0_i32 = arith.constant 0 : i32
    %c0_i32_0 = arith.constant 0 : i32
    %c0_i32_1 = arith.constant 0 : i32
    return %c0_i32, %c0_i32_0 : i32, i32
  }
  func.func @transform_15(%arg0: i32) -> (i32, i32, i32) {
    %c0_i32 = arith.constant 0 : i32
    %c0_i32_0 = arith.constant 0 : i32
    %c0_i32_1 = arith.constant 0 : i32
    return %arg0, %c0_i32, %c0_i32_0 : i32, i32, i32
  }
  func.func @transform_16(%arg0: i32) -> (i32, i32, i32) {
    %c0_i32 = arith.constant 0 : i32
    %c0_i32_0 = arith.constant 0 : i32
    %c0_i32_1 = arith.constant 0 : i32
    return %arg0, %c0_i32, %c0_i32_0 : i32, i32, i32
  }
}

</mosaic_0001>

<llo_original>
// kernel: deq_transformer_lm_forward.1
$region0: #{deq_transformer_lm_forward.1}
  #allocation0 [shape = 'u32[]', space=smem, size = 0x4, offset = 0x4, fixed_abs, tag = 'smem constant byte address 0x4 - core index']
  #allocation1 [shape = 'u32[144,128]{1,0:T(1,128)}', space=vmem, size = 0x12000, scoped, tag = 'internal scratch']
  %s0 = inlined_call_operand.vmem [shape: f32[2,8,32], index: 0, kind: input, shape index: {}]
  %s1 = inlined_call_operand.vmem [shape: f32[32,96], index: 1, kind: input, shape index: {}]
  %s2 = inlined_call_operand.vmem [shape: f32[1,96], index: 2, kind: input, shape index: {}]
  %s3 = inlined_call_operand.vmem [shape: bf16[32,96], index: 3, kind: input, shape index: {}]
  %s4 = inlined_call_operand.vmem [shape: f32[1,32], index: 4, kind: input, shape index: {}]
  %s5 = inlined_call_operand.vmem [shape: bf16[8,32,16], index: 5, kind: input, shape index: {}]
  %s6 = inlined_call_operand.vmem [shape: f32[8,16], index: 6, kind: input, shape index: {}]
  %s7 = inlined_call_operand.vmem [shape: bf16[2,16,32], index: 7, kind: input, shape index: {}]
  %s8 = inlined_call_operand.vmem [shape: f32[1,32], index: 8, kind: input, shape index: {}]
  %s9 = inlined_call_operand.vmem [shape: bf16[32,64], index: 9, kind: input, shape index: {}]
  %s10 = inlined_call_operand.vmem [shape: f32[1,64], index: 10, kind: input, shape index: {}]
  %s11 = inlined_call_operand.vmem [shape: bf16[64,32], index: 11, kind: input, shape index: {}]
  %s12 = inlined_call_operand.vmem [shape: f32[1,32], index: 12, kind: input, shape index: {}]
  %s13 = inlined_call_operand.vmem [shape: bf16[32,128], index: 13, kind: input, shape index: {}]
  %s14 = inlined_call_operand.vmem [shape: f32[1,128], index: 14, kind: input, shape index: {}]
  %s15 = inlined_call_operand.vmem [shape: f32[2,8,128], index: 15, kind: output, shape index: {0}]
  %s16 = inlined_call_operand.vmem [shape: f32[2,8,128], index: 16, kind: output, shape index: {1}]
  %17 = xla_tuple %s15, %s16
  %s18 = sld [smem:[#allocation0]]
  $region101: #{deq_transformer_lm_forward.1} parent=0
    _
  %s20 = ssub.s32 1, %s18
  %s21 = scalar_select 0, %s20, %s18
  loop: start=0, step=1, limit=4
  $region2: #{deq_transformer_lm_forward.1} parent=0 // loop_pre_header
    _
  $region3: #{deq_transformer_lm_forward.1} parent=0 // loop_header
    %s23 = sphi 0, %s27
    %p24 = scmp.ge.s32.totalorder %s23, 4
    %s33 = sphi 0, %s35
    %s36 = sphi 0, %s33
    %s37 = sphi 0, %s36
    %s53 = sphi 0, %s37
    %s57 = sphi 0, %s57
    %s59 = sphi 0, %s57
    %s60 = sphi 0, %s59
    %s74 = sphi 0, %s60
    %s78 = sphi 0, %s78
    %s80 = sphi 0, %s78
    %s81 = sphi 0, %s80
    %s95 = sphi 0, %s81
    %s99 = sphi 0, %s99
    %s101 = sphi 0, %s99
    %s102 = sphi 0, %s101
    %s116 = sphi 0, %s102
    %s120 = sphi 0, %s120
    %s122 = sphi 0, %s120
    %s123 = sphi 0, %s122
    %s137 = sphi 0, %s123
    %s141 = sphi 0, %s141
    %s143 = sphi 0, %s141
    %s144 = sphi 0, %s143
    %s158 = sphi 0, %s144
    %s162 = sphi 0, %s162
    %s164 = sphi 0, %s162
    %s165 = sphi 0, %s164
    %s179 = sphi 0, %s165
    %s183 = sphi 0, %s183
    %s185 = sphi 0, %s183
    %s186 = sphi 0, %s185
    %s200 = sphi 0, %s186
    %s204 = sphi 0, %s204
    %s206 = sphi 0, %s204
    %s207 = sphi 0, %s206
    %s221 = sphi 0, %s207
    %s225 = sphi 0, %s225
    %s227 = sphi 0, %s225
    %s228 = sphi 0, %s227
    %s242 = sphi 0, %s228
    %s246 = sphi 0, %s246
    %s248 = sphi 0, %s246
    %s249 = sphi 0, %s248
    %s263 = sphi 0, %s249
    %s267 = sphi 0, %s267
    %s269 = sphi 0, %s267
    %s270 = sphi 0, %s269
    %s284 = sphi 0, %s270
    %s288 = sphi 0, %s288
    %s290 = sphi 0, %s288
    %s291 = sphi 0, %s290
    %s305 = sphi 0, %s291
    %s309 = sphi 0, %s309
    %s311 = sphi 0, %s309
    %s312 = sphi 0, %s311
    %s326 = sphi 0, %s312
    %s330 = sphi 0, %s330
    %s332 = sphi 0, %s330
    %s333 = sphi 0, %s332
    %s347 = sphi 0, %s333
    %s353 = sphi 0, %s355
    %s356 = sphi 0, %s353
    %s357 = sphi 0, %s356
    %s373 = sphi 0, %s357
    %s379 = sphi 0, %s381
    %s382 = sphi 0, %s379
    %s383 = sphi 0, %s382
    %s399 = sphi 0, %s383
  $region4: #{deq_transformer_lm_forward.1} parent=0 // loop_header_branch
    %26 = sbr.rel (%p24) target = $region8
  $region5: #{deq_transformer_lm_forward.1} parent=0 // loop_body
    %s28 = ssub.s32 %s23, 1
    %s29 = ssub.s32 %s23, 2
    %s30 = sadd.s32 %s23, 1
    %s31 = ssub.s32 %s23, %s30
    %p32 = scmp.eq.s32.totalorder %s31, 0
    %s34 = sadd.s32 %s33, 1
    %s35 = scalar_select %p32, %s33, %s34
    %p38 = pneg %p32
    %p39 = scmp.eq.s32.totalorder %s23, 1
    %p40 = por %p38, %p39
    %p41 = scmp.ne.s32.totalorder %s33, %s36
    %p42 = scmp.eq.s32.totalorder %s23, 0
    %p43 = por %p41, %p42
    %p44 = scmp.ne.s32.totalorder %s33, %s36
    %p45 = scmp.eq.s32.totalorder %s28, 1
    %p46 = por %p44, %p45
    %p47 = scmp.ne.s32.totalorder %s36, %s37
    %p48 = scmp.eq.s32.totalorder %s28, 0
    %p49 = por %p47, %p48
    %p50 = scmp.ne.s32.totalorder %s36, %s37
    %p51 = scmp.eq.s32.totalorder %s29, 1
    %p52 = por %p50, %p51
    %p54 = scmp.ne.s32.totalorder %s37, %s53
    %p55 = scmp.eq.s32.totalorder %s29, 0
    %p56 = por %p54, %p55
    %s58 = sadd.s32 %s57, 1
    %p61 = scmp.eq.s32.totalorder %s23, 1
    %p62 = scmp.ne.s32.totalorder %s57, %s59
    %p63 = scmp.eq.s32.totalorder %s23, 0
    %p64 = por %p62, %p63
    %p65 = scmp.ne.s32.totalorder %s57, %s59
    %p66 = scmp.eq.s32.totalorder %s28, 1
    %p67 = por %p65, %p66
    %p68 = scmp.ne.s32.totalorder %s59, %s60
    %p69 = scmp.eq.s32.totalorder %s28, 0
    %p70 = por %p68, %p69
    %p71 = scmp.ne.s32.totalorder %s59, %s60
    %p72 = scmp.eq.s32.totalorder %s29, 1
    %p73 = por %p71, %p72
    %p75 = scmp.ne.s32.totalorder %s60, %s74
    %p76 = scmp.eq.s32.totalorder %s29, 0
    %p77 = por %p75, %p76
    %s79 = sadd.s32 %s78, 1
    %p82 = scmp.eq.s32.totalorder %s23, 1
    %p83 = scmp.ne.s32.totalorder %s78, %s80
    %p84 = scmp.eq.s32.totalorder %s23, 0
    %p85 = por %p83, %p84
    %p86 = scmp.ne.s32.totalorder %s78, %s80
    %p87 = scmp.eq.s32.totalorder %s28, 1
    %p88 = por %p86, %p87
    %p89 = scmp.ne.s32.totalorder %s80, %s81
    %p90 = scmp.eq.s32.totalorder %s28, 0
    %p91 = por %p89, %p90
    %p92 = scmp.ne.s32.totalorder %s80, %s81
    %p93 = scmp.eq.s32.totalorder %s29, 1
    %p94 = por %p92, %p93
    %p96 = scmp.ne.s32.totalorder %s81, %s95
    %p97 = scmp.eq.s32.totalorder %s29, 0
    %p98 = por %p96, %p97
    %s100 = sadd.s32 %s99, 1
    %p103 = scmp.eq.s32.totalorder %s23, 1
    %p104 = scmp.ne.s32.totalorder %s99, %s101
    %p105 = scmp.eq.s32.totalorder %s23, 0
    %p106 = por %p104, %p105
    %p107 = scmp.ne.s32.totalorder %s99, %s101
    %p108 = scmp.eq.s32.totalorder %s28, 1
    %p109 = por %p107, %p108
    %p110 = scmp.ne.s32.totalorder %s101, %s102
    %p111 = scmp.eq.s32.totalorder %s28, 0
    %p112 = por %p110, %p111
    %p113 = scmp.ne.s32.totalorder %s101, %s102
    %p114 = scmp.eq.s32.totalorder %s29, 1
    %p115 = por %p113, %p114
    %p117 = scmp.ne.s32.totalorder %s102, %s116
    %p118 = scmp.eq.s32.totalorder %s29, 0
    %p119 = por %p117, %p118
    %s121 = sadd.s32 %s120, 1
    %p124 = scmp.eq.s32.totalorder %s23, 1
    %p125 = scmp.ne.s32.totalorder %s120, %s122
    %p126 = scmp.eq.s32.totalorder %s23, 0
    %p127 = por %p125, %p126
    %p128 = scmp.ne.s32.totalorder %s120, %s122
    %p129 = scmp.eq.s32.totalorder %s28, 1
    %p130 = por %p128, %p129
    %p131 = scmp.ne.s32.totalorder %s122, %s123
    %p132 = scmp.eq.s32.totalorder %s28, 0
    %p133 = por %p131, %p132
    %p134 = scmp.ne.s32.totalorder %s122, %s123
    %p135 = scmp.eq.s32.totalorder %s29, 1
    %p136 = por %p134, %p135
    %p138 = scmp.ne.s32.totalorder %s123, %s137
    %p139 = scmp.eq.s32.totalorder %s29, 0
    %p140 = por %p138, %p139
    %s142 = sadd.s32 %s141, 1
    %p145 = scmp.eq.s32.totalorder %s23, 1
    %p146 = scmp.ne.s32.totalorder %s141, %s143
    %p147 = scmp.eq.s32.totalorder %s23, 0
    %p148 = por %p146, %p147
    %p149 = scmp.ne.s32.totalorder %s141, %s143
    %p150 = scmp.eq.s32.totalorder %s28, 1
    %p151 = por %p149, %p150
    %p152 = scmp.ne.s32.totalorder %s143, %s144
    %p153 = scmp.eq.s32.totalorder %s28, 0
    %p154 = por %p152, %p153
    %p155 = scmp.ne.s32.totalorder %s143, %s144
    %p156 = scmp.eq.s32.totalorder %s29, 1
    %p157 = por %p155, %p156
    %p159 = scmp.ne.s32.totalorder %s144, %s158
    %p160 = scmp.eq.s32.totalorder %s29, 0
    %p161 = por %p159, %p160
    %s163 = sadd.s32 %s162, 1
    %p166 = scmp.eq.s32.totalorder %s23, 1
    %p167 = scmp.ne.s32.totalorder %s162, %s164
    %p168 = scmp.eq.s32.totalorder %s23, 0
    %p169 = por %p167, %p168
    %p170 = scmp.ne.s32.totalorder %s162, %s164
    %p171 = scmp.eq.s32.totalorder %s28, 1
    %p172 = por %p170, %p171
    %p173 = scmp.ne.s32.totalorder %s164, %s165
    %p174 = scmp.eq.s32.totalorder %s28, 0
    %p175 = por %p173, %p174
    %p176 = scmp.ne.s32.totalorder %s164, %s165
    %p177 = scmp.eq.s32.totalorder %s29, 1
    %p178 = por %p176, %p177
    %p180 = scmp.ne.s32.totalorder %s165, %s179
    %p181 = scmp.eq.s32.totalorder %s29, 0
    %p182 = por %p180, %p181
    %s184 = sadd.s32 %s183, 1
    %p187 = scmp.eq.s32.totalorder %s23, 1
    %p188 = scmp.ne.s32.totalorder %s183, %s185
    %p189 = scmp.eq.s32.totalorder %s23, 0
    %p190 = por %p188, %p189
    %p191 = scmp.ne.s32.totalorder %s183, %s185
    %p192 = scmp.eq.s32.totalorder %s28, 1
    %p193 = por %p191, %p192
    %p194 = scmp.ne.s32.totalorder %s185, %s186
    %p195 = scmp.eq.s32.totalorder %s28, 0
    %p196 = por %p194, %p195
    %p197 = scmp.ne.s32.totalorder %s185, %s186
    %p198 = scmp.eq.s32.totalorder %s29, 1
    %p199 = por %p197, %p198
    %p201 = scmp.ne.s32.totalorder %s186, %s200
    %p202 = scmp.eq.s32.totalorder %s29, 0
    %p203 = por %p201, %p202
    %s205 = sadd.s32 %s204, 1
    %p208 = scmp.eq.s32.totalorder %s23, 1
    %p209 = scmp.ne.s32.totalorder %s204, %s206
    %p210 = scmp.eq.s32.totalorder %s23, 0
    %p211 = por %p209, %p210
    %p212 = scmp.ne.s32.totalorder %s204, %s206
    %p213 = scmp.eq.s32.totalorder %s28, 1
    %p214 = por %p212, %p213
    %p215 = scmp.ne.s32.totalorder %s206, %s207
    %p216 = scmp.eq.s32.totalorder %s28, 0
    %p217 = por %p215, %p216
    %p218 = scmp.ne.s32.totalorder %s206, %s207
    %p219 = scmp.eq.s32.totalorder %s29, 1
    %p220 = por %p218, %p219
    %p222 = scmp.ne.s32.totalorder %s207, %s221
    %p223 = scmp.eq.s32.totalorder %s29, 0
    %p224 = por %p222, %p223
    %s226 = sadd.s32 %s225, 1
    %p229 = scmp.eq.s32.totalorder %s23, 1
    %p230 = scmp.ne.s32.totalorder %s225, %s227
    %p231 = scmp.eq.s32.totalorder %s23, 0
    %p232 = por %p230, %p231
    %p233 = scmp.ne.s32.totalorder %s225, %s227
    %p234 = scmp.eq.s32.totalorder %s28, 1
    %p235 = por %p233, %p234
    %p236 = scmp.ne.s32.totalorder %s227, %s228
    %p237 = scmp.eq.s32.totalorder %s28, 0
    %p238 = por %p236, %p237
    %p239 = scmp.ne.s32.totalorder %s227, %s228
    %p240 = scmp.eq.s32.totalorder %s29, 1
    %p241 = por %p239, %p240
    %p243 = scmp.ne.s32.totalorder %s228, %s242
    %p244 = scmp.eq.s32.totalorder %s29, 0
    %p245 = por %p243, %p244
    %s247 = sadd.s32 %s246, 1
    %p250 = scmp.eq.s32.totalorder %s23, 1
    %p251 = scmp.ne.s32.totalorder %s246, %s248
    %p252 = scmp.eq.s32.totalorder %s23, 0
    %p253 = por %p251, %p252
    %p254 = scmp.ne.s32.totalorder %s246, %s248
    %p255 = scmp.eq.s32.totalorder %s28, 1
    %p256 = por %p254, %p255
    %p257 = scmp.ne.s32.totalorder %s248, %s249
    %p258 = scmp.eq.s32.totalorder %s28, 0
    %p259 = por %p257, %p258
    %p260 = scmp.ne.s32.totalorder %s248, %s249
    %p261 = scmp.eq.s32.totalorder %s29, 1
    %p262 = por %p260, %p261
    %p264 = scmp.ne.s32.totalorder %s249, %s263
    %p265 = scmp.eq.s32.totalorder %s29, 0
    %p266 = por %p264, %p265
    %s268 = sadd.s32 %s267, 1
    %p271 = scmp.eq.s32.totalorder %s23, 1
    %p272 = scmp.ne.s32.totalorder %s267, %s269
    %p273 = scmp.eq.s32.totalorder %s23, 0
    %p274 = por %p272, %p273
    %p275 = scmp.ne.s32.totalorder %s267, %s269
    %p276 = scmp.eq.s32.totalorder %s28, 1
    %p277 = por %p275, %p276
    %p278 = scmp.ne.s32.totalorder %s269, %s270
    %p279 = scmp.eq.s32.totalorder %s28, 0
    %p280 = por %p278, %p279
    %p281 = scmp.ne.s32.totalorder %s269, %s270
    %p282 = scmp.eq.s32.totalorder %s29, 1
    %p283 = por %p281, %p282
    %p285 = scmp.ne.s32.totalorder %s270, %s284
    %p286 = scmp.eq.s32.totalorder %s29, 0
    %p287 = por %p285, %p286
    %s289 = sadd.s32 %s288, 1
    %p292 = scmp.eq.s32.totalorder %s23, 1
    %p293 = scmp.ne.s32.totalorder %s288, %s290
    %p294 = scmp.eq.s32.totalorder %s23, 0
    %p295 = por %p293, %p294
    %p296 = scmp.ne.s32.totalorder %s288, %s290
    %p297 = scmp.eq.s32.totalorder %s28, 1
    %p298 = por %p296, %p297
    %p299 = scmp.ne.s32.totalorder %s290, %s291
    %p300 = scmp.eq.s32.totalorder %s28, 0
    %p301 = por %p299, %p300
    %p302 = scmp.ne.s32.totalorder %s290, %s291
    %p303 = scmp.eq.s32.totalorder %s29, 1
    %p304 = por %p302, %p303
    %p306 = scmp.ne.s32.totalorder %s291, %s305
    %p307 = scmp.eq.s32.totalorder %s29, 0
    %p308 = por %p306, %p307
    %s310 = sadd.s32 %s309, 1
    %p313 = scmp.eq.s32.totalorder %s23, 1
    %p314 = scmp.ne.s32.totalorder %s309, %s311
    %p315 = scmp.eq.s32.totalorder %s23, 0
    %p316 = por %p314, %p315
    %p317 = scmp.ne.s32.totalorder %s309, %s311
    %p318 = scmp.eq.s32.totalorder %s28, 1
    %p319 = por %p317, %p318
    %p320 = scmp.ne.s32.totalorder %s311, %s312
    %p321 = scmp.eq.s32.totalorder %s28, 0
    %p322 = por %p320, %p321
    %p323 = scmp.ne.s32.totalorder %s311, %s312
    %p324 = scmp.eq.s32.totalorder %s29, 1
    %p325 = por %p323, %p324
    %p327 = scmp.ne.s32.totalorder %s312, %s326
    %p328 = scmp.eq.s32.totalorder %s29, 0
    %p329 = por %p327, %p328
    %s331 = sadd.s32 %s330, 1
    %p334 = scmp.eq.s32.totalorder %s23, 1
    %p335 = scmp.ne.s32.totalorder %s330, %s332
    %p336 = scmp.eq.s32.totalorder %s23, 0
    %p337 = por %p335, %p336
    %p338 = scmp.ne.s32.totalorder %s330, %s332
    %p339 = scmp.eq.s32.totalorder %s28, 1
    %p340 = por %p338, %p339
    %p341 = scmp.ne.s32.totalorder %s332, %s333
    %p342 = scmp.eq.s32.totalorder %s28, 0
    %p343 = por %p341, %p342
    %p344 = scmp.ne.s32.totalorder %s332, %s333
    %p345 = scmp.eq.s32.totalorder %s29, 1
    %p346 = por %p344, %p345
    %p348 = scmp.ne.s32.totalorder %s333, %s347
    %p349 = scmp.eq.s32.totalorder %s29, 0
    %p350 = por %p348, %p349
    %s351 = ssub.s32 %s23, %s30
    %p352 = scmp.eq.s32.totalorder %s351, 0
    %s354 = sadd.s32 %s353, 1
    %s355 = scalar_select %p352, %s353, %s354
    %p358 = pneg %p352
    %p359 = scmp.eq.s32.totalorder %s23, 1
    %p360 = por %p358, %p359
    %p361 = scmp.ne.s32.totalorder %s353, %s356
    %p362 = scmp.eq.s32.totalorder %s23, 0
    %p363 = por %p361, %p362
    %p364 = scmp.ne.s32.totalorder %s353, %s356
    %p365 = scmp.eq.s32.totalorder %s28, 1
    %p366 = por %p364, %p365
    %p367 = scmp.ne.s32.totalorder %s356, %s357
    %p368 = scmp.eq.s32.totalorder %s28, 0
    %p369 = por %p367, %p368
    %p370 = scmp.ne.s32.totalorder %s356, %s357
    %p371 = scmp.eq.s32.totalorder %s29, 1
    %p372 = por %p370, %p371
    %p374 = scmp.ne.s32.totalorder %s357, %s373
    %p375 = scmp.eq.s32.totalorder %s29, 0
    %p376 = por %p374, %p375
    %s377 = ssub.s32 %s23, %s30
    %p378 = scmp.eq.s32.totalorder %s377, 0
    %s380 = sadd.s32 %s379, 1
    %s381 = scalar_select %p378, %s379, %s380
    %p384 = pneg %p378
    %p385 = scmp.eq.s32.totalorder %s23, 1
    %p386 = por %p384, %p385
    %p387 = scmp.ne.s32.totalorder %s379, %s382
    %p388 = scmp.eq.s32.totalorder %s23, 0
    %p389 = por %p387, %p388
    %p390 = scmp.ne.s32.totalorder %s379, %s382
    %p391 = scmp.eq.s32.totalorder %s28, 1
    %p392 = por %p390, %p391
    %p393 = scmp.ne.s32.totalorder %s382, %s383
    %p394 = scmp.eq.s32.totalorder %s28, 0
    %p395 = por %p393, %p394
    %p396 = scmp.ne.s32.totalorder %s382, %s383
    %p397 = scmp.eq.s32.totalorder %s29, 1
    %p398 = por %p396, %p397
    %p400 = scmp.ne.s32.totalorder %s383, %s399
    %p401 = scmp.eq.s32.totalorder %s29, 0
    %p402 = por %p400, %p401
    %p403 = scmp.le.s32.totalorder 1, %s23
    %p404 = scmp.lt.s32.totalorder %s23, 3
    %p405 = pnand %p403, %p404
    %p406 = pneg %p405
    // Predicated region
    $region9: #{deq_transformer_lm_forward.1} parent=5 // pred_check
      _
    $region10: #{deq_transformer_lm_forward.1} parent=5 // pred_check_branch
      %408 = sbr.rel (%p405) target = $region12
    $region11: #{deq_transformer_lm_forward.1} parent=5 // pred_region
      %s409 = ssub.s32 %s23, 1
      // Predicated region
      $region13: #{deq_transformer_lm_forward.1} parent=11 // pred_check
        %p410 = pneg %p70
      $region14: #{deq_transformer_lm_forward.1} parent=11 // pred_check_branch
        %412 = sbr.rel (%p410) target = $region16
      $region15: #{deq_transformer_lm_forward.1} parent=11 // pred_region
        _
      $region16: #{deq_transformer_lm_forward.1} parent=11 // pred_fallthru
        _
      // Predicated region
      $region17: #{deq_transformer_lm_forward.1} parent=11 // pred_check
        %p413 = pneg %p91
      $region18: #{deq_transformer_lm_forward.1} parent=11 // pred_check_branch
        %415 = sbr.rel (%p413) target = $region20
      $region19: #{deq_transformer_lm_forward.1} parent=11 // pred_region
        _
      $region20: #{deq_transformer_lm_forward.1} parent=11 // pred_fallthru
        _
      // Predicated region
      $region21: #{deq_transformer_lm_forward.1} parent=11 // pred_check
        %p416 = pneg %p112
      $region22: #{deq_transformer_lm_forward.1} parent=11 // pred_check_branch
        %418 = sbr.rel (%p416) target = $region24
      $region23: #{deq_transformer_lm_forward.1} parent=11 // pred_region
        _
      $region24: #{deq_transformer_lm_forward.1} parent=11 // pred_fallthru
        _
      // Predicated region
      $region25: #{deq_transformer_lm_forward.1} parent=11 // pred_check
        %p419 = pneg %p133
      $region26: #{deq_transformer_lm_forward.1} parent=11 // pred_check_branch
        %421 = sbr.rel (%p419) target = $region28
      $region27: #{deq_transformer_lm_forward.1} parent=11 // pred_region
        _
      $region28: #{deq_transformer_lm_forward.1} parent=11 // pred_fallthru
        _
      // Predicated region
      $region29: #{deq_transformer_lm_forward.1} parent=11 // pred_check
        %p422 = pneg %p154
      $region30: #{deq_transformer_lm_forward.1} parent=11 // pred_check_branch
        %424 = sbr.rel (%p422) target = $region32
      $region31: #{deq_transformer_lm_forward.1} parent=11 // pred_region
        _
      $region32: #{deq_transformer_lm_forward.1} parent=11 // pred_fallthru
        _
      // Predicated region
      $region33: #{deq_transformer_lm_forward.1} parent=11 // pred_check
        %p425 = pneg %p175
      $region34: #{deq_transformer_lm_forward.1} parent=11 // pred_check_branch
        %427 = sbr.rel (%p425) target = $region36
      $region35: #{deq_transformer_lm_forward.1} parent=11 // pred_region
        _
      $region36: #{deq_transformer_lm_forward.1} parent=11 // pred_fallthru
        _
      // Predicated region
      $region37: #{deq_transformer_lm_forward.1} parent=11 // pred_check
        %p428 = pneg %p196
      $region38: #{deq_transformer_lm_forward.1} parent=11 // pred_check_branch
        %430 = sbr.rel (%p428) target = $region40
      $region39: #{deq_transformer_lm_forward.1} parent=11 // pred_region
        _
      $region40: #{deq_transformer_lm_forward.1} parent=11 // pred_fallthru
        _
      // Predicated region
      $region41: #{deq_transformer_lm_forward.1} parent=11 // pred_check
        %p431 = pneg %p217
      $region42: #{deq_transformer_lm_forward.1} parent=11 // pred_check_branch
        %433 = sbr.rel (%p431) target = $region44
      $region43: #{deq_transformer_lm_forward.1} parent=11 // pred_region
        _
      $region44: #{deq_transformer_lm_forward.1} parent=11 // pred_fallthru
        _
      // Predicated region
      $region45: #{deq_transformer_lm_forward.1} parent=11 // pred_check
        %p434 = pneg %p238
      $region46: #{deq_transformer_lm_forward.1} parent=11 // pred_check_branch
        %436 = sbr.rel (%p434) target = $region48
      $region47: #{deq_transformer_lm_forward.1} parent=11 // pred_region
        _
      $region48: #{deq_transformer_lm_forward.1} parent=11 // pred_fallthru
        _
      // Predicated region
      $region49: #{deq_transformer_lm_forward.1} parent=11 // pred_check
        %p437 = pneg %p259
      $region50: #{deq_transformer_lm_forward.1} parent=11 // pred_check_branch
        %439 = sbr.rel (%p437) target = $region52
      $region51: #{deq_transformer_lm_forward.1} parent=11 // pred_region
        _
      $region52: #{deq_transformer_lm_forward.1} parent=11 // pred_fallthru
        _
      // Predicated region
      $region53: #{deq_transformer_lm_forward.1} parent=11 // pred_check
        %p440 = pneg %p280
      $region54: #{deq_transformer_lm_forward.1} parent=11 // pred_check_branch
        %442 = sbr.rel (%p440) target = $region56
      $region55: #{deq_transformer_lm_forward.1} parent=11 // pred_region
        _
      $region56: #{deq_transformer_lm_forward.1} parent=11 // pred_fallthru
        _
      // Predicated region
      $region57: #{deq_transformer_lm_forward.1} parent=11 // pred_check
        %p443 = pneg %p301
      $region58: #{deq_transformer_lm_forward.1} parent=11 // pred_check_branch
        %445 = sbr.rel (%p443) target = $region60
      $region59: #{deq_transformer_lm_forward.1} parent=11 // pred_region
        _
      $region60: #{deq_transformer_lm_forward.1} parent=11 // pred_fallthru
        _
      // Predicated region
      $region61: #{deq_transformer_lm_forward.1} parent=11 // pred_check
        %p446 = pneg %p322
      $region62: #{deq_transformer_lm_forward.1} parent=11 // pred_check_branch
        %448 = sbr.rel (%p446) target = $region64
      $region63: #{deq_transformer_lm_forward.1} parent=11 // pred_region
        _
      $region64: #{deq_transformer_lm_forward.1} parent=11 // pred_fallthru
        _
      // Predicated region
      $region65: #{deq_transformer_lm_forward.1} parent=11 // pred_check
        %p449 = pneg %p343
      $region66: #{deq_transformer_lm_forward.1} parent=11 // pred_check_branch
        %451 = sbr.rel (%p449) target = $region68
      $region67: #{deq_transformer_lm_forward.1} parent=11 // pred_region
        _
      $region68: #{deq_transformer_lm_forward.1} parent=11 // pred_fallthru
        _
    $region12: #{deq_transformer_lm_forward.1} parent=5 // pred_fallthru
      _
    %p452 = scmp.lt.s32.totalorder %s23, 2
    // Predicated region
    $region69: #{deq_transformer_lm_forward.1} parent=5 // pred_check
      %p453 = pneg %p452
    $region70: #{deq_transformer_lm_forward.1} parent=5 // pred_check_branch
      %455 = sbr.rel (%p453) target = $region72
    $region71: #{deq_transformer_lm_forward.1} parent=5 // pred_region
      // Predicated region
      $region73: #{deq_transformer_lm_forward.1} parent=71 // pred_check
        %p456 = pneg %p43
      $region74: #{deq_transformer_lm_forward.1} parent=71 // pred_check_branch
        %458 = sbr.rel (%p456) target = $region76
      $region75: #{deq_transformer_lm_forward.1} parent=71 // pred_region
        %p459 = scmp.lt.s32.totalorder %s23, 1
        %s460 = scalar_select %p459, %s23, 1
        %s461 = smul.addr %s460, 8
        %s462 = scalar_lea.vmem %s0, %s461
      $region76: #{deq_transformer_lm_forward.1} parent=71 // pred_fallthru
        _
    $region72: #{deq_transformer_lm_forward.1} parent=5 // pred_fallthru
      _
    %p463 = scmp.le.s32.totalorder 1, %s23
    %p464 = scmp.lt.s32.totalorder %s23, 3
    %p465 = pnand %p463, %p464
    %p466 = pneg %p465
    // Predicated region
    $region77: #{deq_transformer_lm_forward.1} parent=5 // pred_check
      _
    $region78: #{deq_transformer_lm_forward.1} parent=5 // pred_check_branch
      %468 = sbr.rel (%p465) target = $region80
    $region79: #{deq_transformer_lm_forward.1} parent=5 // pred_region
      %s469 = ssub.s32 %s23, 1
      %p470 = scmp.lt.s32.totalorder %s28, 1
      %s471 = scalar_select %p470, %s28, 1
      %s472 = smul.addr %s471, 8
      %s473 = scalar_lea.vmem %s0, %s472
      %p474 = pneg %p49
      %p475 = pneg %p46
      %p476 = pneg %p70
      %p477 = pneg %p67
      %p478 = pneg %p91
      %p479 = pneg %p88
      %p480 = pneg %p112
      %p481 = pneg %p109
      %p482 = pneg %p133
      %p483 = pneg %p130
      %p484 = pneg %p154
      %p485 = pneg %p151
      %p486 = pneg %p175
      %p487 = pneg %p172
      %p488 = pneg %p196
      %p489 = pneg %p193
      %p490 = pneg %p217
      %p491 = pneg %p214
      %p492 = pneg %p238
      %p493 = pneg %p235
      %p494 = pneg %p259
      %p495 = pneg %p256
      %p496 = pneg %p280
      %p497 = pneg %p277
      %p498 = pneg %p301
      %p499 = pneg %p298
      %p500 = pneg %p322
      %p501 = pneg %p319
      %p502 = pneg %p343
      %p503 = pneg %p340
      %p504 = pneg %p369
      %p505 = pneg %p366
      %p506 = scmp.lt.s32.totalorder %s28, 1
      %s507 = scalar_select %p506, %s28, 1
      %s508 = smul.addr %s507, 8
      %s509 = scalar_lea.vmem %s15, %s508
      %p510 = pneg %p395
      %p511 = pneg %p392
      %p512 = scmp.lt.s32.totalorder %s28, 1
      %s513 = scalar_select %p512, %s28, 1
      %s514 = smul.addr %s513, 8
      %s515 = scalar_lea.vmem %s16, %s514
      %p516 = scmp.lt.s32.totalorder %s28, 1
      %s517 = scalar_select %p516, %s28, 1
      %s518 = smul.addr %s517, 8
      %s519 = scalar_lea.vmem %s0, %s518
      %p520 = scmp.lt.s32.totalorder %s28, 1
      %s521 = scalar_select %p520, %s28, 1
      %s522 = smul.addr %s521, 8
      %s523 = scalar_lea.vmem %s15, %s522
      %p524 = scmp.lt.s32.totalorder %s28, 1
      %s525 = scalar_select %p524, %s28, 1
      %s526 = smul.addr %s525, 8
      %s527 = scalar_lea.vmem %s16, %s526
      %v529 = vld [vmem:[%s519] sm:$0xff]
      %v530 = vld [vmem:[%s1] sm:$0xff]
      %v531 = vld [vmem:[%s1 + $0x8] sm:$0xff]
      %v532 = vld [vmem:[%s1 + $0x10] sm:$0xff]
      %v533 = vld [vmem:[%s1 + $0x18] sm:$0xff]
      %v534 = vld [vmem:[%s2] sm:$0x1]
      %v536 = vlaneseq
      %v537 = vshrl.u32 %v536, 7
      %v538 = vsub.s32 0, %v537
      %v539 = vrot.slane %v534, %v538
      %vm541 = vcmask 261120
      %v543 = vsel %vm541, %v529, 0
      %545 = vmatprep.subr.mxu0 0.0
      %546 = vmatpush1.msra.mxu0 %v530
      %547 = vmatprep.subr.mxu0 0.0
      %548 = vmatpush1.msra.mxu0 %v531
      %549 = vmatprep.subr.mxu0 0.0
      %550 = vmatpush1.msra.mxu0 %v532
      %551 = vmatprep.subr.mxu0 0.0
      %552 = vmatpush1.msra.mxu0 %v533
      %553 = vmatprep.subr.mxu0 0.0
      %554 = vmatpush1.msra.mxu0 0.0
      %555 = vmatprep.subr.mxu0 0.0
      %556 = vmatpush1.msra.mxu0 0.0
      %557 = vmatprep.subr.mxu0 0.0
      %558 = vmatpush1.msra.mxu0 0.0
      %559 = vmatprep.subr.mxu0 0.0
      %560 = vmatpush1.msra.mxu0 0.0
      %561 = vmatprep.subr.mxu0 0.0
      %562 = vmatpush1.msra.mxu0 0.0
      %563 = vmatprep.subr.mxu0 0.0
      %564 = vmatpush1.msra.mxu0 0.0
      %565 = vmatprep.subr.mxu0 0.0
      %566 = vmatpush1.msra.mxu0 0.0
      %567 = vmatprep.subr.mxu0 0.0
      %568 = vmatpush1.msra.mxu0 0.0
      %569 = vmatprep.subr.mxu0 0.0
      %570 = vmatpush1.msra.mxu0 0.0
      %571 = vmatprep.subr.mxu0 0.0
      %572 = vmatpush1.msra.mxu0 0.0
      %573 = vmatprep.subr.mxu0 0.0
      %574 = vmatpush1.msra.mxu0 0.0
      %575 = vmatprep.subr.mxu0 0.0
      %576 = vmatpush1.msra.mxu0 0.0
      %577 = vmatprep.subr.mxu0 0.0
      %578 = vmatpush1.msra.mxu0 0.0
      %579 = vmatprep.subr.mxu0 0.0
      %580 = vmatpush1.msra.mxu0 0.0
      %581 = vmatprep.subr.mxu0 0.0
      %582 = vmatpush1.msra.mxu0 0.0
      %583 = vmatprep.subr.mxu0 0.0
      %584 = vmatpush1.msra.mxu0 0.0
      %585 = vmatprep.subr.mxu0 0.0
      %586 = vmatpush1.msra.mxu0 0.0
      %587 = vmatprep.subr.mxu0 0.0
      %588 = vmatpush1.msra.mxu0 0.0
      %589 = vmatprep.subr.mxu0 0.0
      %590 = vmatpush1.msra.mxu0 0.0
      %591 = vmatprep.subr.mxu0 0.0
      %592 = vmatpush1.msra.mxu0 0.0
      %593 = vmatprep.subr.mxu0 0.0
      %594 = vmatpush1.msra.mxu0 0.0
      %595 = vmatprep.subr.mxu0 0.0
      %596 = vmatpush1.msra.mxu0 0.0
      %597 = vmatprep.subr.mxu0 0.0
      %598 = vmatpush1.msra.mxu0 0.0
      %599 = vmatprep.subr.mxu0 0.0
      %600 = vmatpush1.msra.mxu0 0.0
      %601 = vmatprep.subr.mxu0 0.0
      %602 = vmatpush1.msra.mxu0 0.0
      %603 = vmatprep.subr.mxu0 0.0
      %604 = vmatpush1.msra.mxu0 0.0
      %605 = vmatprep.subr.mxu0 0.0
      %606 = vmatpush1.msra.mxu0 0.0
      %607 = vmatprep.subr.mxu0 0.0
      %608 = vmatpush1.msra.mxu0 0.0
      %609 = vmatprep.mubr.f32.mxu0 0.0
      %610 = vmatmul.mubr.f32.gmra.mrb[0].mxu0 %v543
      %v611 = vpop.f32.mrb[0].mxu0
      %v612 = vadd.f32 %v539, %v611
      %v613 = vpop.f32.mrb[0].mxu0
      %614 = vdwg.mxu0
      %v615 = vmul.f32 %v612, 0.25
      %v616 = vsel %vm541, %v615, %v612
      %v617 = vld [vmem:[%s3] sm:$0xf]
      %v618 = vld [vmem:[%s3 + $0x4] sm:$0xf]
      %v619 = vld [vmem:[%s3 + $0x8] sm:$0xf]
      %v620 = vld [vmem:[%s3 + $0xc] sm:$0xf]
      %v621 = vld [vmem:[%s5] sm:$0xf]
      %v622 = vld [vmem:[%s5 + $0x4] sm:$0xf]
      %v623 = vld [vmem:[%s5 + $0x8] sm:$0xf]
      %v624 = vld [vmem:[%s5 + $0xc] sm:$0xf]
      %v625 = vld [vmem:[%s5 + $0x10] sm:$0xf]
      %v626 = vld [vmem:[%s5 + $0x14] sm:$0xf]
      %v627 = vld [vmem:[%s5 + $0x18] sm:$0xf]
      %v628 = vld [vmem:[%s5 + $0x1c] sm:$0xf]
      %v629 = vld [vmem:[%s5 + $0x20] sm:$0xf]
      %v630 = vld [vmem:[%s5 + $0x24] sm:$0xf]
      %v631 = vld [vmem:[%s5 + $0x28] sm:$0xf]
      %v632 = vld [vmem:[%s5 + $0x2c] sm:$0xf]
      %v633 = vld [vmem:[%s5 + $0x30] sm:$0xf]
      %v634 = vld [vmem:[%s5 + $0x34] sm:$0xf]
      %v635 = vld [vmem:[%s5 + $0x38] sm:$0xf]
      %v636 = vld [vmem:[%s5 + $0x3c] sm:$0xf]
      %v637 = vld [vmem:[%s5 + $0x40] sm:$0xf]
      %v638 = vld [vmem:[%s5 + $0x44] sm:$0xf]
      %v639 = vld [vmem:[%s5 + $0x48] sm:$0xf]
      %v640 = vld [vmem:[%s5 + $0x4c] sm:$0xf]
      %v641 = vld [vmem:[%s5 + $0x50] sm:$0xf]
      %v642 = vld [vmem:[%s5 + $0x54] sm:$0xf]
      %v643 = vld [vmem:[%s5 + $0x58] sm:$0xf]
      %v644 = vld [vmem:[%s5 + $0x5c] sm:$0xf]
      %v645 = vld [vmem:[%s5 + $0x60] sm:$0xf]
      %v646 = vld [vmem:[%s5 + $0x64] sm:$0xf]
      %v647 = vld [vmem:[%s5 + $0x68] sm:$0xf]
      %v648 = vld [vmem:[%s5 + $0x6c] sm:$0xf]
      %v649 = vld [vmem:[%s5 + $0x70] sm:$0xf]
      %v650 = vld [vmem:[%s5 + $0x74] sm:$0xf]
      %v651 = vld [vmem:[%s5 + $0x78] sm:$0xf]
      %v652 = vld [vmem:[%s5 + $0x7c] sm:$0xf]
      %v653 = vld [vmem:[%s4] sm:$0x1]
      %v654 = vld [vmem:[%s6] sm:$0xff]
      %v655 = vld [vmem:[%s8] sm:$0x1]
      %v656 = vld [vmem:[%s9] sm:$0xf]
      %v657 = vld [vmem:[%s9 + $0x4] sm:$0xf]
      %v658 = vld [vmem:[%s9 + $0x8] sm:$0xf]
      %v659 = vld [vmem:[%s9 + $0xc] sm:$0xf]
      %v660 = vld [vmem:[%s10] sm:$0x1]
      %v661 = vld [vmem:[%s11] sm:$0xf]
      %v662 = vld [vmem:[%s11 + $0x4] sm:$0xf]
      %v663 = vld [vmem:[%s11 + $0x8] sm:$0xf]
      %v664 = vld [vmem:[%s11 + $0xc] sm:$0xf]
      %v665 = vld [vmem:[%s11 + $0x10] sm:$0xf]
      %v666 = vld [vmem:[%s11 + $0x14] sm:$0xf]
      %v667 = vld [vmem:[%s11 + $0x18] sm:$0xf]
      %v668 = vld [vmem:[%s11 + $0x1c] sm:$0xf]
      %v669 = vld [vmem:[%s12] sm:$0x1]
      %v670 = vld [vmem:[%s7] sm:$0xf]
      %v671 = vld [vmem:[%s7 + $0x4] sm:$0xf]
      %s672 = scalar_lea.vmem %s7, 8
      %v673 = vld [vmem:[%s672] sm:$0xf]
      %v674 = vld [vmem:[%s672 + $0x4] sm:$0xf]
      %v679 = vunpack.c.l.b16 %v617
      %v680 = vunpack.c.l.b16 %v618
      %v681 = vunpack.c.l.b16 %v619
      %v682 = vunpack.c.l.b16 %v620
      %v683 = vpack.c.b16 %v680, %v679
      %v684 = vpack.c.b16 %v682, %v681
      %v688 = vsel %vm541, 0, 0
      %690 = vmatprep.subr.bf16.mxu0 0
      %691 = vmatpush1.bf16.msra.mxu0 %v683
      %692 = vmatprep.subr.bf16.mxu0 0
      %693 = vmatpush1.bf16.msra.mxu0 %v684
      %694 = vmatprep.subr.bf16.mxu0 0
      %695 = vmatpush1.bf16.msra.mxu0 0
      %696 = vmatprep.subr.bf16.mxu0 0
      %697 = vmatpush1.bf16.msra.mxu0 0
      %698 = vmatprep.subr.bf16.mxu0 0
      %699 = vmatpush1.bf16.msra.mxu0 0
      %700 = vmatprep.subr.bf16.mxu0 0
      %701 = vmatpush1.bf16.msra.mxu0 0
      %702 = vmatprep.subr.bf16.mxu0 0
      %703 = vmatpush1.bf16.msra.mxu0 0
      %704 = vmatprep.subr.bf16.mxu0 0
      %705 = vmatpush1.bf16.msra.mxu0 0
      %706 = vmatprep.subr.bf16.mxu0 0
      %707 = vmatpush1.bf16.msra.mxu0 0
      %708 = vmatprep.subr.bf16.mxu0 0
      %709 = vmatpush1.bf16.msra.mxu0 0
      %710 = vmatprep.subr.bf16.mxu0 0
      %711 = vmatpush1.bf16.msra.mxu0 0
      %712 = vmatprep.subr.bf16.mxu0 0
      %713 = vmatpush1.bf16.msra.mxu0 0
      %714 = vmatprep.subr.bf16.mxu0 0
      %715 = vmatpush1.bf16.msra.mxu0 0
      %716 = vmatprep.subr.bf16.mxu0 0
      %717 = vmatpush1.bf16.msra.mxu0 0
      %718 = vmatprep.subr.bf16.mxu0 0
      %719 = vmatpush1.bf16.msra.mxu0 0
      %720 = vmatprep.subr.bf16.mxu0 0
      %721 = vmatpush1.bf16.msra.mxu0 0
      %722 = vmatprep.mubr.bf16.mxu0 0
      %723 = vmatmul.mubr.bf16.gmra.mrb[0].mxu0 %v688
      %v724 = vpop.f32.mrb[0].mxu0
      %v725 = vadd.f32 %v616, %v724
      %v726 = vpop.f32.mrb[0].mxu0
      %v727 = vpop.f32.mrb[0].mxu0
      %v728 = vpop.f32.mrb[0].mxu0
      %729 = vdwg.mxu0
      %v730 = vpack.c.bf16 %v725, %v725
      %v733 = vunpack.c.l.s4 1966171168
      %v734 = vunpack.c.0.s8 %v733
      %v735 = vlaneseq
      %v736 = vshrl.u32 %v735, 7
      %v737 = vsub.s32 %v734, %v736
      %v738 = vrot.slane %v730, %v737
      %v739 = vcombine.high %v738, %v738
      %v741 = vunpack.c.l.s4 1966171168
      %v742 = vunpack.c.0.s8 %v741
      %v743 = vlaneseq
      %v744 = vshrl.u32 %v743, 7
      %v745 = vsub.s32 %v742, %v744
      %v746 = vrot.slane %v738, %v745
      %v748 = vunpack.c.l.s4 1966171168
      %v749 = vunpack.c.0.s8 %v748
      %v750 = vlaneseq
      %v751 = vshrl.u32 %v750, 7
      %v752 = vsub.s32 %v749, %v751
      %v753 = vrot.slane %v739, %v752
      %v754 = vcombine.high %v746, %v746
      %v755 = vcombine.high %v753, %v753
      %v756 = vunpack.i.l.s16 %v746
      %v757 = vunpack.i.h.s16 %v746
      %v758 = vunpack.i.l.s16 %v753
      %v759 = vunpack.i.h.s16 %v753
      %v760 = vunpack.i.l.s16 %v754
      %v761 = vunpack.i.h.s16 %v754
      %v762 = vunpack.i.l.s16 %v755
      %v763 = vunpack.i.h.s16 %v755
      %v764 = vpack.i.b16 %v756, %v756
      %v765 = vlaneseq
      %v766 = vshrl.u32 %v765, 7
      %v767 = vsub.s32 0, %v766
      %v768 = vrot.slane %v764, %v767
      %v773 = vunpack.c.l.b16 %v621
      %v774 = vunpack.c.l.b16 %v622
      %v775 = vunpack.c.l.b16 %v623
      %v776 = vunpack.c.l.b16 %v624
      %v777 = vpack.c.b16 %v774, %v773
      %v778 = vpack.c.b16 %v776, %v775
      %v782 = vsel %vm541, %v768, 0
      %784 = vmatprep.subr.bf16.mxu0 0
      %785 = vmatpush1.bf16.msra.mxu0 %v777
      %786 = vmatprep.subr.bf16.mxu0 0
      %787 = vmatpush1.bf16.msra.mxu0 %v778
      %788 = vmatprep.subr.bf16.mxu0 0
      %789 = vmatpush1.bf16.msra.mxu0 0
      %790 = vmatprep.subr.bf16.mxu0 0
      %791 = vmatpush1.bf16.msra.mxu0 0
      %792 = vmatprep.subr.bf16.mxu0 0
      %793 = vmatpush1.bf16.msra.mxu0 0
      %794 = vmatprep.subr.bf16.mxu0 0
      %795 = vmatpush1.bf16.msra.mxu0 0
      %796 = vmatprep.subr.bf16.mxu0 0
      %797 = vmatpush1.bf16.msra.mxu0 0
      %798 = vmatprep.subr.bf16.mxu0 0
      %799 = vmatpush1.bf16.msra.mxu0 0
      %800 = vmatprep.subr.bf16.mxu0 0
      %801 = vmatpush1.bf16.msra.mxu0 0
      %802 = vmatprep.subr.bf16.mxu0 0
      %803 = vmatpush1.bf16.msra.mxu0 0
      %804 = vmatprep.subr.bf16.mxu0 0
      %805 = vmatpush1.bf16.msra.mxu0 0
      %806 = vmatprep.subr.bf16.mxu0 0
      %807 = vmatpush1.bf16.msra.mxu0 0
      %808 = vmatprep.subr.bf16.mxu0 0
      %809 = vmatpush1.bf16.msra.mxu0 0
      %810 = vmatprep.subr.bf16.mxu0 0
      %811 = vmatpush1.bf16.msra.mxu0 0
      %812 = vmatprep.subr.bf16.mxu0 0
      %813 = vmatpush1.bf16.msra.mxu0 0
      %814 = vmatprep.subr.bf16.mxu0 0
      %815 = vmatpush1.bf16.msra.mxu0 0
      %816 = vmatprep.mubr.bf16.mxu0 0
      %817 = vmatmul.mubr.bf16.gmra.mrb[0].mxu0 %v782
      %v818 = vpop.f32.mrb[0].mxu0
      %v819 = vadd.f32 0.0, %v818
      %v820 = vpop.f32.mrb[0].mxu0
      %v821 = vpop.f32.mrb[0].mxu0
      %v822 = vpop.f32.mrb[0].mxu0
      %823 = vdwg.mxu0
      %v824 = vpack.i.b16 %v757, %v757
      %v825 = vlaneseq
      %v826 = vshrl.u32 %v825, 7
      %v827 = vsub.s32 0, %v826
      %v828 = vrot.slane %v824, %v827
      %v833 = vunpack.c.l.b16 %v625
      %v834 = vunpack.c.l.b16 %v626
      %v835 = vunpack.c.l.b16 %v627
      %v836 = vunpack.c.l.b16 %v628
      %v837 = vpack.c.b16 %v834, %v833
      %v838 = vpack.c.b16 %v836, %v835
      %v842 = vsel %vm541, %v828, 0
      %844 = vmatprep.subr.bf16.mxu0 0
      %845 = vmatpush1.bf16.msra.mxu0 %v837
      %846 = vmatprep.subr.bf16.mxu0 0
      %847 = vmatpush1.bf16.msra.mxu0 %v838
      %848 = vmatprep.subr.bf16.mxu0 0
      %849 = vmatpush1.bf16.msra.mxu0 0
      %850 = vmatprep.subr.bf16.mxu0 0
      %851 = vmatpush1.bf16.msra.mxu0 0
      %852 = vmatprep.subr.bf16.mxu0 0
      %853 = vmatpush1.bf16.msra.mxu0 0
      %854 = vmatprep.subr.bf16.mxu0 0
      %855 = vmatpush1.bf16.msra.mxu0 0
      %856 = vmatprep.subr.bf16.mxu0 0
      %857 = vmatpush1.bf16.msra.mxu0 0
      %858 = vmatprep.subr.bf16.mxu0 0
      %859 = vmatpush1.bf16.msra.mxu0 0
      %860 = vmatprep.subr.bf16.mxu0 0
      %861 = vmatpush1.bf16.msra.mxu0 0
      %862 = vmatprep.subr.bf16.mxu0 0
      %863 = vmatpush1.bf16.msra.mxu0 0
      %864 = vmatprep.subr.bf16.mxu0 0
      %865 = vmatpush1.bf16.msra.mxu0 0
      %866 = vmatprep.subr.bf16.mxu0 0
      %867 = vmatpush1.bf16.msra.mxu0 0
      %868 = vmatprep.subr.bf16.mxu0 0
      %869 = vmatpush1.bf16.msra.mxu0 0
      %870 = vmatprep.subr.bf16.mxu0 0
      %871 = vmatpush1.bf16.msra.mxu0 0
      %872 = vmatprep.subr.bf16.mxu0 0
      %873 = vmatpush1.bf16.msra.mxu0 0
      %874 = vmatprep.subr.bf16.mxu0 0
      %875 = vmatpush1.bf16.msra.mxu0 0
      %876 = vmatprep.mubr.bf16.mxu0 0
      %877 = vmatmul.mubr.bf16.gmra.mrb[0].mxu0 %v842
      %v878 = vpop.f32.mrb[0].mxu0
      %v879 = vadd.f32 0.0, %v878
      %v880 = vpop.f32.mrb[0].mxu0
      %v881 = vpop.f32.mrb[0].mxu0
      %v882 = vpop.f32.mrb[0].mxu0
      %883 = vdwg.mxu0
      %v884 = vpack.i.b16 %v758, %v758
      %v885 = vlaneseq
      %v886 = vshrl.u32 %v885, 7
      %v887 = vsub.s32 0, %v886
      %v888 = vrot.slane %v884, %v887
      %v893 = vunpack.c.l.b16 %v629
      %v894 = vunpack.c.l.b16 %v630
      %v895 = vunpack.c.l.b16 %v631
      %v896 = vunpack.c.l.b16 %v632
      %v897 = vpack.c.b16 %v894, %v893
      %v898 = vpack.c.b16 %v896, %v895
      %v902 = vsel %vm541, %v888, 0
      %904 = vmatprep.subr.bf16.mxu0 0
      %905 = vmatpush1.bf16.msra.mxu0 %v897
      %906 = vmatprep.subr.bf16.mxu0 0
      %907 = vmatpush1.bf16.msra.mxu0 %v898
      %908 = vmatprep.subr.bf16.mxu0 0
      %909 = vmatpush1.bf16.msra.mxu0 0
      %910 = vmatprep.subr.bf16.mxu0 0
      %911 = vmatpush1.bf16.msra.mxu0 0
      %912 = vmatprep.subr.bf16.mxu0 0
      %913 = vmatpush1.bf16.msra.mxu0 0
      %914 = vmatprep.subr.bf16.mxu0 0
      %915 = vmatpush1.bf16.msra.mxu0 0
      %916 = vmatprep.subr.bf16.mxu0 0
      %917 = vmatpush1.bf16.msra.mxu0 0
      %918 = vmatprep.subr.bf16.mxu0 0
      %919 = vmatpush1.bf16.msra.mxu0 0
      %920 = vmatprep.subr.bf16.mxu0 0
      %921 = vmatpush1.bf16.msra.mxu0 0
      %922 = vmatprep.subr.bf16.mxu0 0
      %923 = vmatpush1.bf16.msra.mxu0 0
      %924 = vmatprep.subr.bf16.mxu0 0
      %925 = vmatpush1.bf16.msra.mxu0 0
      %926 = vmatprep.subr.bf16.mxu0 0
      %927 = vmatpush1.bf16.msra.mxu0 0
      %928 = vmatprep.subr.bf16.mxu0 0
      %929 = vmatpush1.bf16.msra.mxu0 0
      %930 = vmatprep.subr.bf16.mxu0 0
      %931 = vmatpush1.bf16.msra.mxu0 0
      %932 = vmatprep.subr.bf16.mxu0 0
      %933 = vmatpush1.bf16.msra.mxu0 0
      %934 = vmatprep.subr.bf16.mxu0 0
      %935 = vmatpush1.bf16.msra.mxu0 0
      %936 = vmatprep.mubr.bf16.mxu0 0
      %937 = vmatmul.mubr.bf16.gmra.mrb[0].mxu0 %v902
      %v938 = vpop.f32.mrb[0].mxu0
      %v939 = vadd.f32 0.0, %v938
      %v940 = vpop.f32.mrb[0].mxu0
      %v941 = vpop.f32.mrb[0].mxu0
      %v942 = vpop.f32.mrb[0].mxu0
      %943 = vdwg.mxu0
      %v944 = vpack.i.b16 %v759, %v759
      %v945 = vlaneseq
      %v946 = vshrl.u32 %v945, 7
      %v947 = vsub.s32 0, %v946
      %v948 = vrot.slane %v944, %v947
      %v953 = vunpack.c.l.b16 %v633
      %v954 = vunpack.c.l.b16 %v634
      %v955 = vunpack.c.l.b16 %v635
      %v956 = vunpack.c.l.b16 %v636
      %v957 = vpack.c.b16 %v954, %v953
      %v958 = vpack.c.b16 %v956, %v955
      %v962 = vsel %vm541, %v948, 0
      %964 = vmatprep.subr.bf16.mxu0 0
      %965 = vmatpush1.bf16.msra.mxu0 %v957
      %966 = vmatprep.subr.bf16.mxu0 0
      %967 = vmatpush1.bf16.msra.mxu0 %v958
      %968 = vmatprep.subr.bf16.mxu0 0
      %969 = vmatpush1.bf16.msra.mxu0 0
      %970 = vmatprep.subr.bf16.mxu0 0
      %971 = vmatpush1.bf16.msra.mxu0 0
      %972 = vmatprep.subr.bf16.mxu0 0
      %973 = vmatpush1.bf16.msra.mxu0 0
      %974 = vmatprep.subr.bf16.mxu0 0
      %975 = vmatpush1.bf16.msra.mxu0 0
      %976 = vmatprep.subr.bf16.mxu0 0
      %977 = vmatpush1.bf16.msra.mxu0 0
      %978 = vmatprep.subr.bf16.mxu0 0
      %979 = vmatpush1.bf16.msra.mxu0 0
      %980 = vmatprep.subr.bf16.mxu0 0
      %981 = vmatpush1.bf16.msra.mxu0 0
      %982 = vmatprep.subr.bf16.mxu0 0
      %983 = vmatpush1.bf16.msra.mxu0 0
      %984 = vmatprep.subr.bf16.mxu0 0
      %985 = vmatpush1.bf16.msra.mxu0 0
      %986 = vmatprep.subr.bf16.mxu0 0
      %987 = vmatpush1.bf16.msra.mxu0 0
      %988 = vmatprep.subr.bf16.mxu0 0
      %989 = vmatpush1.bf16.msra.mxu0 0
      %990 = vmatprep.subr.bf16.mxu0 0
      %991 = vmatpush1.bf16.msra.mxu0 0
      %992 = vmatprep.subr.bf16.mxu0 0
      %993 = vmatpush1.bf16.msra.mxu0 0
      %994 = vmatprep.subr.bf16.mxu0 0
      %995 = vmatpush1.bf16.msra.mxu0 0
      %996 = vmatprep.mubr.bf16.mxu0 0
      %997 = vmatmul.mubr.bf16.gmra.mrb[0].mxu0 %v962
      %v998 = vpop.f32.mrb[0].mxu0
      %v999 = vadd.f32 0.0, %v998
      %v1000 = vpop.f32.mrb[0].mxu0
      %v1001 = vpop.f32.mrb[0].mxu0
      %v1002 = vpop.f32.mrb[0].mxu0
      %1003 = vdwg.mxu0
      %v1004 = vpack.i.b16 %v760, %v760
      %v1005 = vlaneseq
      %v1006 = vshrl.u32 %v1005, 7
      %v1007 = vsub.s32 0, %v1006
      %v1008 = vrot.slane %v1004, %v1007
      %v1013 = vunpack.c.l.b16 %v637
      %v1014 = vunpack.c.l.b16 %v638
      %v1015 = vunpack.c.l.b16 %v639
      %v1016 = vunpack.c.l.b16 %v640
      %v1017 = vpack.c.b16 %v1014, %v1013
      %v1018 = vpack.c.b16 %v1016, %v1015
      %v1022 = vsel %vm541, %v1008, 0
      %1024 = vmatprep.subr.bf16.mxu0 0
      %1025 = vmatpush1.bf16.msra.mxu0 %v1017
      %1026 = vmatprep.subr.bf16.mxu0 0
      %1027 = vmatpush1.bf16.msra.mxu0 %v1018
      %1028 = vmatprep.subr.bf16.mxu0 0
      %1029 = vmatpush1.bf16.msra.mxu0 0
      %1030 = vmatprep.subr.bf16.mxu0 0
      %1031 = vmatpush1.bf16.msra.mxu0 0
      %1032 = vmatprep.subr.bf16.mxu0 0
      %1033 = vmatpush1.bf16.msra.mxu0 0
      %1034 = vmatprep.subr.bf16.mxu0 0
      %1035 = vmatpush1.bf16.msra.mxu0 0
      %1036 = vmatprep.subr.bf16.mxu0 0
      %1037 = vmatpush1.bf16.msra.mxu0 0
      %1038 = vmatprep.subr.bf16.mxu0 0
      %1039 = vmatpush1.bf16.msra.mxu0 0
      %1040 = vmatprep.subr.bf16.mxu0 0
      %1041 = vmatpush1.bf16.msra.mxu0 0
      %1042 = vmatprep.subr.bf16.mxu0 0
      %1043 = vmatpush1.bf16.msra.mxu0 0
      %1044 = vmatprep.subr.bf16.mxu0 0
      %1045 = vmatpush1.bf16.msra.mxu0 0
      %1046 = vmatprep.subr.bf16.mxu0 0
      %1047 = vmatpush1.bf16.msra.mxu0 0
      %1048 = vmatprep.subr.bf16.mxu0 0
      %1049 = vmatpush1.bf16.msra.mxu0 0
      %1050 = vmatprep.subr.bf16.mxu0 0
      %1051 = vmatpush1.bf16.msra.mxu0 0
      %1052 = vmatprep.subr.bf16.mxu0 0
      %1053 = vmatpush1.bf16.msra.mxu0 0
      %1054 = vmatprep.subr.bf16.mxu0 0
      %1055 = vmatpush1.bf16.msra.mxu0 0
      %1056 = vmatprep.mubr.bf16.mxu0 0
      %1057 = vmatmul.mubr.bf16.gmra.mrb[0].mxu0 %v1022
      %v1058 = vpop.f32.mrb[0].mxu0
      %v1059 = vadd.f32 0.0, %v1058
      %v1060 = vpop.f32.mrb[0].mxu0
      %v1061 = vpop.f32.mrb[0].mxu0
      %v1062 = vpop.f32.mrb[0].mxu0
      %1063 = vdwg.mxu0
      %v1064 = vpack.i.b16 %v761, %v761
      %v1065 = vlaneseq
      %v1066 = vshrl.u32 %v1065, 7
      %v1067 = vsub.s32 0, %v1066
      %v1068 = vrot.slane %v1064, %v1067
      %v1073 = vunpack.c.l.b16 %v641
      %v1074 = vunpack.c.l.b16 %v642
      %v1075 = vunpack.c.l.b16 %v643
      %v1076 = vunpack.c.l.b16 %v644
      %v1077 = vpack.c.b16 %v1074, %v1073
      %v1078 = vpack.c.b16 %v1076, %v1075
      %v1082 = vsel %vm541, %v1068, 0
      %1084 = vmatprep.subr.bf16.mxu0 0
      %1085 = vmatpush1.bf16.msra.mxu0 %v1077
      %1086 = vmatprep.subr.bf16.mxu0 0
      %1087 = vmatpush1.bf16.msra.mxu0 %v1078
      %1088 = vmatprep.subr.bf16.mxu0 0
      %1089 = vmatpush1.bf16.msra.mxu0 0
      %1090 = vmatprep.subr.bf16.mxu0 0
      %1091 = vmatpush1.bf16.msra.mxu0 0
      %1092 = vmatprep.subr.bf16.mxu0 0
      %1093 = vmatpush1.bf16.msra.mxu0 0
      %1094 = vmatprep.subr.bf16.mxu0 0
      %1095 = vmatpush1.bf16.msra.mxu0 0
      %1096 = vmatprep.subr.bf16.mxu0 0
      %1097 = vmatpush1.bf16.msra.mxu0 0
      %1098 = vmatprep.subr.bf16.mxu0 0
      %1099 = vmatpush1.bf16.msra.mxu0 0
      %1100 = vmatprep.subr.bf16.mxu0 0
      %1101 = vmatpush1.bf16.msra.mxu0 0
      %1102 = vmatprep.subr.bf16.mxu0 0
      %1103 = vmatpush1.bf16.msra.mxu0 0
      %1104 = vmatprep.subr.bf16.mxu0 0
      %1105 = vmatpush1.bf16.msra.mxu0 0
      %1106 = vmatprep.subr.bf16.mxu0 0
      %1107 = vmatpush1.bf16.msra.mxu0 0
      %1108 = vmatprep.subr.bf16.mxu0 0
      %1109 = vmatpush1.bf16.msra.mxu0 0
      %1110 = vmatprep.subr.bf16.mxu0 0
      %1111 = vmatpush1.bf16.msra.mxu0 0
      %1112 = vmatprep.subr.bf16.mxu0 0
      %1113 = vmatpush1.bf16.msra.mxu0 0
      %1114 = vmatprep.subr.bf16.mxu0 0
      %1115 = vmatpush1.bf16.msra.mxu0 0
      %1116 = vmatprep.mubr.bf16.mxu0 0
      %1117 = vmatmul.mubr.bf16.gmra.mrb[0].mxu0 %v1082
      %v1118 = vpop.f32.mrb[0].mxu0
      %v1119 = vadd.f32 0.0, %v1118
      %v1120 = vpop.f32.mrb[0].mxu0
      %v1121 = vpop.f32.mrb[0].mxu0
      %v1122 = vpop.f32.mrb[0].mxu0
      %1123 = vdwg.mxu0
      %v1124 = vpack.i.b16 %v762, %v762
      %v1125 = vlaneseq
      %v1126 = vshrl.u32 %v1125, 7
      %v1127 = vsub.s32 0, %v1126
      %v1128 = vrot.slane %v1124, %v1127
      %v1133 = vunpack.c.l.b16 %v645
      %v1134 = vunpack.c.l.b16 %v646
      %v1135 = vunpack.c.l.b16 %v647
      %v1136 = vunpack.c.l.b16 %v648
      %v1137 = vpack.c.b16 %v1134, %v1133
      %v1138 = vpack.c.b16 %v1136, %v1135
      %v1142 = vsel %vm541, %v1128, 0
      %1144 = vmatprep.subr.bf16.mxu0 0
      %1145 = vmatpush1.bf16.msra.mxu0 %v1137
      %1146 = vmatprep.subr.bf16.mxu0 0
      %1147 = vmatpush1.bf16.msra.mxu0 %v1138
      %1148 = vmatprep.subr.bf16.mxu0 0
      %1149 = vmatpush1.bf16.msra.mxu0 0
      %1150 = vmatprep.subr.bf16.mxu0 0
      %1151 = vmatpush1.bf16.msra.mxu0 0
      %1152 = vmatprep.subr.bf16.mxu0 0
      %1153 = vmatpush1.bf16.msra.mxu0 0
      %1154 = vmatprep.subr.bf16.mxu0 0
      %1155 = vmatpush1.bf16.msra.mxu0 0
      %1156 = vmatprep.subr.bf16.mxu0 0
      %1157 = vmatpush1.bf16.msra.mxu0 0
      %1158 = vmatprep.subr.bf16.mxu0 0
      %1159 = vmatpush1.bf16.msra.mxu0 0
      %1160 = vmatprep.subr.bf16.mxu0 0
      %1161 = vmatpush1.bf16.msra.mxu0 0
      %1162 = vmatprep.subr.bf16.mxu0 0
      %1163 = vmatpush1.bf16.msra.mxu0 0
      %1164 = vmatprep.subr.bf16.mxu0 0
      %1165 = vmatpush1.bf16.msra.mxu0 0
      %1166 = vmatprep.subr.bf16.mxu0 0
      %1167 = vmatpush1.bf16.msra.mxu0 0
      %1168 = vmatprep.subr.bf16.mxu0 0
      %1169 = vmatpush1.bf16.msra.mxu0 0
      %1170 = vmatprep.subr.bf16.mxu0 0
      %1171 = vmatpush1.bf16.msra.mxu0 0
      %1172 = vmatprep.subr.bf16.mxu0 0
      %1173 = vmatpush1.bf16.msra.mxu0 0
      %1174 = vmatprep.subr.bf16.mxu0 0
      %1175 = vmatpush1.bf16.msra.mxu0 0
      %1176 = vmatprep.mubr.bf16.mxu0 0
      %1177 = vmatmul.mubr.bf16.gmra.mrb[0].mxu0 %v1142
      %v1178 = vpop.f32.mrb[0].mxu0
      %v1179 = vadd.f32 0.0, %v1178
      %v1180 = vpop.f32.mrb[0].mxu0
      %v1181 = vpop.f32.mrb[0].mxu0
      %v1182 = vpop.f32.mrb[0].mxu0
      %1183 = vdwg.mxu0
      %v1184 = vpack.i.b16 %v763, %v763
      %v1185 = vlaneseq
      %v1186 = vshrl.u32 %v1185, 7
      %v1187 = vsub.s32 0, %v1186
      %v1188 = vrot.slane %v1184, %v1187
      %v1193 = vunpack.c.l.b16 %v649
      %v1194 = vunpack.c.l.b16 %v650
      %v1195 = vunpack.c.l.b16 %v651
      %v1196 = vunpack.c.l.b16 %v652
      %v1197 = vpack.c.b16 %v1194, %v1193
      %v1198 = vpack.c.b16 %v1196, %v1195
      %v1202 = vsel %vm541, %v1188, 0
      %1204 = vmatprep.subr.bf16.mxu0 0
      %1205 = vmatpush1.bf16.msra.mxu0 %v1197
      %1206 = vmatprep.subr.bf16.mxu0 0
      %1207 = vmatpush1.bf16.msra.mxu0 %v1198
      %1208 = vmatprep.subr.bf16.mxu0 0
      %1209 = vmatpush1.bf16.msra.mxu0 0
      %1210 = vmatprep.subr.bf16.mxu0 0
      %1211 = vmatpush1.bf16.msra.mxu0 0
      %1212 = vmatprep.subr.bf16.mxu0 0
      %1213 = vmatpush1.bf16.msra.mxu0 0
      %1214 = vmatprep.subr.bf16.mxu0 0
      %1215 = vmatpush1.bf16.msra.mxu0 0
      %1216 = vmatprep.subr.bf16.mxu0 0
      %1217 = vmatpush1.bf16.msra.mxu0 0
      %1218 = vmatprep.subr.bf16.mxu0 0
      %1219 = vmatpush1.bf16.msra.mxu0 0
      %1220 = vmatprep.subr.bf16.mxu0 0
      %1221 = vmatpush1.bf16.msra.mxu0 0
      %1222 = vmatprep.subr.bf16.mxu0 0
      %1223 = vmatpush1.bf16.msra.mxu0 0
      %1224 = vmatprep.subr.bf16.mxu0 0
      %1225 = vmatpush1.bf16.msra.mxu0 0
      %1226 = vmatprep.subr.bf16.mxu0 0
      %1227 = vmatpush1.bf16.msra.mxu0 0
      %1228 = vmatprep.subr.bf16.mxu0 0
      %1229 = vmatpush1.bf16.msra.mxu0 0
      %1230 = vmatprep.subr.bf16.mxu0 0
      %1231 = vmatpush1.bf16.msra.mxu0 0
      %1232 = vmatprep.subr.bf16.mxu0 0
      %1233 = vmatpush1.bf16.msra.mxu0 0
      %1234 = vmatprep.subr.bf16.mxu0 0
      %1235 = vmatpush1.bf16.msra.mxu0 0
      %1236 = vmatprep.mubr.bf16.mxu0 0
      %1237 = vmatmul.mubr.bf16.gmra.mrb[0].mxu0 %v1202
      %v1238 = vpop.f32.mrb[0].mxu0
      %v1239 = vadd.f32 0.0, %v1238
      %v1240 = vpop.f32.mrb[0].mxu0
      %v1241 = vpop.f32.mrb[0].mxu0
      %v1242 = vpop.f32.mrb[0].mxu0
      %1243 = vdwg.mxu0
      %v1245 = vlaneseq
      %v1246 = vshrl.u32 %v1245, 7
      %v1247 = vsub.s32 0, %v1246
      %v1248 = vrot.slane %v653, %v1247
      %v1250 = vadd.f32 %v725, %v1248
      %v1251 = vpack.c.bf16 %v1250, %v1250
      %1252 = vrot.lane.b32.xlu0 %v730, 96
      %v1253 = vpop.permute.xlu0 %1252
      %v1262 = vrot.slane %v879, 7
      %vm1263 = vcmask 1041409
      %v1264 = vsel %vm1263, %v1262, %v819
      %v1265 = vrot.slane %v939, 6
      %vm1266 = vcmask 1042434
      %v1267 = vsel %vm1266, %v1265, %v1264
      %v1268 = vrot.slane %v999, 5
      %vm1269 = vcmask 1043459
      %v1270 = vsel %vm1269, %v1268, %v1267
      %v1271 = vrot.slane %v1059, 4
      %vm1272 = vcmask 1044484
      %v1273 = vsel %vm1272, %v1271, %v1270
      %v1274 = vrot.slane %v1119, 3
      %vm1275 = vcmask 1045509
      %v1276 = vsel %vm1275, %v1274, %v1273
      %v1277 = vrot.slane %v1179, 2
      %vm1278 = vcmask 1046534
      %v1279 = vsel %vm1278, %v1277, %v1276
      %v1280 = vrot.slane %v1239, 1
      %vm1281 = vcmask 1047559
      %v1282 = vsel %vm1281, %v1280, %v1279
      %vm1284 = vcmask 130048
      %v1286 = vsel %vm1284, %v1251, 0
      %v1289 = vsel %vm1284, %v1253, 0
      %1291 = vmatprep.subr.bf16.mxu0 0
      %1292 = vmatpush1.bf16.xpose.msra.mxu0 %v1289
      %1293 = vmatprep.subr.bf16.mxu0 0
      %1294 = vmatpush1.bf16.xpose.msra.mxu0 0
      %1295 = vmatprep.subr.bf16.mxu0 0
      %1296 = vmatpush1.bf16.xpose.msra.mxu0 0
      %1297 = vmatprep.subr.bf16.mxu0 0
      %1298 = vmatpush1.bf16.xpose.msra.mxu0 0
      %1299 = vmatprep.subr.bf16.mxu0 0
      %1300 = vmatpush1.bf16.xpose.msra.mxu0 0
      %1301 = vmatprep.subr.bf16.mxu0 0
      %1302 = vmatpush1.bf16.xpose.msra.mxu0 0
      %1303 = vmatprep.subr.bf16.mxu0 0
      %1304 = vmatpush1.bf16.xpose.msra.mxu0 0
      %1305 = vmatprep.subr.bf16.mxu0 0
      %1306 = vmatpush1.bf16.xpose.msra.mxu0 0
      %1307 = vmatprep.subr.bf16.mxu0 0
      %1308 = vmatpush1.bf16.xpose.msra.mxu0 0
      %1309 = vmatprep.subr.bf16.mxu0 0
      %1310 = vmatpush1.bf16.xpose.msra.mxu0 0
      %1311 = vmatprep.subr.bf16.mxu0 0
      %1312 = vmatpush1.bf16.xpose.msra.mxu0 0
      %1313 = vmatprep.subr.bf16.mxu0 0
      %1314 = vmatpush1.bf16.xpose.msra.mxu0 0
      %1315 = vmatprep.subr.bf16.mxu0 0
      %1316 = vmatpush1.bf16.xpose.msra.mxu0 0
      %1317 = vmatprep.subr.bf16.mxu0 0
      %1318 = vmatpush1.bf16.xpose.msra.mxu0 0
      %1319 = vmatprep.subr.bf16.mxu0 0
      %1320 = vmatpush1.bf16.xpose.msra.mxu0 0
      %1321 = vmatprep.subr.bf16.mxu0 0
      %1322 = vmatpush1.bf16.xpose.msra.mxu0 0
      %1323 = vmatprep.mubr.bf16.mxu0 0
      %1324 = vmatmul.mubr.bf16.gmra.mrb[0].mxu0 %v1286
      %v1325 = vpop.f32.mrb[0].mxu0
      %v1326 = vadd.f32 %v1282, %v1325
      %v1327 = vpop.f32.mrb[0].mxu0
      %v1328 = vpop.f32.mrb[0].mxu0
      %v1329 = vpop.f32.mrb[0].mxu0
      %1330 = vdwg.mxu0
      %v1331 = vadd.f32 %v1326, %v654
      %vm1332 = vcmask 64512
      %v1333 = vsel %vm1332, %v1331, -inf
      %1334 = vmax.xlane.f32.xlu0 %v1333
      %v1335 = vpop.xlane.xlu0 %1334
      %v1336 = vsub.f32 %v1331, %v1335
      %v1337 = vmul.f32 %v1336, 1.442695
      %v1338 = vpow.pop %v1337
      %v1339 = vsel %vm1332, %v1338, 0.0
      %1340 = vadd.xlane.f32.xlu0 %v1339
      %v1341 = vpop.xlane.xlu0 %1340
      %v1342 = vrcp.pop %v1341
      %v1343 = vmul.f32 %v1338, %v1342
      %v1344 = vpack.c.bf16 %v1343, %v1343
      %1345 = vrot.lane.b32.xlu0 %v730, 64
      %v1346 = vpop.permute.xlu0 %1345
      %v1348 = vsel %vm1332, %v1344, 0
      %vm1350 = vcmask 1043456
      %v1352 = vsel %vm1350, %v1346, 0
      %1354 = vmatprep.subr.bf16.mxu0 0
      %1355 = vmatpush1.bf16.msra.mxu0 %v1352
      %1356 = vmatprep.subr.bf16.mxu0 0
      %1357 = vmatpush1.bf16.msra.mxu0 0
      %1358 = vmatprep.subr.bf16.mxu0 0
      %1359 = vmatpush1.bf16.msra.mxu0 0
      %1360 = vmatprep.subr.bf16.mxu0 0
      %1361 = vmatpush1.bf16.msra.mxu0 0
      %1362 = vmatprep.subr.bf16.mxu0 0
      %1363 = vmatpush1.bf16.msra.mxu0 0
      %1364 = vmatprep.subr.bf16.mxu0 0
      %1365 = vmatpush1.bf16.msra.mxu0 0
      %1366 = vmatprep.subr.bf16.mxu0 0
      %1367 = vmatpush1.bf16.msra.mxu0 0
      %1368 = vmatprep.subr.bf16.mxu0 0
      %1369 = vmatpush1.bf16.msra.mxu0 0
      %1370 = vmatprep.subr.bf16.mxu0 0
      %1371 = vmatpush1.bf16.msra.mxu0 0
      %1372 = vmatprep.subr.bf16.mxu0 0
      %1373 = vmatpush1.bf16.msra.mxu0 0
      %1374 = vmatprep.subr.bf16.mxu0 0
      %1375 = vmatpush1.bf16.msra.mxu0 0
      %1376 = vmatprep.subr.bf16.mxu0 0
      %1377 = vmatpush1.bf16.msra.mxu0 0
      %1378 = vmatprep.subr.bf16.mxu0 0
      %1379 = vmatpush1.bf16.msra.mxu0 0
      %1380 = vmatprep.subr.bf16.mxu0 0
      %1381 = vmatpush1.bf16.msra.mxu0 0
      %1382 = vmatprep.subr.bf16.mxu0 0
      %1383 = vmatpush1.bf16.msra.mxu0 0
      %1384 = vmatprep.subr.bf16.mxu0 0
      %1385 = vmatpush1.bf16.msra.mxu0 0
      %1386 = vmatprep.mubr.bf16.mxu0 0
      %1387 = vmatmul.mubr.bf16.gmra.mrb[0].mxu0 %v1348
      %v1388 = vpop.f32.mrb[0].mxu0
      %v1389 = vadd.f32 0.0, %v1388
      %v1390 = vpop.f32.mrb[0].mxu0
      %v1391 = vpop.f32.mrb[0].mxu0
      %v1392 = vpop.f32.mrb[0].mxu0
      %1393 = vdwg.mxu0
      %v1394 = vpack.c.bf16 %v1389, %v1389
      %1396 = vrot.lane.b32.xlu0 %v1251, 112
      %v1397 = vpop.permute.xlu0 %1396
      %1398 = vrot.lane.b32.xlu0 %v730, 80
      %v1399 = vpop.permute.xlu0 %1398
      %1400 = vrot.lane.b32.xlu0 %v1282, 120
      %v1401 = vpop.permute.xlu0 %1400
      %v1404 = vsel %vm1284, %v1397, 0
      %v1407 = vsel %vm1284, %v1399, 0
      %1409 = vmatprep.subr.bf16.mxu0 0
      %1410 = vmatpush1.bf16.xpose.msra.mxu0 %v1407
      %1411 = vmatprep.subr.bf16.mxu0 0
      %1412 = vmatpush1.bf16.xpose.msra.mxu0 0
      %1413 = vmatprep.subr.bf16.mxu0 0
      %1414 = vmatpush1.bf16.xpose.msra.mxu0 0
      %1415 = vmatprep.subr.bf16.mxu0 0
      %1416 = vmatpush1.bf16.xpose.msra.mxu0 0
      %1417 = vmatprep.subr.bf16.mxu0 0
      %1418 = vmatpush1.bf16.xpose.msra.mxu0 0
      %1419 = vmatprep.subr.bf16.mxu0 0
      %1420 = vmatpush1.bf16.xpose.msra.mxu0 0
      %1421 = vmatprep.subr.bf16.mxu0 0
      %1422 = vmatpush1.bf16.xpose.msra.mxu0 0
      %1423 = vmatprep.subr.bf16.mxu0 0
      %1424 = vmatpush1.bf16.xpose.msra.mxu0 0
      %1425 = vmatprep.subr.bf16.mxu0 0
      %1426 = vmatpush1.bf16.xpose.msra.mxu0 0
      %1427 = vmatprep.subr.bf16.mxu0 0
      %1428 = vmatpush1.bf16.xpose.msra.mxu0 0
      %1429 = vmatprep.subr.bf16.mxu0 0
      %1430 = vmatpush1.bf16.xpose.msra.mxu0 0
      %1431 = vmatprep.subr.bf16.mxu0 0
      %1432 = vmatpush1.bf16.xpose.msra.mxu0 0
      %1433 = vmatprep.subr.bf16.mxu0 0
      %1434 = vmatpush1.bf16.xpose.msra.mxu0 0
      %1435 = vmatprep.subr.bf16.mxu0 0
      %1436 = vmatpush1.bf16.xpose.msra.mxu0 0
      %1437 = vmatprep.subr.bf16.mxu0 0
      %1438 = vmatpush1.bf16.xpose.msra.mxu0 0
      %1439 = vmatprep.subr.bf16.mxu0 0
      %1440 = vmatpush1.bf16.xpose.msra.mxu0 0
      %1441 = vmatprep.mubr.bf16.mxu0 0
      %1442 = vmatmul.mubr.bf16.gmra.mrb[0].mxu0 %v1404
      %v1443 = vpop.f32.mrb[0].mxu0
      %v1444 = vadd.f32 %v1401, %v1443
      %v1445 = vpop.f32.mrb[0].mxu0
      %v1446 = vpop.f32.mrb[0].mxu0
      %v1447 = vpop.f32.mrb[0].mxu0
      %1448 = vdwg.mxu0
      %1450 = vrot.lane.b32.xlu0 %v654, 120
      %v1451 = vpop.permute.xlu0 %1450
      %v1453 = vadd.f32 %v1444, %v1451
      %v1454 = vsel %vm1332, %v1453, -inf
      %1455 = vmax.xlane.f32.xlu0 %v1454
      %v1456 = vpop.xlane.xlu0 %1455
      %v1457 = vsub.f32 %v1453, %v1456
      %v1458 = vmul.f32 %v1457, 1.442695
      %v1459 = vpow.pop %v1458
      %v1460 = vsel %vm1332, %v1459, 0.0
      %1461 = vadd.xlane.f32.xlu0 %v1460
      %v1462 = vpop.xlane.xlu0 %1461
      %v1463 = vrcp.pop %v1462
      %v1464 = vmul.f32 %v1459, %v1463
      %v1465 = vpack.c.bf16 %v1464, %v1464
      %1466 = vrot.lane.b32.xlu0 %v730, 48
      %v1467 = vpop.permute.xlu0 %1466
      %v1469 = vsel %vm1332, %v1465, 0
      %v1472 = vsel %vm1350, %v1467, 0
      %1474 = vmatprep.subr.bf16.mxu0 0
      %1475 = vmatpush1.bf16.msra.mxu0 %v1472
      %1476 = vmatprep.subr.bf16.mxu0 0
      %1477 = vmatpush1.bf16.msra.mxu0 0
      %1478 = vmatprep.subr.bf16.mxu0 0
      %1479 = vmatpush1.bf16.msra.mxu0 0
      %1480 = vmatprep.subr.bf16.mxu0 0
      %1481 = vmatpush1.bf16.msra.mxu0 0
      %1482 = vmatprep.subr.bf16.mxu0 0
      %1483 = vmatpush1.bf16.msra.mxu0 0
      %1484 = vmatprep.subr.bf16.mxu0 0
      %1485 = vmatpush1.bf16.msra.mxu0 0
      %1486 = vmatprep.subr.bf16.mxu0 0
      %1487 = vmatpush1.bf16.msra.mxu0 0
      %1488 = vmatprep.subr.bf16.mxu0 0
      %1489 = vmatpush1.bf16.msra.mxu0 0
      %1490 = vmatprep.subr.bf16.mxu0 0
      %1491 = vmatpush1.bf16.msra.mxu0 0
      %1492 = vmatprep.subr.bf16.mxu0 0
      %1493 = vmatpush1.bf16.msra.mxu0 0
      %1494 = vmatprep.subr.bf16.mxu0 0
      %1495 = vmatpush1.bf16.msra.mxu0 0
      %1496 = vmatprep.subr.bf16.mxu0 0
      %1497 = vmatpush1.bf16.msra.mxu0 0
      %1498 = vmatprep.subr.bf16.mxu0 0
      %1499 = vmatpush1.bf16.msra.mxu0 0
      %1500 = vmatprep.subr.bf16.mxu0 0
      %1501 = vmatpush1.bf16.msra.mxu0 0
      %1502 = vmatprep.subr.bf16.mxu0 0
      %1503 = vmatpush1.bf16.msra.mxu0 0
      %1504 = vmatprep.subr.bf16.mxu0 0
      %1505 = vmatpush1.bf16.msra.mxu0 0
      %1506 = vmatprep.mubr.bf16.mxu0 0
      %1507 = vmatmul.mubr.bf16.gmra.mrb[0].mxu0 %v1469
      %v1508 = vpop.f32.mrb[0].mxu0
      %v1509 = vadd.f32 0.0, %v1508
      %v1510 = vpop.f32.mrb[0].mxu0
      %v1511 = vpop.f32.mrb[0].mxu0
      %v1512 = vpop.f32.mrb[0].mxu0
      %1513 = vdwg.mxu0
      %v1514 = vpack.c.bf16 %v1509, %v1509
      %v1517 = vunpack.c.l.b16 %v673
      %v1518 = vunpack.c.l.b16 %v674
      %v1519 = vpack.c.b16 %v1518, %v1517
      %v1522 = vsel %vm1284, %v1514, 0
      %1524 = vmatprep.subr.bf16.mxu0 0
      %1525 = vmatpush1.bf16.msra.mxu0 %v1519
      %1526 = vmatprep.subr.bf16.mxu0 0
      %1527 = vmatpush1.bf16.msra.mxu0 0
      %1528 = vmatprep.subr.bf16.mxu0 0
      %1529 = vmatpush1.bf16.msra.mxu0 0
      %1530 = vmatprep.subr.bf16.mxu0 0
      %1531 = vmatpush1.bf16.msra.mxu0 0
      %1532 = vmatprep.subr.bf16.mxu0 0
      %1533 = vmatpush1.bf16.msra.mxu0 0
      %1534 = vmatprep.subr.bf16.mxu0 0
      %1535 = vmatpush1.bf16.msra.mxu0 0
      %1536 = vmatprep.subr.bf16.mxu0 0
      %1537 = vmatpush1.bf16.msra.mxu0 0
      %1538 = vmatprep.subr.bf16.mxu0 0
      %1539 = vmatpush1.bf16.msra.mxu0 0
      %1540 = vmatprep.subr.bf16.mxu0 0
      %1541 = vmatpush1.bf16.msra.mxu0 0
      %1542 = vmatprep.subr.bf16.mxu0 0
      %1543 = vmatpush1.bf16.msra.mxu0 0
      %1544 = vmatprep.subr.bf16.mxu0 0
      %1545 = vmatpush1.bf16.msra.mxu0 0
      %1546 = vmatprep.subr.bf16.mxu0 0
      %1547 = vmatpush1.bf16.msra.mxu0 0
      %1548 = vmatprep.subr.bf16.mxu0 0
      %1549 = vmatpush1.bf16.msra.mxu0 0
      %1550 = vmatprep.subr.bf16.mxu0 0
      %1551 = vmatpush1.bf16.msra.mxu0 0
      %1552 = vmatprep.subr.bf16.mxu0 0
      %1553 = vmatpush1.bf16.msra.mxu0 0
      %1554 = vmatprep.subr.bf16.mxu0 0
      %1555 = vmatpush1.bf16.msra.mxu0 0
      %1556 = vmatprep.mubr.bf16.mxu0 0
      %1557 = vmatmul.mubr.bf16.gmra.mrb[0].mxu0 %v1522
      %v1558 = vpop.f32.mrb[0].mxu0
      %v1559 = vadd.f32 0.0, %v1558
      %v1560 = vpop.f32.mrb[0].mxu0
      %v1561 = vpop.f32.mrb[0].mxu0
      %v1562 = vpop.f32.mrb[0].mxu0
      %1563 = vdwg.mxu0
      %v1566 = vunpack.c.l.b16 %v670
      %v1567 = vunpack.c.l.b16 %v671
      %v1568 = vpack.c.b16 %v1567, %v1566
      %v1571 = vsel %vm1284, %v1394, 0
      %1573 = vmatprep.subr.bf16.mxu0 0
      %1574 = vmatpush1.bf16.msra.mxu0 %v1568
      %1575 = vmatprep.subr.bf16.mxu0 0
      %1576 = vmatpush1.bf16.msra.mxu0 0
      %1577 = vmatprep.subr.bf16.mxu0 0
      %1578 = vmatpush1.bf16.msra.mxu0 0
      %1579 = vmatprep.subr.bf16.mxu0 0
      %1580 = vmatpush1.bf16.msra.mxu0 0
      %1581 = vmatprep.subr.bf16.mxu0 0
      %1582 = vmatpush1.bf16.msra.mxu0 0
      %1583 = vmatprep.subr.bf16.mxu0 0
      %1584 = vmatpush1.bf16.msra.mxu0 0
      %1585 = vmatprep.subr.bf16.mxu0 0
      %1586 = vmatpush1.bf16.msra.mxu0 0
      %1587 = vmatprep.subr.bf16.mxu0 0
      %1588 = vmatpush1.bf16.msra.mxu0 0
      %1589 = vmatprep.subr.bf16.mxu0 0
      %1590 = vmatpush1.bf16.msra.mxu0 0
      %1591 = vmatprep.subr.bf16.mxu0 0
      %1592 = vmatpush1.bf16.msra.mxu0 0
      %1593 = vmatprep.subr.bf16.mxu0 0
      %1594 = vmatpush1.bf16.msra.mxu0 0
      %1595 = vmatprep.subr.bf16.mxu0 0
      %1596 = vmatpush1.bf16.msra.mxu0 0
      %1597 = vmatprep.subr.bf16.mxu0 0
      %1598 = vmatpush1.bf16.msra.mxu0 0
      %1599 = vmatprep.subr.bf16.mxu0 0
      %1600 = vmatpush1.bf16.msra.mxu0 0
      %1601 = vmatprep.subr.bf16.mxu0 0
      %1602 = vmatpush1.bf16.msra.mxu0 0
      %1603 = vmatprep.subr.bf16.mxu0 0
      %1604 = vmatpush1.bf16.msra.mxu0 0
      %1605 = vmatprep.mubr.bf16.mxu0 0
      %1606 = vmatmul.mubr.bf16.gmra.mrb[0].mxu0 %v1571
      %v1607 = vpop.f32.mrb[0].mxu0
      %v1608 = vadd.f32 %v1559, %v1607
      %v1609 = vpop.f32.mrb[0].mxu0
      %v1610 = vpop.f32.mrb[0].mxu0
      %v1611 = vpop.f32.mrb[0].mxu0
      %1612 = vdwg.mxu0
      %v1614 = vlaneseq
      %v1615 = vshrl.u32 %v1614, 7
      %v1616 = vsub.s32 0, %v1615
      %v1617 = vrot.slane %v655, %v1616
      %v1619 = vadd.f32 %v1608, %v1617
      %v1620 = vadd.f32 %v1619, 0.0
      %v1621 = vsel %vm541, %v1620, 0.0
      %1622 = vadd.xlane.f32.xlu0 %v1621
      %v1623 = vpop.xlane.xlu0 %1622
      %v1624 = vrcp.pop 32.0
      %v1625 = vmul.f32 %v1623, %v1624
      %v1626 = vsub.f32 %v1620, %v1625
      %v1627 = vmul.f32 %v1626, %v1626
      %v1628 = vsel %vm541, %v1627, 0.0
      %1629 = vadd.xlane.f32.xlu0 %v1628
      %v1630 = vpop.xlane.xlu0 %1629
      %v1631 = vmul.f32 %v1630, %v1624
      %v1632 = vadd.f32 %v1631, 1e-05
      %v1633 = vrsqrt.pop %v1632
      %v1634 = vmul.f32 %v1626, %v1633
      %v1635 = vpack.c.bf16 %v1634, %v1634
      %v1637 = vlaneseq
      %v1638 = vshrl.u32 %v1637, 7
      %v1639 = vsub.s32 0, %v1638
      %v1640 = vrot.slane %v660, %v1639
      %v1646 = vunpack.c.l.b16 %v656
      %v1647 = vunpack.c.l.b16 %v657
      %v1648 = vunpack.c.l.b16 %v658
      %v1649 = vunpack.c.l.b16 %v659
      %v1650 = vpack.c.b16 %v1647, %v1646
      %v1651 = vpack.c.b16 %v1649, %v1648
      %v1655 = vsel %vm541, %v1635, 0
      %1657 = vmatprep.subr.bf16.mxu0 0
      %1658 = vmatpush1.bf16.msra.mxu0 %v1650
      %1659 = vmatprep.subr.bf16.mxu0 0
      %1660 = vmatpush1.bf16.msra.mxu0 %v1651
      %1661 = vmatprep.subr.bf16.mxu0 0
      %1662 = vmatpush1.bf16.msra.mxu0 0
      %1663 = vmatprep.subr.bf16.mxu0 0
      %1664 = vmatpush1.bf16.msra.mxu0 0
      %1665 = vmatprep.subr.bf16.mxu0 0
      %1666 = vmatpush1.bf16.msra.mxu0 0
      %1667 = vmatprep.subr.bf16.mxu0 0
      %1668 = vmatpush1.bf16.msra.mxu0 0
      %1669 = vmatprep.subr.bf16.mxu0 0
      %1670 = vmatpush1.bf16.msra.mxu0 0
      %1671 = vmatprep.subr.bf16.mxu0 0
      %1672 = vmatpush1.bf16.msra.mxu0 0
      %1673 = vmatprep.subr.bf16.mxu0 0
      %1674 = vmatpush1.bf16.msra.mxu0 0
      %1675 = vmatprep.subr.bf16.mxu0 0
      %1676 = vmatpush1.bf16.msra.mxu0 0
      %1677 = vmatprep.subr.bf16.mxu0 0
      %1678 = vmatpush1.bf16.msra.mxu0 0
      %1679 = vmatprep.subr.bf16.mxu0 0
      %1680 = vmatpush1.bf16.msra.mxu0 0
      %1681 = vmatprep.subr.bf16.mxu0 0
      %1682 = vmatpush1.bf16.msra.mxu0 0
      %1683 = vmatprep.subr.bf16.mxu0 0
      %1684 = vmatpush1.bf16.msra.mxu0 0
      %1685 = vmatprep.subr.bf16.mxu0 0
      %1686 = vmatpush1.bf16.msra.mxu0 0
      %1687 = vmatprep.subr.bf16.mxu0 0
      %1688 = vmatpush1.bf16.msra.mxu0 0
      %1689 = vmatprep.mubr.bf16.mxu0 0
      %1690 = vmatmul.mubr.bf16.gmra.mrb[0].mxu0 %v1655
      %v1691 = vpop.f32.mrb[0].mxu0
      %v1692 = vadd.f32 %v1640, %v1691
      %v1693 = vpop.f32.mrb[0].mxu0
      %v1694 = vpop.f32.mrb[0].mxu0
      %v1695 = vpop.f32.mrb[0].mxu0
      %1696 = vdwg.mxu0
      %v1697 = vmax.f32 %v1692, 0.0
      %v1698 = vpack.c.bf16 %v1697, %v1697
      %v1700 = vlaneseq
      %v1701 = vshrl.u32 %v1700, 7
      %v1702 = vsub.s32 0, %v1701
      %v1703 = vrot.slane %v669, %v1702
      %v1713 = vunpack.c.l.b16 %v661
      %v1714 = vunpack.c.l.b16 %v662
      %v1715 = vunpack.c.l.b16 %v663
      %v1716 = vunpack.c.l.b16 %v664
      %v1717 = vunpack.c.l.b16 %v665
      %v1718 = vunpack.c.l.b16 %v666
      %v1719 = vunpack.c.l.b16 %v667
      %v1720 = vunpack.c.l.b16 %v668
      %v1721 = vpack.c.b16 %v1714, %v1713
      %v1722 = vpack.c.b16 %v1716, %v1715
      %v1723 = vpack.c.b16 %v1718, %v1717
      %v1724 = vpack.c.b16 %v1720, %v1719
      %vm1729 = vcmask 523264
      %v1731 = vsel %vm1729, %v1698, 0
      %1733 = vmatprep.subr.bf16.mxu0 0
      %1734 = vmatpush1.bf16.msra.mxu0 %v1721
      %1735 = vmatprep.subr.bf16.mxu0 0
      %1736 = vmatpush1.bf16.msra.mxu0 %v1722
      %1737 = vmatprep.subr.bf16.mxu0 0
      %1738 = vmatpush1.bf16.msra.mxu0 %v1723
      %1739 = vmatprep.subr.bf16.mxu0 0
      %1740 = vmatpush1.bf16.msra.mxu0 %v1724
      %1741 = vmatprep.subr.bf16.mxu0 0
      %1742 = vmatpush1.bf16.msra.mxu0 0
      %1743 = vmatprep.subr.bf16.mxu0 0
      %1744 = vmatpush1.bf16.msra.mxu0 0
      %1745 = vmatprep.subr.bf16.mxu0 0
      %1746 = vmatpush1.bf16.msra.mxu0 0
      %1747 = vmatprep.subr.bf16.mxu0 0
      %1748 = vmatpush1.bf16.msra.mxu0 0
      %1749 = vmatprep.subr.bf16.mxu0 0
      %1750 = vmatpush1.bf16.msra.mxu0 0
      %1751 = vmatprep.subr.bf16.mxu0 0
      %1752 = vmatpush1.bf16.msra.mxu0 0
      %1753 = vmatprep.subr.bf16.mxu0 0
      %1754 = vmatpush1.bf16.msra.mxu0 0
      %1755 = vmatprep.subr.bf16.mxu0 0
      %1756 = vmatpush1.bf16.msra.mxu0 0
      %1757 = vmatprep.subr.bf16.mxu0 0
      %1758 = vmatpush1.bf16.msra.mxu0 0
      %1759 = vmatprep.subr.bf16.mxu0 0
      %1760 = vmatpush1.bf16.msra.mxu0 0
      %1761 = vmatprep.subr.bf16.mxu0 0
      %1762 = vmatpush1.bf16.msra.mxu0 0
      %1763 = vmatprep.subr.bf16.mxu0 0
      %1764 = vmatpush1.bf16.msra.mxu0 0
      %1765 = vmatprep.mubr.bf16.mxu0 0
      %1766 = vmatmul.mubr.bf16.gmra.mrb[0].mxu0 %v1731
      %v1767 = vpop.f32.mrb[0].mxu0
      %v1768 = vadd.f32 %v1703, %v1767
      %v1769 = vpop.f32.mrb[0].mxu0
      %v1770 = vpop.f32.mrb[0].mxu0
      %v1771 = vpop.f32.mrb[0].mxu0
      %1772 = vdwg.mxu0
      %v1773 = vadd.f32 %v1768, %v1634
      %v1774 = vsel %vm541, %v1773, 0.0
      %1775 = vadd.xlane.f32.xlu0 %v1774
      %v1776 = vpop.xlane.xlu0 %1775
      %v1777 = vmul.f32 %v1776, %v1624
      %v1778 = vsub.f32 %v1773, %v1777
      %v1779 = vmul.f32 %v1778, %v1778
      %v1780 = vsel %vm541, %v1779, 0.0
      %1781 = vadd.xlane.f32.xlu0 %v1780
      %v1782 = vpop.xlane.xlu0 %1781
      %v1783 = vmul.f32 %v1782, %v1624
      %v1784 = vadd.f32 %v1783, 1e-05
      %v1785 = vrsqrt.pop %v1784
      %v1786 = vmul.f32 %v1778, %v1785
      %v1787 = vpack.c.bf16 %v1786, %v1786
      %v1789 = vsel %vm541, %v1787, 0
      %1791 = vmatprep.subr.bf16.mxu0 0
      %1792 = vmatpush1.bf16.msra.mxu0 %v683
      %1793 = vmatprep.subr.bf16.mxu0 0
      %1794 = vmatpush1.bf16.msra.mxu0 %v684
      %1795 = vmatprep.subr.bf16.mxu0 0
      %1796 = vmatpush1.bf16.msra.mxu0 0
      %1797 = vmatprep.subr.bf16.mxu0 0
      %1798 = vmatpush1.bf16.msra.mxu0 0
      %1799 = vmatprep.subr.bf16.mxu0 0
      %1800 = vmatpush1.bf16.msra.mxu0 0
      %1801 = vmatprep.subr.bf16.mxu0 0
      %1802 = vmatpush1.bf16.msra.mxu0 0
      %1803 = vmatprep.subr.bf16.mxu0 0
      %1804 = vmatpush1.bf16.msra.mxu0 0
      %1805 = vmatprep.subr.bf16.mxu0 0
      %1806 = vmatpush1.bf16.msra.mxu0 0
      %1807 = vmatprep.subr.bf16.mxu0 0
      %1808 = vmatpush1.bf16.msra.mxu0 0
      %1809 = vmatprep.subr.bf16.mxu0 0
      %1810 = vmatpush1.bf16.msra.mxu0 0
      %1811 = vmatprep.subr.bf16.mxu0 0
      %1812 = vmatpush1.bf16.msra.mxu0 0
      %1813 = vmatprep.subr.bf16.mxu0 0
      %1814 = vmatpush1.bf16.msra.mxu0 0
      %1815 = vmatprep.subr.bf16.mxu0 0
      %1816 = vmatpush1.bf16.msra.mxu0 0
      %1817 = vmatprep.subr.bf16.mxu0 0
      %1818 = vmatpush1.bf16.msra.mxu0 0
      %1819 = vmatprep.subr.bf16.mxu0 0
      %1820 = vmatpush1.bf16.msra.mxu0 0
      %1821 = vmatprep.subr.bf16.mxu0 0
      %1822 = vmatpush1.bf16.msra.mxu0 0
      %1823 = vmatprep.mubr.bf16.mxu0 0
      %1824 = vmatmul.mubr.bf16.gmra.mrb[0].mxu0 %v1789
      %v1825 = vpop.f32.mrb[0].mxu0
      %v1826 = vadd.f32 %v616, %v1825
      %v1827 = vpop.f32.mrb[0].mxu0
      %v1828 = vpop.f32.mrb[0].mxu0
      %v1829 = vpop.f32.mrb[0].mxu0
      %1830 = vdwg.mxu0
      %v1831 = vpack.c.bf16 %v1826, %v1826
      %v1834 = vunpack.c.l.s4 1966171168
      %v1835 = vunpack.c.0.s8 %v1834
      %v1836 = vlaneseq
      %v1837 = vshrl.u32 %v1836, 7
      %v1838 = vsub.s32 %v1835, %v1837
      %v1839 = vrot.slane %v1831, %v1838
      %v1840 = vcombine.high %v1839, %v1839
      %v1842 = vunpack.c.l.s4 1966171168
      %v1843 = vunpack.c.0.s8 %v1842
      %v1844 = vlaneseq
      %v1845 = vshrl.u32 %v1844, 7
      %v1846 = vsub.s32 %v1843, %v1845
      %v1847 = vrot.slane %v1839, %v1846
      %v1849 = vunpack.c.l.s4 1966171168
      %v1850 = vunpack.c.0.s8 %v1849
      %v1851 = vlaneseq
      %v1852 = vshrl.u32 %v1851, 7
      %v1853 = vsub.s32 %v1850, %v1852
      %v1854 = vrot.slane %v1840, %v1853
      %v1855 = vcombine.high %v1847, %v1847
      %v1856 = vcombine.high %v1854, %v1854
      %v1857 = vunpack.i.l.s16 %v1847
      %v1858 = vunpack.i.h.s16 %v1847
      %v1859 = vunpack.i.l.s16 %v1854
      %v1860 = vunpack.i.h.s16 %v1854
      %v1861 = vunpack.i.l.s16 %v1855
      %v1862 = vunpack.i.h.s16 %v1855
      %v1863 = vunpack.i.l.s16 %v1856
      %v1864 = vunpack.i.h.s16 %v1856
      %v1865 = vpack.i.b16 %v1857, %v1857
      %v1866 = vlaneseq
      %v1867 = vshrl.u32 %v1866, 7
      %v1868 = vsub.s32 0, %v1867
      %v1869 = vrot.slane %v1865, %v1868
      %v1871 = vsel %vm541, %v1869, 0
      %1873 = vmatprep.subr.bf16.mxu0 0
      %1874 = vmatpush1.bf16.msra.mxu0 %v777
      %1875 = vmatprep.subr.bf16.mxu0 0
      %1876 = vmatpush1.bf16.msra.mxu0 %v778
      %1877 = vmatprep.subr.bf16.mxu0 0
      %1878 = vmatpush1.bf16.msra.mxu0 0
      %1879 = vmatprep.subr.bf16.mxu0 0
      %1880 = vmatpush1.bf16.msra.mxu0 0
      %1881 = vmatprep.subr.bf16.mxu0 0
      %1882 = vmatpush1.bf16.msra.mxu0 0
      %1883 = vmatprep.subr.bf16.mxu0 0
      %1884 = vmatpush1.bf16.msra.mxu0 0
      %1885 = vmatprep.subr.bf16.mxu0 0
      %1886 = vmatpush1.bf16.msra.mxu0 0
      %1887 = vmatprep.subr.bf16.mxu0 0
      %1888 = vmatpush1.bf16.msra.mxu0 0
      %1889 = vmatprep.subr.bf16.mxu0 0
      %1890 = vmatpush1.bf16.msra.mxu0 0
      %1891 = vmatprep.subr.bf16.mxu0 0
      %1892 = vmatpush1.bf16.msra.mxu0 0
      %1893 = vmatprep.subr.bf16.mxu0 0
      %1894 = vmatpush1.bf16.msra.mxu0 0
      %1895 = vmatprep.subr.bf16.mxu0 0
      %1896 = vmatpush1.bf16.msra.mxu0 0
      %1897 = vmatprep.subr.bf16.mxu0 0
      %1898 = vmatpush1.bf16.msra.mxu0 0
      %1899 = vmatprep.subr.bf16.mxu0 0
      %1900 = vmatpush1.bf16.msra.mxu0 0
      %1901 = vmatprep.subr.bf16.mxu0 0
      %1902 = vmatpush1.bf16.msra.mxu0 0
      %1903 = vmatprep.subr.bf16.mxu0 0
      %1904 = vmatpush1.bf16.msra.mxu0 0
      %1905 = vmatprep.mubr.bf16.mxu0 0
      %1906 = vmatmul.mubr.bf16.gmra.mrb[0].mxu0 %v1871
      %v1907 = vpop.f32.mrb[0].mxu0
      %v1908 = vadd.f32 0.0, %v1907
      %v1909 = vpop.f32.mrb[0].mxu0
      %v1910 = vpop.f32.mrb[0].mxu0
      %v1911 = vpop.f32.mrb[0].mxu0
      %1912 = vdwg.mxu0
      %v1913 = vpack.i.b16 %v1858, %v1858
      %v1914 = vlaneseq
      %v1915 = vshrl.u32 %v1914, 7
      %v1916 = vsub.s32 0, %v1915
      %v1917 = vrot.slane %v1913, %v1916
      %v1919 = vsel %vm541, %v1917, 0
      %1921 = vmatprep.subr.bf16.mxu0 0
      %1922 = vmatpush1.bf16.msra.mxu0 %v837
      %1923 = vmatprep.subr.bf16.mxu0 0
      %1924 = vmatpush1.bf16.msra.mxu0 %v838
      %1925 = vmatprep.subr.bf16.mxu0 0
      %1926 = vmatpush1.bf16.msra.mxu0 0
      %1927 = vmatprep.subr.bf16.mxu0 0
      %1928 = vmatpush1.bf16.msra.mxu0 0
      %1929 = vmatprep.subr.bf16.mxu0 0
      %1930 = vmatpush1.bf16.msra.mxu0 0
      %1931 = vmatprep.subr.bf16.mxu0 0
      %1932 = vmatpush1.bf16.msra.mxu0 0
      %1933 = vmatprep.subr.bf16.mxu0 0
      %1934 = vmatpush1.bf16.msra.mxu0 0
      %1935 = vmatprep.subr.bf16.mxu0 0
      %1936 = vmatpush1.bf16.msra.mxu0 0
      %1937 = vmatprep.subr.bf16.mxu0 0
      %1938 = vmatpush1.bf16.msra.mxu0 0
      %1939 = vmatprep.subr.bf16.mxu0 0
      %1940 = vmatpush1.bf16.msra.mxu0 0
      %1941 = vmatprep.subr.bf16.mxu0 0
      %1942 = vmatpush1.bf16.msra.mxu0 0
      %1943 = vmatprep.subr.bf16.mxu0 0
      %1944 = vmatpush1.bf16.msra.mxu0 0
      %1945 = vmatprep.subr.bf16.mxu0 0
      %1946 = vmatpush1.bf16.msra.mxu0 0
      %1947 = vmatprep.subr.bf16.mxu0 0
      %1948 = vmatpush1.bf16.msra.mxu0 0
      %1949 = vmatprep.subr.bf16.mxu0 0
      %1950 = vmatpush1.bf16.msra.mxu0 0
      %1951 = vmatprep.subr.bf16.mxu0 0
      %1952 = vmatpush1.bf16.msra.mxu0 0
      %1953 = vmatprep.mubr.bf16.mxu0 0
      %1954 = vmatmul.mubr.bf16.gmra.mrb[0].mxu0 %v1919
      %v1955 = vpop.f32.mrb[0].mxu0
      %v1956 = vadd.f32 0.0, %v1955
      %v1957 = vpop.f32.mrb[0].mxu0
      %v1958 = vpop.f32.mrb[0].mxu0
      %v1959 = vpop.f32.mrb[0].mxu0
      %1960 = vdwg.mxu0
      %v1961 = vpack.i.b16 %v1859, %v1859
      %v1962 = vlaneseq
      %v1963 = vshrl.u32 %v1962, 7
      %v1964 = vsub.s32 0, %v1963
      %v1965 = vrot.slane %v1961, %v1964
      %v1967 = vsel %vm541, %v1965, 0
      %1969 = vmatprep.subr.bf16.mxu0 0
      %1970 = vmatpush1.bf16.msra.mxu0 %v897
      %1971 = vmatprep.subr.bf16.mxu0 0
      %1972 = vmatpush1.bf16.msra.mxu0 %v898
      %1973 = vmatprep.subr.bf16.mxu0 0
      %1974 = vmatpush1.bf16.msra.mxu0 0
      %1975 = vmatprep.subr.bf16.mxu0 0
      %1976 = vmatpush1.bf16.msra.mxu0 0
      %1977 = vmatprep.subr.bf16.mxu0 0
      %1978 = vmatpush1.bf16.msra.mxu0 0
      %1979 = vmatprep.subr.bf16.mxu0 0
      %1980 = vmatpush1.bf16.msra.mxu0 0
      %1981 = vmatprep.subr.bf16.mxu0 0
      %1982 = vmatpush1.bf16.msra.mxu0 0
      %1983 = vmatprep.subr.bf16.mxu0 0
      %1984 = vmatpush1.bf16.msra.mxu0 0
      %1985 = vmatprep.subr.bf16.mxu0 0
      %1986 = vmatpush1.bf16.msra.mxu0 0
      %1987 = vmatprep.subr.bf16.mxu0 0
      %1988 = vmatpush1.bf16.msra.mxu0 0
      %1989 = vmatprep.subr.bf16.mxu0 0
      %1990 = vmatpush1.bf16.msra.mxu0 0
      %1991 = vmatprep.subr.bf16.mxu0 0
      %1992 = vmatpush1.bf16.msra.mxu0 0
      %1993 = vmatprep.subr.bf16.mxu0 0
      %1994 = vmatpush1.bf16.msra.mxu0 0
      %1995 = vmatprep.subr.bf16.mxu0 0
      %1996 = vmatpush1.bf16.msra.mxu0 0
      %1997 = vmatprep.subr.bf16.mxu0 0
      %1998 = vmatpush1.bf16.msra.mxu0 0
      %1999 = vmatprep.subr.bf16.mxu0 0
      %2000 = vmatpush1.bf16.msra.mxu0 0
      %2001 = vmatprep.mubr.bf16.mxu0 0
      %2002 = vmatmul.mubr.bf16.gmra.mrb[0].mxu0 %v1967
      %v2003 = vpop.f32.mrb[0].mxu0
      %v2004 = vadd.f32 0.0, %v2003
      %v2005 = vpop.f32.mrb[0].mxu0
      %v2006 = vpop.f32.mrb[0].mxu0
      %v2007 = vpop.f32.mrb[0].mxu0
      %2008 = vdwg.mxu0
      %v2009 = vpack.i.b16 %v1860, %v1860
      %v2010 = vlaneseq
      %v2011 = vshrl.u32 %v2010, 7
      %v2012 = vsub.s32 0, %v2011
      %v2013 = vrot.slane %v2009, %v2012
      %v2015 = vsel %vm541, %v2013, 0
      %2017 = vmatprep.subr.bf16.mxu0 0
      %2018 = vmatpush1.bf16.msra.mxu0 %v957
      %2019 = vmatprep.subr.bf16.mxu0 0
      %2020 = vmatpush1.bf16.msra.mxu0 %v958
      %2021 = vmatprep.subr.bf16.mxu0 0
      %2022 = vmatpush1.bf16.msra.mxu0 0
      %2023 = vmatprep.subr.bf16.mxu0 0
      %2024 = vmatpush1.bf16.msra.mxu0 0
      %2025 = vmatprep.subr.bf16.mxu0 0
      %2026 = vmatpush1.bf16.msra.mxu0 0
      %2027 = vmatprep.subr.bf16.mxu0 0
      %2028 = vmatpush1.bf16.msra.mxu0 0
      %2029 = vmatprep.subr.bf16.mxu0 0
      %2030 = vmatpush1.bf16.msra.mxu0 0
      %2031 = vmatprep.subr.bf16.mxu0 0
      %2032 = vmatpush1.bf16.msra.mxu0 0
      %2033 = vmatprep.subr.bf16.mxu0 0
      %2034 = vmatpush1.bf16.msra.mxu0 0
      %2035 = vmatprep.subr.bf16.mxu0 0
      %2036 = vmatpush1.bf16.msra.mxu0 0
      %2037 = vmatprep.subr.bf16.mxu0 0
      %2038 = vmatpush1.bf16.msra.mxu0 0
      %2039 = vmatprep.subr.bf16.mxu0 0
      %2040 = vmatpush1.bf16.msra.mxu0 0
      %2041 = vmatprep.subr.bf16.mxu0 0
      %2042 = vmatpush1.bf16.msra.mxu0 0
      %2043 = vmatprep.subr.bf16.mxu0 0
      %2044 = vmatpush1.bf16.msra.mxu0 0
      %2045 = vmatprep.subr.bf16.mxu0 0
      %2046 = vmatpush1.bf16.msra.mxu0 0
      %2047 = vmatprep.subr.bf16.mxu0 0
      %2048 = vmatpush1.bf16.msra.mxu0 0
      %2049 = vmatprep.mubr.bf16.mxu0 0
      %2050 = vmatmul.mubr.bf16.gmra.mrb[0].mxu0 %v2015
      %v2051 = vpop.f32.mrb[0].mxu0
      %v2052 = vadd.f32 0.0, %v2051
      %v2053 = vpop.f32.mrb[0].mxu0
      %v2054 = vpop.f32.mrb[0].mxu0
      %v2055 = vpop.f32.mrb[0].mxu0
      %2056 = vdwg.mxu0
      %v2057 = vpack.i.b16 %v1861, %v1861
      %v2058 = vlaneseq
      %v2059 = vshrl.u32 %v2058, 7
      %v2060 = vsub.s32 0, %v2059
      %v2061 = vrot.slane %v2057, %v2060
      %v2063 = vsel %vm541, %v2061, 0
      %2065 = vmatprep.subr.bf16.mxu0 0
      %2066 = vmatpush1.bf16.msra.mxu0 %v1017
      %2067 = vmatprep.subr.bf16.mxu0 0
      %2068 = vmatpush1.bf16.msra.mxu0 %v1018
      %2069 = vmatprep.subr.bf16.mxu0 0
      %2070 = vmatpush1.bf16.msra.mxu0 0
      %2071 = vmatprep.subr.bf16.mxu0 0
      %2072 = vmatpush1.bf16.msra.mxu0 0
      %2073 = vmatprep.subr.bf16.mxu0 0
      %2074 = vmatpush1.bf16.msra.mxu0 0
      %2075 = vmatprep.subr.bf16.mxu0 0
      %2076 = vmatpush1.bf16.msra.mxu0 0
      %2077 = vmatprep.subr.bf16.mxu0 0
      %2078 = vmatpush1.bf16.msra.mxu0 0
      %2079 = vmatprep.subr.bf16.mxu0 0
      %2080 = vmatpush1.bf16.msra.mxu0 0
      %2081 = vmatprep.subr.bf16.mxu0 0
      %2082 = vmatpush1.bf16.msra.mxu0 0
      %2083 = vmatprep.subr.bf16.mxu0 0
      %2084 = vmatpush1.bf16.msra.mxu0 0
      %2085 = vmatprep.subr.bf16.mxu0 0
      %2086 = vmatpush1.bf16.msra.mxu0 0
      %2087 = vmatprep.subr.bf16.mxu0 0
      %2088 = vmatpush1.bf16.msra.mxu0 0
      %2089 = vmatprep.subr.bf16.mxu0 0
      %2090 = vmatpush1.bf16.msra.mxu0 0
      %2091 = vmatprep.subr.bf16.mxu0 0
      %2092 = vmatpush1.bf16.msra.mxu0 0
      %2093 = vmatprep.subr.bf16.mxu0 0
      %2094 = vmatpush1.bf16.msra.mxu0 0
      %2095 = vmatprep.subr.bf16.mxu0 0
      %2096 = vmatpush1.bf16.msra.mxu0 0
      %2097 = vmatprep.mubr.bf16.mxu0 0
      %2098 = vmatmul.mubr.bf16.gmra.mrb[0].mxu0 %v2063
      %v2099 = vpop.f32.mrb[0].mxu0
      %v2100 = vadd.f32 0.0, %v2099
      %v2101 = vpop.f32.mrb[0].mxu0
      %v2102 = vpop.f32.mrb[0].mxu0
      %v2103 = vpop.f32.mrb[0].mxu0
      %2104 = vdwg.mxu0
      %v2105 = vpack.i.b16 %v1862, %v1862
      %v2106 = vlaneseq
      %v2107 = vshrl.u32 %v2106, 7
      %v2108 = vsub.s32 0, %v2107
      %v2109 = vrot.slane %v2105, %v2108
      %v2111 = vsel %vm541, %v2109, 0
      %2113 = vmatprep.subr.bf16.mxu0 0
      %2114 = vmatpush1.bf16.msra.mxu0 %v1077
      %2115 = vmatprep.subr.bf16.mxu0 0
      %2116 = vmatpush1.bf16.msra.mxu0 %v1078
      %2117 = vmatprep.subr.bf16.mxu0 0
      %2118 = vmatpush1.bf16.msra.mxu0 0
      %2119 = vmatprep.subr.bf16.mxu0 0
      %2120 = vmatpush1.bf16.msra.mxu0 0
      %2121 = vmatprep.subr.bf16.mxu0 0
      %2122 = vmatpush1.bf16.msra.mxu0 0
      %2123 = vmatprep.subr.bf16.mxu0 0
      %2124 = vmatpush1.bf16.msra.mxu0 0
      %2125 = vmatprep.subr.bf16.mxu0 0
      %2126 = vmatpush1.bf16.msra.mxu0 0
      %2127 = vmatprep.subr.bf16.mxu0 0
      %2128 = vmatpush1.bf16.msra.mxu0 0
      %2129 = vmatprep.subr.bf16.mxu0 0
      %2130 = vmatpush1.bf16.msra.mxu0 0
      %2131 = vmatprep.subr.bf16.mxu0 0
      %2132 = vmatpush1.bf16.msra.mxu0 0
      %2133 = vmatprep.subr.bf16.mxu0 0
      %2134 = vmatpush1.bf16.msra.mxu0 0
      %2135 = vmatprep.subr.bf16.mxu0 0
      %2136 = vmatpush1.bf16.msra.mxu0 0
      %2137 = vmatprep.subr.bf16.mxu0 0
      %2138 = vmatpush1.bf16.msra.mxu0 0
      %2139 = vmatprep.subr.bf16.mxu0 0
      %2140 = vmatpush1.bf16.msra.mxu0 0
      %2141 = vmatprep.subr.bf16.mxu0 0
      %2142 = vmatpush1.bf16.msra.mxu0 0
      %2143 = vmatprep.subr.bf16.mxu0 0
      %2144 = vmatpush1.bf16.msra.mxu0 0
      %2145 = vmatprep.mubr.bf16.mxu0 0
      %2146 = vmatmul.mubr.bf16.gmra.mrb[0].mxu0 %v2111
      %v2147 = vpop.f32.mrb[0].mxu0
      %v2148 = vadd.f32 0.0, %v2147
      %v2149 = vpop.f32.mrb[0].mxu0
      %v2150 = vpop.f32.mrb[0].mxu0
      %v2151 = vpop.f32.mrb[0].mxu0
      %2152 = vdwg.mxu0
      %v2153 = vpack.i.b16 %v1863, %v1863
      %v2154 = vlaneseq
      %v2155 = vshrl.u32 %v2154, 7
      %v2156 = vsub.s32 0, %v2155
      %v2157 = vrot.slane %v2153, %v2156
      %v2159 = vsel %vm541, %v2157, 0
      %2161 = vmatprep.subr.bf16.mxu0 0
      %2162 = vmatpush1.bf16.msra.mxu0 %v1137
      %2163 = vmatprep.subr.bf16.mxu0 0
      %2164 = vmatpush1.bf16.msra.mxu0 %v1138
      %2165 = vmatprep.subr.bf16.mxu0 0
      %2166 = vmatpush1.bf16.msra.mxu0 0
      %2167 = vmatprep.subr.bf16.mxu0 0
      %2168 = vmatpush1.bf16.msra.mxu0 0
      %2169 = vmatprep.subr.bf16.mxu0 0
      %2170 = vmatpush1.bf16.msra.mxu0 0
      %2171 = vmatprep.subr.bf16.mxu0 0
      %2172 = vmatpush1.bf16.msra.mxu0 0
      %2173 = vmatprep.subr.bf16.mxu0 0
      %2174 = vmatpush1.bf16.msra.mxu0 0
      %2175 = vmatprep.subr.bf16.mxu0 0
      %2176 = vmatpush1.bf16.msra.mxu0 0
      %2177 = vmatprep.subr.bf16.mxu0 0
      %2178 = vmatpush1.bf16.msra.mxu0 0
      %2179 = vmatprep.subr.bf16.mxu0 0
      %2180 = vmatpush1.bf16.msra.mxu0 0
      %2181 = vmatprep.subr.bf16.mxu0 0
      %2182 = vmatpush1.bf16.msra.mxu0 0
      %2183 = vmatprep.subr.bf16.mxu0 0
      %2184 = vmatpush1.bf16.msra.mxu0 0
      %2185 = vmatprep.subr.bf16.mxu0 0
      %2186 = vmatpush1.bf16.msra.mxu0 0
      %2187 = vmatprep.subr.bf16.mxu0 0
      %2188 = vmatpush1.bf16.msra.mxu0 0
      %2189 = vmatprep.subr.bf16.mxu0 0
      %2190 = vmatpush1.bf16.msra.mxu0 0
      %2191 = vmatprep.subr.bf16.mxu0 0
      %2192 = vmatpush1.bf16.msra.mxu0 0
      %2193 = vmatprep.mubr.bf16.mxu0 0
      %2194 = vmatmul.mubr.bf16.gmra.mrb[0].mxu0 %v2159
      %v2195 = vpop.f32.mrb[0].mxu0
      %v2196 = vadd.f32 0.0, %v2195
      %v2197 = vpop.f32.mrb[0].mxu0
      %v2198 = vpop.f32.mrb[0].mxu0
      %v2199 = vpop.f32.mrb[0].mxu0
      %2200 = vdwg.mxu0
      %v2201 = vpack.i.b16 %v1864, %v1864
      %v2202 = vlaneseq
      %v2203 = vshrl.u32 %v2202, 7
      %v2204 = vsub.s32 0, %v2203
      %v2205 = vrot.slane %v2201, %v2204
      %v2207 = vsel %vm541, %v2205, 0
      %2209 = vmatprep.subr.bf16.mxu0 0
      %2210 = vmatpush1.bf16.msra.mxu0 %v1197
      %2211 = vmatprep.subr.bf16.mxu0 0
      %2212 = vmatpush1.bf16.msra.mxu0 %v1198
      %2213 = vmatprep.subr.bf16.mxu0 0
      %2214 = vmatpush1.bf16.msra.mxu0 0
      %2215 = vmatprep.subr.bf16.mxu0 0
      %2216 = vmatpush1.bf16.msra.mxu0 0
      %2217 = vmatprep.subr.bf16.mxu0 0
      %2218 = vmatpush1.bf16.msra.mxu0 0
      %2219 = vmatprep.subr.bf16.mxu0 0
      %2220 = vmatpush1.bf16.msra.mxu0 0
      %2221 = vmatprep.subr.bf16.mxu0 0
      %2222 = vmatpush1.bf16.msra.mxu0 0
      %2223 = vmatprep.subr.bf16.mxu0 0
      %2224 = vmatpush1.bf16.msra.mxu0 0
      %2225 = vmatprep.subr.bf16.mxu0 0
      %2226 = vmatpush1.bf16.msra.mxu0 0
      %2227 = vmatprep.subr.bf16.mxu0 0
      %2228 = vmatpush1.bf16.msra.mxu0 0
      %2229 = vmatprep.subr.bf16.mxu0 0
      %2230 = vmatpush1.bf16.msra.mxu0 0
      %2231 = vmatprep.subr.bf16.mxu0 0
      %2232 = vmatpush1.bf16.msra.mxu0 0
      %2233 = vmatprep.subr.bf16.mxu0 0
      %2234 = vmatpush1.bf16.msra.mxu0 0
      %2235 = vmatprep.subr.bf16.mxu0 0
      %2236 = vmatpush1.bf16.msra.mxu0 0
      %2237 = vmatprep.subr.bf16.mxu0 0
      %2238 = vmatpush1.bf16.msra.mxu0 0
      %2239 = vmatprep.subr.bf16.mxu0 0
      %2240 = vmatpush1.bf16.msra.mxu0 0
      %2241 = vmatprep.mubr.bf16.mxu0 0
      %2242 = vmatmul.mubr.bf16.gmra.mrb[0].mxu0 %v2207
      %v2243 = vpop.f32.mrb[0].mxu0
      %v2244 = vadd.f32 0.0, %v2243
      %v2245 = vpop.f32.mrb[0].mxu0
      %v2246 = vpop.f32.mrb[0].mxu0
      %v2247 = vpop.f32.mrb[0].mxu0
      %2248 = vdwg.mxu0
      %v2249 = vadd.f32 %v1826, %v1248
      %v2250 = vpack.c.bf16 %v2249, %v2249
      %2251 = vrot.lane.b32.xlu0 %v1831, 96
      %v2252 = vpop.permute.xlu0 %2251
      %v2261 = vrot.slane %v1956, 7
      %v2262 = vsel %vm1263, %v2261, %v1908
      %v2263 = vrot.slane %v2004, 6
      %v2264 = vsel %vm1266, %v2263, %v2262
      %v2265 = vrot.slane %v2052, 5
      %v2266 = vsel %vm1269, %v2265, %v2264
      %v2267 = vrot.slane %v2100, 4
      %v2268 = vsel %vm1272, %v2267, %v2266
      %v2269 = vrot.slane %v2148, 3
      %v2270 = vsel %vm1275, %v2269, %v2268
      %v2271 = vrot.slane %v2196, 2
      %v2272 = vsel %vm1278, %v2271, %v2270
      %v2273 = vrot.slane %v2244, 1
      %v2274 = vsel %vm1281, %v2273, %v2272
      %v2277 = vsel %vm1284, %v2250, 0
      %v2280 = vsel %vm1284, %v2252, 0
      %2282 = vmatprep.subr.bf16.mxu0 0
      %2283 = vmatpush1.bf16.xpose.msra.mxu0 %v2280
      %2284 = vmatprep.subr.bf16.mxu0 0
      %2285 = vmatpush1.bf16.xpose.msra.mxu0 0
      %2286 = vmatprep.subr.bf16.mxu0 0
      %2287 = vmatpush1.bf16.xpose.msra.mxu0 0
      %2288 = vmatprep.subr.bf16.mxu0 0
      %2289 = vmatpush1.bf16.xpose.msra.mxu0 0
      %2290 = vmatprep.subr.bf16.mxu0 0
      %2291 = vmatpush1.bf16.xpose.msra.mxu0 0
      %2292 = vmatprep.subr.bf16.mxu0 0
      %2293 = vmatpush1.bf16.xpose.msra.mxu0 0
      %2294 = vmatprep.subr.bf16.mxu0 0
      %2295 = vmatpush1.bf16.xpose.msra.mxu0 0
      %2296 = vmatprep.subr.bf16.mxu0 0
      %2297 = vmatpush1.bf16.xpose.msra.mxu0 0
      %2298 = vmatprep.subr.bf16.mxu0 0
      %2299 = vmatpush1.bf16.xpose.msra.mxu0 0
      %2300 = vmatprep.subr.bf16.mxu0 0
      %2301 = vmatpush1.bf16.xpose.msra.mxu0 0
      %2302 = vmatprep.subr.bf16.mxu0 0
      %2303 = vmatpush1.bf16.xpose.msra.mxu0 0
      %2304 = vmatprep.subr.bf16.mxu0 0
      %2305 = vmatpush1.bf16.xpose.msra.mxu0 0
      %2306 = vmatprep.subr.bf16.mxu0 0
      %2307 = vmatpush1.bf16.xpose.msra.mxu0 0
      %2308 = vmatprep.subr.bf16.mxu0 0
      %2309 = vmatpush1.bf16.xpose.msra.mxu0 0
      %2310 = vmatprep.subr.bf16.mxu0 0
      %2311 = vmatpush1.bf16.xpose.msra.mxu0 0
      %2312 = vmatprep.subr.bf16.mxu0 0
      %2313 = vmatpush1.bf16.xpose.msra.mxu0 0
      %2314 = vmatprep.mubr.bf16.mxu0 0
      %2315 = vmatmul.mubr.bf16.gmra.mrb[0].mxu0 %v2277
      %v2316 = vpop.f32.mrb[0].mxu0
      %v2317 = vadd.f32 %v2274, %v2316
      %v2318 = vpop.f32.mrb[0].mxu0
      %v2319 = vpop.f32.mrb[0].mxu0
      %v2320 = vpop.f32.mrb[0].mxu0
      %2321 = vdwg.mxu0
      %v2322 = vadd.f32 %v2317, %v654
      %v2323 = vsel %vm1332, %v2322, -inf
      %2324 = vmax.xlane.f32.xlu0 %v2323
      %v2325 = vpop.xlane.xlu0 %2324
      %v2326 = vsub.f32 %v2322, %v2325
      %v2327 = vmul.f32 %v2326, 1.442695
      %v2328 = vpow.pop %v2327
      %v2329 = vsel %vm1332, %v2328, 0.0
      %2330 = vadd.xlane.f32.xlu0 %v2329
      %v2331 = vpop.xlane.xlu0 %2330
      %v2332 = vrcp.pop %v2331
      %v2333 = vmul.f32 %v2328, %v2332
      %v2334 = vpack.c.bf16 %v2333, %v2333
      %2335 = vrot.lane.b32.xlu0 %v1831, 64
      %v2336 = vpop.permute.xlu0 %2335
      %v2338 = vsel %vm1332, %v2334, 0
      %v2341 = vsel %vm1350, %v2336, 0
      %2343 = vmatprep.subr.bf16.mxu0 0
      %2344 = vmatpush1.bf16.msra.mxu0 %v2341
      %2345 = vmatprep.subr.bf16.mxu0 0
      %2346 = vmatpush1.bf16.msra.mxu0 0
      %2347 = vmatprep.subr.bf16.mxu0 0
      %2348 = vmatpush1.bf16.msra.mxu0 0
      %2349 = vmatprep.subr.bf16.mxu0 0
      %2350 = vmatpush1.bf16.msra.mxu0 0
      %2351 = vmatprep.subr.bf16.mxu0 0
      %2352 = vmatpush1.bf16.msra.mxu0 0
      %2353 = vmatprep.subr.bf16.mxu0 0
      %2354 = vmatpush1.bf16.msra.mxu0 0
      %2355 = vmatprep.subr.bf16.mxu0 0
      %2356 = vmatpush1.bf16.msra.mxu0 0
      %2357 = vmatprep.subr.bf16.mxu0 0
      %2358 = vmatpush1.bf16.msra.mxu0 0
      %2359 = vmatprep.subr.bf16.mxu0 0
      %2360 = vmatpush1.bf16.msra.mxu0 0
      %2361 = vmatprep.subr.bf16.mxu0 0
      %2362 = vmatpush1.bf16.msra.mxu0 0
      %2363 = vmatprep.subr.bf16.mxu0 0
      %2364 = vmatpush1.bf16.msra.mxu0 0
      %2365 = vmatprep.subr.bf16.mxu0 0
      %2366 = vmatpush1.bf16.msra.mxu0 0
      %2367 = vmatprep.subr.bf16.mxu0 0
      %2368 = vmatpush1.bf16.msra.mxu0 0
      %2369 = vmatprep.subr.bf16.mxu0 0
      %2370 = vmatpush1.bf16.msra.mxu0 0
      %2371 = vmatprep.subr.bf16.mxu0 0
      %2372 = vmatpush1.bf16.msra.mxu0 0
      %2373 = vmatprep.subr.bf16.mxu0 0
      %2374 = vmatpush1.bf16.msra.mxu0 0
      %2375 = vmatprep.mubr.bf16.mxu0 0
      %2376 = vmatmul.mubr.bf16.gmra.mrb[0].mxu0 %v2338
      %v2377 = vpop.f32.mrb[0].mxu0
      %v2378 = vadd.f32 0.0, %v2377
      %v2379 = vpop.f32.mrb[0].mxu0
      %v2380 = vpop.f32.mrb[0].mxu0
      %v2381 = vpop.f32.mrb[0].mxu0
      %2382 = vdwg.mxu0
      %v2383 = vpack.c.bf16 %v2378, %v2378
      %2385 = vrot.lane.b32.xlu0 %v2250, 112
      %v2386 = vpop.permute.xlu0 %2385
      %2387 = vrot.lane.b32.xlu0 %v1831, 80
      %v2388 = vpop.permute.xlu0 %2387
      %2389 = vrot.lane.b32.xlu0 %v2274, 120
      %v2390 = vpop.permute.xlu0 %2389
      %v2393 = vsel %vm1284, %v2386, 0
      %v2396 = vsel %vm1284, %v2388, 0
      %2398 = vmatprep.subr.bf16.mxu0 0
      %2399 = vmatpush1.bf16.xpose.msra.mxu0 %v2396
      %2400 = vmatprep.subr.bf16.mxu0 0
      %2401 = vmatpush1.bf16.xpose.msra.mxu0 0
      %2402 = vmatprep.subr.bf16.mxu0 0
      %2403 = vmatpush1.bf16.xpose.msra.mxu0 0
      %2404 = vmatprep.subr.bf16.mxu0 0
      %2405 = vmatpush1.bf16.xpose.msra.mxu0 0
      %2406 = vmatprep.subr.bf16.mxu0 0
      %2407 = vmatpush1.bf16.xpose.msra.mxu0 0
      %2408 = vmatprep.subr.bf16.mxu0 0
      %2409 = vmatpush1.bf16.xpose.msra.mxu0 0
      %2410 = vmatprep.subr.bf16.mxu0 0
      %2411 = vmatpush1.bf16.xpose.msra.mxu0 0
      %2412 = vmatprep.subr.bf16.mxu0 0
      %2413 = vmatpush1.bf16.xpose.msra.mxu0 0
      %2414 = vmatprep.subr.bf16.mxu0 0
      %2415 = vmatpush1.bf16.xpose.msra.mxu0 0
      %2416 = vmatprep.subr.bf16.mxu0 0
      %2417 = vmatpush1.bf16.xpose.msra.mxu0 0
      %2418 = vmatprep.subr.bf16.mxu0 0
      %2419 = vmatpush1.bf16.xpose.msra.mxu0 0
      %2420 = vmatprep.subr.bf16.mxu0 0
      %2421 = vmatpush1.bf16.xpose.msra.mxu0 0
      %2422 = vmatprep.subr.bf16.mxu0 0
      %2423 = vmatpush1.bf16.xpose.msra.mxu0 0
      %2424 = vmatprep.subr.bf16.mxu0 0
      %2425 = vmatpush1.bf16.xpose.msra.mxu0 0
      %2426 = vmatprep.subr.bf16.mxu0 0
      %2427 = vmatpush1.bf16.xpose.msra.mxu0 0
      %2428 = vmatprep.subr.bf16.mxu0 0
      %2429 = vmatpush1.bf16.xpose.msra.mxu0 0
      %2430 = vmatprep.mubr.bf16.mxu0 0
      %2431 = vmatmul.mubr.bf16.gmra.mrb[0].mxu0 %v2393
      %v2432 = vpop.f32.mrb[0].mxu0
      %v2433 = vadd.f32 %v2390, %v2432
      %v2434 = vpop.f32.mrb[0].mxu0
      %v2435 = vpop.f32.mrb[0].mxu0
      %v2436 = vpop.f32.mrb[0].mxu0
      %2437 = vdwg.mxu0
      %v2438 = vadd.f32 %v2433, %v1451
      %v2439 = vsel %vm1332, %v2438, -inf
      %2440 = vmax.xlane.f32.xlu0 %v2439
      %v2441 = vpop.xlane.xlu0 %2440
      %v2442 = vsub.f32 %v2438, %v2441
      %v2443 = vmul.f32 %v2442, 1.442695
      %v2444 = vpow.pop %v2443
      %v2445 = vsel %vm1332, %v2444, 0.0
      %2446 = vadd.xlane.f32.xlu0 %v2445
      %v2447 = vpop.xlane.xlu0 %2446
      %v2448 = vrcp.pop %v2447
      %v2449 = vmul.f32 %v2444, %v2448
      %v2450 = vpack.c.bf16 %v2449, %v2449
      %2451 = vrot.lane.b32.xlu0 %v1831, 48
      %v2452 = vpop.permute.xlu0 %2451
      %v2454 = vsel %vm1332, %v2450, 0
      %v2457 = vsel %vm1350, %v2452, 0
      %2459 = vmatprep.subr.bf16.mxu0 0
      %2460 = vmatpush1.bf16.msra.mxu0 %v2457
      %2461 = vmatprep.subr.bf16.mxu0 0
      %2462 = vmatpush1.bf16.msra.mxu0 0
      %2463 = vmatprep.subr.bf16.mxu0 0
      %2464 = vmatpush1.bf16.msra.mxu0 0
      %2465 = vmatprep.subr.bf16.mxu0 0
      %2466 = vmatpush1.bf16.msra.mxu0 0
      %2467 = vmatprep.subr.bf16.mxu0 0
      %2468 = vmatpush1.bf16.msra.mxu0 0
      %2469 = vmatprep.subr.bf16.mxu0 0
      %2470 = vmatpush1.bf16.msra.mxu0 0
      %2471 = vmatprep.subr.bf16.mxu0 0
      %2472 = vmatpush1.bf16.msra.mxu0 0
      %2473 = vmatprep.subr.bf16.mxu0 0
      %2474 = vmatpush1.bf16.msra.mxu0 0
      %2475 = vmatprep.subr.bf16.mxu0 0
      %2476 = vmatpush1.bf16.msra.mxu0 0
      %2477 = vmatprep.subr.bf16.mxu0 0
      %2478 = vmatpush1.bf16.msra.mxu0 0
      %2479 = vmatprep.subr.bf16.mxu0 0
      %2480 = vmatpush1.bf16.msra.mxu0 0
      %2481 = vmatprep.subr.bf16.mxu0 0
      %2482 = vmatpush1.bf16.msra.mxu0 0
      %2483 = vmatprep.subr.bf16.mxu0 0
      %2484 = vmatpush1.bf16.msra.mxu0 0
      %2485 = vmatprep.subr.bf16.mxu0 0
      %2486 = vmatpush1.bf16.msra.mxu0 0
      %2487 = vmatprep.subr.bf16.mxu0 0
      %2488 = vmatpush1.bf16.msra.mxu0 0
      %2489 = vmatprep.subr.bf16.mxu0 0
      %2490 = vmatpush1.bf16.msra.mxu0 0
      %2491 = vmatprep.mubr.bf16.mxu0 0
      %2492 = vmatmul.mubr.bf16.gmra.mrb[0].mxu0 %v2454
      %v2493 = vpop.f32.mrb[0].mxu0
      %v2494 = vadd.f32 0.0, %v2493
      %v2495 = vpop.f32.mrb[0].mxu0
      %v2496 = vpop.f32.mrb[0].mxu0
      %v2497 = vpop.f32.mrb[0].mxu0
      %2498 = vdwg.mxu0
      %v2499 = vpack.c.bf16 %v2494, %v2494
      %v2501 = vsel %vm1284, %v2499, 0
      %2503 = vmatprep.subr.bf16.mxu0 0
      %2504 = vmatpush1.bf16.msra.mxu0 %v1519
      %2505 = vmatprep.subr.bf16.mxu0 0
      %2506 = vmatpush1.bf16.msra.mxu0 0
      %2507 = vmatprep.subr.bf16.mxu0 0
      %2508 = vmatpush1.bf16.msra.mxu0 0
      %2509 = vmatprep.subr.bf16.mxu0 0
      %2510 = vmatpush1.bf16.msra.mxu0 0
      %2511 = vmatprep.subr.bf16.mxu0 0
      %2512 = vmatpush1.bf16.msra.mxu0 0
      %2513 = vmatprep.subr.bf16.mxu0 0
      %2514 = vmatpush1.bf16.msra.mxu0 0
      %2515 = vmatprep.subr.bf16.mxu0 0
      %2516 = vmatpush1.bf16.msra.mxu0 0
      %2517 = vmatprep.subr.bf16.mxu0 0
      %2518 = vmatpush1.bf16.msra.mxu0 0
      %2519 = vmatprep.subr.bf16.mxu0 0
      %2520 = vmatpush1.bf16.msra.mxu0 0
      %2521 = vmatprep.subr.bf16.mxu0 0
      %2522 = vmatpush1.bf16.msra.mxu0 0
      %2523 = vmatprep.subr.bf16.mxu0 0
      %2524 = vmatpush1.bf16.msra.mxu0 0
      %2525 = vmatprep.subr.bf16.mxu0 0
      %2526 = vmatpush1.bf16.msra.mxu0 0
      %2527 = vmatprep.subr.bf16.mxu0 0
      %2528 = vmatpush1.bf16.msra.mxu0 0
      %2529 = vmatprep.subr.bf16.mxu0 0
      %2530 = vmatpush1.bf16.msra.mxu0 0
      %2531 = vmatprep.subr.bf16.mxu0 0
      %2532 = vmatpush1.bf16.msra.mxu0 0
      %2533 = vmatprep.subr.bf16.mxu0 0
      %2534 = vmatpush1.bf16.msra.mxu0 0
      %2535 = vmatprep.mubr.bf16.mxu0 0
      %2536 = vmatmul.mubr.bf16.gmra.mrb[0].mxu0 %v2501
      %v2537 = vpop.f32.mrb[0].mxu0
      %v2538 = vadd.f32 0.0, %v2537
      %v2539 = vpop.f32.mrb[0].mxu0
      %v2540 = vpop.f32.mrb[0].mxu0
      %v2541 = vpop.f32.mrb[0].mxu0
      %2542 = vdwg.mxu0
      %v2544 = vsel %vm1284, %v2383, 0
      %2546 = vmatprep.subr.bf16.mxu0 0
      %2547 = vmatpush1.bf16.msra.mxu0 %v1568
      %2548 = vmatprep.subr.bf16.mxu0 0
      %2549 = vmatpush1.bf16.msra.mxu0 0
      %2550 = vmatprep.subr.bf16.mxu0 0
      %2551 = vmatpush1.bf16.msra.mxu0 0
      %2552 = vmatprep.subr.bf16.mxu0 0
      %2553 = vmatpush1.bf16.msra.mxu0 0
      %2554 = vmatprep.subr.bf16.mxu0 0
      %2555 = vmatpush1.bf16.msra.mxu0 0
      %2556 = vmatprep.subr.bf16.mxu0 0
      %2557 = vmatpush1.bf16.msra.mxu0 0
      %2558 = vmatprep.subr.bf16.mxu0 0
      %2559 = vmatpush1.bf16.msra.mxu0 0
      %2560 = vmatprep.subr.bf16.mxu0 0
      %2561 = vmatpush1.bf16.msra.mxu0 0
      %2562 = vmatprep.subr.bf16.mxu0 0
      %2563 = vmatpush1.bf16.msra.mxu0 0
      %2564 = vmatprep.subr.bf16.mxu0 0
      %2565 = vmatpush1.bf16.msra.mxu0 0
      %2566 = vmatprep.subr.bf16.mxu0 0
      %2567 = vmatpush1.bf16.msra.mxu0 0
      %2568 = vmatprep.subr.bf16.mxu0 0
      %2569 = vmatpush1.bf16.msra.mxu0 0
      %2570 = vmatprep.subr.bf16.mxu0 0
      %2571 = vmatpush1.bf16.msra.mxu0 0
      %2572 = vmatprep.subr.bf16.mxu0 0
      %2573 = vmatpush1.bf16.msra.mxu0 0
      %2574 = vmatprep.subr.bf16.mxu0 0
      %2575 = vmatpush1.bf16.msra.mxu0 0
      %2576 = vmatprep.subr.bf16.mxu0 0
      %2577 = vmatpush1.bf16.msra.mxu0 0
      %2578 = vmatprep.mubr.bf16.mxu0 0
      %2579 = vmatmul.mubr.bf16.gmra.mrb[0].mxu0 %v2544
      %v2580 = vpop.f32.mrb[0].mxu0
      %v2581 = vadd.f32 %v2538, %v2580
      %v2582 = vpop.f32.mrb[0].mxu0
      %v2583 = vpop.f32.mrb[0].mxu0
      %v2584 = vpop.f32.mrb[0].mxu0
      %2585 = vdwg.mxu0
      %v2586 = vadd.f32 %v2581, %v1617
      %v2587 = vadd.f32 %v2586, %v1786
      %v2588 = vsel %vm541, %v2587, 0.0
      %2589 = vadd.xlane.f32.xlu0 %v2588
      %v2590 = vpop.xlane.xlu0 %2589
      %v2591 = vmul.f32 %v2590, %v1624
      %v2592 = vsub.f32 %v2587, %v2591
      %v2593 = vmul.f32 %v2592, %v2592
      %v2594 = vsel %vm541, %v2593, 0.0
      %2595 = vadd.xlane.f32.xlu0 %v2594
      %v2596 = vpop.xlane.xlu0 %2595
      %v2597 = vmul.f32 %v2596, %v1624
      %v2598 = vadd.f32 %v2597, 1e-05
      %v2599 = vrsqrt.pop %v2598
      %v2600 = vmul.f32 %v2592, %v2599
      %v2601 = vpack.c.bf16 %v2600, %v2600
      %v2603 = vsel %vm541, %v2601, 0
      %2605 = vmatprep.subr.bf16.mxu0 0
      %2606 = vmatpush1.bf16.msra.mxu0 %v1650
      %2607 = vmatprep.subr.bf16.mxu0 0
      %2608 = vmatpush1.bf16.msra.mxu0 %v1651
      %2609 = vmatprep.subr.bf16.mxu0 0
      %2610 = vmatpush1.bf16.msra.mxu0 0
      %2611 = vmatprep.subr.bf16.mxu0 0
      %2612 = vmatpush1.bf16.msra.mxu0 0
      %2613 = vmatprep.subr.bf16.mxu0 0
      %2614 = vmatpush1.bf16.msra.mxu0 0
      %2615 = vmatprep.subr.bf16.mxu0 0
      %2616 = vmatpush1.bf16.msra.mxu0 0
      %2617 = vmatprep.subr.bf16.mxu0 0
      %2618 = vmatpush1.bf16.msra.mxu0 0
      %2619 = vmatprep.subr.bf16.mxu0 0
      %2620 = vmatpush1.bf16.msra.mxu0 0
      %2621 = vmatprep.subr.bf16.mxu0 0
      %2622 = vmatpush1.bf16.msra.mxu0 0
      %2623 = vmatprep.subr.bf16.mxu0 0
      %2624 = vmatpush1.bf16.msra.mxu0 0
      %2625 = vmatprep.subr.bf16.mxu0 0
      %2626 = vmatpush1.bf16.msra.mxu0 0
      %2627 = vmatprep.subr.bf16.mxu0 0
      %2628 = vmatpush1.bf16.msra.mxu0 0
      %2629 = vmatprep.subr.bf16.mxu0 0
      %2630 = vmatpush1.bf16.msra.mxu0 0
      %2631 = vmatprep.subr.bf16.mxu0 0
      %2632 = vmatpush1.bf16.msra.mxu0 0
      %2633 = vmatprep.subr.bf16.mxu0 0
      %2634 = vmatpush1.bf16.msra.mxu0 0
      %2635 = vmatprep.subr.bf16.mxu0 0
      %2636 = vmatpush1.bf16.msra.mxu0 0
      %2637 = vmatprep.mubr.bf16.mxu0 0
      %2638 = vmatmul.mubr.bf16.gmra.mrb[0].mxu0 %v2603
      %v2639 = vpop.f32.mrb[0].mxu0
      %v2640 = vadd.f32 %v1640, %v2639
      %v2641 = vpop.f32.mrb[0].mxu0
      %v2642 = vpop.f32.mrb[0].mxu0
      %v2643 = vpop.f32.mrb[0].mxu0
      %2644 = vdwg.mxu0
      %v2645 = vmax.f32 %v2640, 0.0
      %v2646 = vpack.c.bf16 %v2645, %v2645
      %v2648 = vsel %vm1729, %v2646, 0
      %2650 = vmatprep.subr.bf16.mxu0 0
      %2651 = vmatpush1.bf16.msra.mxu0 %v1721
      %2652 = vmatprep.subr.bf16.mxu0 0
      %2653 = vmatpush1.bf16.msra.mxu0 %v1722
      %2654 = vmatprep.subr.bf16.mxu0 0
      %2655 = vmatpush1.bf16.msra.mxu0 %v1723
      %2656 = vmatprep.subr.bf16.mxu0 0
      %2657 = vmatpush1.bf16.msra.mxu0 %v1724
      %2658 = vmatprep.subr.bf16.mxu0 0
      %2659 = vmatpush1.bf16.msra.mxu0 0
      %2660 = vmatprep.subr.bf16.mxu0 0
      %2661 = vmatpush1.bf16.msra.mxu0 0
      %2662 = vmatprep.subr.bf16.mxu0 0
      %2663 = vmatpush1.bf16.msra.mxu0 0
      %2664 = vmatprep.subr.bf16.mxu0 0
      %2665 = vmatpush1.bf16.msra.mxu0 0
      %2666 = vmatprep.subr.bf16.mxu0 0
      %2667 = vmatpush1.bf16.msra.mxu0 0
      %2668 = vmatprep.subr.bf16.mxu0 0
      %2669 = vmatpush1.bf16.msra.mxu0 0
      %2670 = vmatprep.subr.bf16.mxu0 0
      %2671 = vmatpush1.bf16.msra.mxu0 0
      %2672 = vmatprep.subr.bf16.mxu0 0
      %2673 = vmatpush1.bf16.msra.mxu0 0
      %2674 = vmatprep.subr.bf16.mxu0 0
      %2675 = vmatpush1.bf16.msra.mxu0 0
      %2676 = vmatprep.subr.bf16.mxu0 0
      %2677 = vmatpush1.bf16.msra.mxu0 0
      %2678 = vmatprep.subr.bf16.mxu0 0
      %2679 = vmatpush1.bf16.msra.mxu0 0
      %2680 = vmatprep.subr.bf16.mxu0 0
      %2681 = vmatpush1.bf16.msra.mxu0 0
      %2682 = vmatprep.mubr.bf16.mxu0 0
      %2683 = vmatmul.mubr.bf16.gmra.mrb[0].mxu0 %v2648
      %v2684 = vpop.f32.mrb[0].mxu0
      %v2685 = vadd.f32 %v1703, %v2684
      %v2686 = vpop.f32.mrb[0].mxu0
      %v2687 = vpop.f32.mrb[0].mxu0
      %v2688 = vpop.f32.mrb[0].mxu0
      %2689 = vdwg.mxu0
      %v2690 = vadd.f32 %v2685, %v2600
      %v2691 = vsel %vm541, %v2690, 0.0
      %2692 = vadd.xlane.f32.xlu0 %v2691
      %v2693 = vpop.xlane.xlu0 %2692
      %v2694 = vmul.f32 %v2693, %v1624
      %v2695 = vsub.f32 %v2690, %v2694
      %v2696 = vmul.f32 %v2695, %v2695
      %v2697 = vsel %vm541, %v2696, 0.0
      %2698 = vadd.xlane.f32.xlu0 %v2697
      %v2699 = vpop.xlane.xlu0 %2698
      %v2700 = vmul.f32 %v2699, %v1624
      %v2701 = vadd.f32 %v2700, 1e-05
      %v2702 = vrsqrt.pop %v2701
      %v2703 = vmul.f32 %v2695, %v2702
      %v2704 = vpack.c.bf16 %v2703, %v2703
      %v2706 = vsel %vm541, %v2704, 0
      %2708 = vmatprep.subr.bf16.mxu0 0
      %2709 = vmatpush1.bf16.msra.mxu0 %v683
      %2710 = vmatprep.subr.bf16.mxu0 0
      %2711 = vmatpush1.bf16.msra.mxu0 %v684
      %2712 = vmatprep.subr.bf16.mxu0 0
      %2713 = vmatpush1.bf16.msra.mxu0 0
      %2714 = vmatprep.subr.bf16.mxu0 0
      %2715 = vmatpush1.bf16.msra.mxu0 0
      %2716 = vmatprep.subr.bf16.mxu0 0
      %2717 = vmatpush1.bf16.msra.mxu0 0
      %2718 = vmatprep.subr.bf16.mxu0 0
      %2719 = vmatpush1.bf16.msra.mxu0 0
      %2720 = vmatprep.subr.bf16.mxu0 0
      %2721 = vmatpush1.bf16.msra.mxu0 0
      %2722 = vmatprep.subr.bf16.mxu0 0
      %2723 = vmatpush1.bf16.msra.mxu0 0
      %2724 = vmatprep.subr.bf16.mxu0 0
      %2725 = vmatpush1.bf16.msra.mxu0 0
      %2726 = vmatprep.subr.bf16.mxu0 0
      %2727 = vmatpush1.bf16.msra.mxu0 0
      %2728 = vmatprep.subr.bf16.mxu0 0
      %2729 = vmatpush1.bf16.msra.mxu0 0
      %2730 = vmatprep.subr.bf16.mxu0 0
      %2731 = vmatpush1.bf16.msra.mxu0 0
      %2732 = vmatprep.subr.bf16.mxu0 0
      %2733 = vmatpush1.bf16.msra.mxu0 0
      %2734 = vmatprep.subr.bf16.mxu0 0
      %2735 = vmatpush1.bf16.msra.mxu0 0
      %2736 = vmatprep.subr.bf16.mxu0 0
      %2737 = vmatpush1.bf16.msra.mxu0 0
      %2738 = vmatprep.subr.bf16.mxu0 0
      %2739 = vmatpush1.bf16.msra.mxu0 0
      %2740 = vmatprep.mubr.bf16.mxu0 0
      %2741 = vmatmul.mubr.bf16.gmra.mrb[0].mxu0 %v2706
      %v2742 = vpop.f32.mrb[0].mxu0
      %v2743 = vadd.f32 %v616, %v2742
      %v2744 = vpop.f32.mrb[0].mxu0
      %v2745 = vpop.f32.mrb[0].mxu0
      %v2746 = vpop.f32.mrb[0].mxu0
      %2747 = vdwg.mxu0
      %v2748 = vpack.c.bf16 %v2743, %v2743
      %v2751 = vunpack.c.l.s4 1966171168
      %v2752 = vunpack.c.0.s8 %v2751
      %v2753 = vlaneseq
      %v2754 = vshrl.u32 %v2753, 7
      %v2755 = vsub.s32 %v2752, %v2754
      %v2756 = vrot.slane %v2748, %v2755
      %v2757 = vcombine.high %v2756, %v2756
      %v2759 = vunpack.c.l.s4 1966171168
      %v2760 = vunpack.c.0.s8 %v2759
      %v2761 = vlaneseq
      %v2762 = vshrl.u32 %v2761, 7
      %v2763 = vsub.s32 %v2760, %v2762
      %v2764 = vrot.slane %v2756, %v2763
      %v2766 = vunpack.c.l.s4 1966171168
      %v2767 = vunpack.c.0.s8 %v2766
      %v2768 = vlaneseq
      %v2769 = vshrl.u32 %v2768, 7
      %v2770 = vsub.s32 %v2767, %v2769
      %v2771 = vrot.slane %v2757, %v2770
      %v2772 = vcombine.high %v2764, %v2764
      %v2773 = vcombine.high %v2771, %v2771
      %v2774 = vunpack.i.l.s16 %v2764
      %v2775 = vunpack.i.h.s16 %v2764
      %v2776 = vunpack.i.l.s16 %v2771
      %v2777 = vunpack.i.h.s16 %v2771
      %v2778 = vunpack.i.l.s16 %v2772
      %v2779 = vunpack.i.h.s16 %v2772
      %v2780 = vunpack.i.l.s16 %v2773
      %v2781 = vunpack.i.h.s16 %v2773
      %v2782 = vpack.i.b16 %v2774, %v2774
      %v2783 = vlaneseq
      %v2784 = vshrl.u32 %v2783, 7
      %v2785 = vsub.s32 0, %v2784
      %v2786 = vrot.slane %v2782, %v2785
      %v2788 = vsel %vm541, %v2786, 0
      %2790 = vmatprep.subr.bf16.mxu0 0
      %2791 = vmatpush1.bf16.msra.mxu0 %v777
      %2792 = vmatprep.subr.bf16.mxu0 0
      %2793 = vmatpush1.bf16.msra.mxu0 %v778
      %2794 = vmatprep.subr.bf16.mxu0 0
      %2795 = vmatpush1.bf16.msra.mxu0 0
      %2796 = vmatprep.subr.bf16.mxu0 0
      %2797 = vmatpush1.bf16.msra.mxu0 0
      %2798 = vmatprep.subr.bf16.mxu0 0
      %2799 = vmatpush1.bf16.msra.mxu0 0
      %2800 = vmatprep.subr.bf16.mxu0 0
      %2801 = vmatpush1.bf16.msra.mxu0 0
      %2802 = vmatprep.subr.bf16.mxu0 0
      %2803 = vmatpush1.bf16.msra.mxu0 0
      %2804 = vmatprep.subr.bf16.mxu0 0
      %2805 = vmatpush1.bf16.msra.mxu0 0
      %2806 = vmatprep.subr.bf16.mxu0 0
      %2807 = vmatpush1.bf16.msra.mxu0 0
      %2808 = vmatprep.subr.bf16.mxu0 0
      %2809 = vmatpush1.bf16.msra.mxu0 0
      %2810 = vmatprep.subr.bf16.mxu0 0
      %2811 = vmatpush1.bf16.msra.mxu0 0
      %2812 = vmatprep.subr.bf16.mxu0 0
      %2813 = vmatpush1.bf16.msra.mxu0 0
      %2814 = vmatprep.subr.bf16.mxu0 0
      %2815 = vmatpush1.bf16.msra.mxu0 0
      %2816 = vmatprep.subr.bf16.mxu0 0
      %2817 = vmatpush1.bf16.msra.mxu0 0
      %2818 = vmatprep.subr.bf16.mxu0 0
      %2819 = vmatpush1.bf16.msra.mxu0 0
      %2820 = vmatprep.subr.bf16.mxu0 0
      %2821 = vmatpush1.bf16.msra.mxu0 0
      %2822 = vmatprep.mubr.bf16.mxu0 0
      %2823 = vmatmul.mubr.bf16.gmra.mrb[0].mxu0 %v2788
      %v2824 = vpop.f32.mrb[0].mxu0
      %v2825 = vadd.f32 0.0, %v2824
      %v2826 = vpop.f32.mrb[0].mxu0
      %v2827 = vpop.f32.mrb[0].mxu0
      %v2828 = vpop.f32.mrb[0].mxu0
      %2829 = vdwg.mxu0
      %v2830 = vpack.i.b16 %v2775, %v2775
      %v2831 = vlaneseq
      %v2832 = vshrl.u32 %v2831, 7
      %v2833 = vsub.s32 0, %v2832
      %v2834 = vrot.slane %v2830, %v2833
      %v2836 = vsel %vm541, %v2834, 0
      %2838 = vmatprep.subr.bf16.mxu0 0
      %2839 = vmatpush1.bf16.msra.mxu0 %v837
      %2840 = vmatprep.subr.bf16.mxu0 0
      %2841 = vmatpush1.bf16.msra.mxu0 %v838
      %2842 = vmatprep.subr.bf16.mxu0 0
      %2843 = vmatpush1.bf16.msra.mxu0 0
      %2844 = vmatprep.subr.bf16.mxu0 0
      %2845 = vmatpush1.bf16.msra.mxu0 0
      %2846 = vmatprep.subr.bf16.mxu0 0
      %2847 = vmatpush1.bf16.msra.mxu0 0
      %2848 = vmatprep.subr.bf16.mxu0 0
      %2849 = vmatpush1.bf16.msra.mxu0 0
      %2850 = vmatprep.subr.bf16.mxu0 0
      %2851 = vmatpush1.bf16.msra.mxu0 0
      %2852 = vmatprep.subr.bf16.mxu0 0
      %2853 = vmatpush1.bf16.msra.mxu0 0
      %2854 = vmatprep.subr.bf16.mxu0 0
      %2855 = vmatpush1.bf16.msra.mxu0 0
      %2856 = vmatprep.subr.bf16.mxu0 0
      %2857 = vmatpush1.bf16.msra.mxu0 0
      %2858 = vmatprep.subr.bf16.mxu0 0
      %2859 = vmatpush1.bf16.msra.mxu0 0
      %2860 = vmatprep.subr.bf16.mxu0 0
      %2861 = vmatpush1.bf16.msra.mxu0 0
      %2862 = vmatprep.subr.bf16.mxu0 0
      %2863 = vmatpush1.bf16.msra.mxu0 0
      %2864 = vmatprep.subr.bf16.mxu0 0
      %2865 = vmatpush1.bf16.msra.mxu0 0
      %2866 = vmatprep.subr.bf16.mxu0 0
      %2867 = vmatpush1.bf16.msra.mxu0 0
      %2868 = vmatprep.subr.bf16.mxu0 0
      %2869 = vmatpush1.bf16.msra.mxu0 0
      %2870 = vmatprep.mubr.bf16.mxu0 0
      %2871 = vmatmul.mubr.bf16.gmra.mrb[0].mxu0 %v2836
      %v2872 = vpop.f32.mrb[0].mxu0
      %v2873 = vadd.f32 0.0, %v2872
      %v2874 = vpop.f32.mrb[0].mxu0
      %v2875 = vpop.f32.mrb[0].mxu0
      %v2876 = vpop.f32.mrb[0].mxu0
      %2877 = vdwg.mxu0
      %v2878 = vpack.i.b16 %v2776, %v2776
      %v2879 = vlaneseq
      %v2880 = vshrl.u32 %v2879, 7
      %v2881 = vsub.s32 0, %v2880
      %v2882 = vrot.slane %v2878, %v2881
      %v2884 = vsel %vm541, %v2882, 0
      %2886 = vmatprep.subr.bf16.mxu0 0
      %2887 = vmatpush1.bf16.msra.mxu0 %v897
      %2888 = vmatprep.subr.bf16.mxu0 0
      %2889 = vmatpush1.bf16.msra.mxu0 %v898
      %2890 = vmatprep.subr.bf16.mxu0 0
      %2891 = vmatpush1.bf16.msra.mxu0 0
      %2892 = vmatprep.subr.bf16.mxu0 0
      %2893 = vmatpush1.bf16.msra.mxu0 0
      %2894 = vmatprep.subr.bf16.mxu0 0
      %2895 = vmatpush1.bf16.msra.mxu0 0
      %2896 = vmatprep.subr.bf16.mxu0 0
      %2897 = vmatpush1.bf16.msra.mxu0 0
      %2898 = vmatprep.subr.bf16.mxu0 0
      %2899 = vmatpush1.bf16.msra.mxu0 0
      %2900 = vmatprep.subr.bf16.mxu0 0
      %2901 = vmatpush1.bf16.msra.mxu0 0
      %2902 = vmatprep.subr.bf16.mxu0 0
      %2903 = vmatpush1.bf16.msra.mxu0 0
      %2904 = vmatprep.subr.bf16.mxu0 0
      %2905 = vmatpush1.bf16.msra.mxu0 0
      %2906 = vmatprep.subr.bf16.mxu0 0
      %2907 = vmatpush1.bf16.msra.mxu0 0
      %2908 = vmatprep.subr.bf16.mxu0 0
      %2909 = vmatpush1.bf16.msra.mxu0 0
      %2910 = vmatprep.subr.bf16.mxu0 0
      %2911 = vmatpush1.bf16.msra.mxu0 0
      %2912 = vmatprep.subr.bf16.mxu0 0
      %2913 = vmatpush1.bf16.msra.mxu0 0
      %2914 = vmatprep.subr.bf16.mxu0 0
      %2915 = vmatpush1.bf16.msra.mxu0 0
      %2916 = vmatprep.subr.bf16.mxu0 0
      %2917 = vmatpush1.bf16.msra.mxu0 0
      %2918 = vmatprep.mubr.bf16.mxu0 0
      %2919 = vmatmul.mubr.bf16.gmra.mrb[0].mxu0 %v2884
      %v2920 = vpop.f32.mrb[0].mxu0
      %v2921 = vadd.f32 0.0, %v2920
      %v2922 = vpop.f32.mrb[0].mxu0
      %v2923 = vpop.f32.mrb[0].mxu0
      %v2924 = vpop.f32.mrb[0].mxu0
      %2925 = vdwg.mxu0
      %v2926 = vpack.i.b16 %v2777, %v2777
      %v2927 = vlaneseq
      %v2928 = vshrl.u32 %v2927, 7
      %v2929 = vsub.s32 0, %v2928
      %v2930 = vrot.slane %v2926, %v2929
      %v2932 = vsel %vm541, %v2930, 0
      %2934 = vmatprep.subr.bf16.mxu0 0
      %2935 = vmatpush1.bf16.msra.mxu0 %v957
      %2936 = vmatprep.subr.bf16.mxu0 0
      %2937 = vmatpush1.bf16.msra.mxu0 %v958
      %2938 = vmatprep.subr.bf16.mxu0 0
      %2939 = vmatpush1.bf16.msra.mxu0 0
      %2940 = vmatprep.subr.bf16.mxu0 0
      %2941 = vmatpush1.bf16.msra.mxu0 0
      %2942 = vmatprep.subr.bf16.mxu0 0
      %2943 = vmatpush1.bf16.msra.mxu0 0
      %2944 = vmatprep.subr.bf16.mxu0 0
      %2945 = vmatpush1.bf16.msra.mxu0 0
      %2946 = vmatprep.subr.bf16.mxu0 0
      %2947 = vmatpush1.bf16.msra.mxu0 0
      %2948 = vmatprep.subr.bf16.mxu0 0
      %2949 = vmatpush1.bf16.msra.mxu0 0
      %2950 = vmatprep.subr.bf16.mxu0 0
      %2951 = vmatpush1.bf16.msra.mxu0 0
      %2952 = vmatprep.subr.bf16.mxu0 0
      %2953 = vmatpush1.bf16.msra.mxu0 0
      %2954 = vmatprep.subr.bf16.mxu0 0
      %2955 = vmatpush1.bf16.msra.mxu0 0
      %2956 = vmatprep.subr.bf16.mxu0 0
      %2957 = vmatpush1.bf16.msra.mxu0 0
      %2958 = vmatprep.subr.bf16.mxu0 0
      %2959 = vmatpush1.bf16.msra.mxu0 0
      %2960 = vmatprep.subr.bf16.mxu0 0
      %2961 = vmatpush1.bf16.msra.mxu0 0
      %2962 = vmatprep.subr.bf16.mxu0 0
      %2963 = vmatpush1.bf16.msra.mxu0 0
      %2964 = vmatprep.subr.bf16.mxu0 0
      %2965 = vmatpush1.bf16.msra.mxu0 0
      %2966 = vmatprep.mubr.bf16.mxu0 0
      %2967 = vmatmul.mubr.bf16.gmra.mrb[0].mxu0 %v2932
      %v2968 = vpop.f32.mrb[0].mxu0
      %v2969 = vadd.f32 0.0, %v2968
      %v2970 = vpop.f32.mrb[0].mxu0
      %v2971 = vpop.f32.mrb[0].mxu0
      %v2972 = vpop.f32.mrb[0].mxu0
      %2973 = vdwg.mxu0
      %v2974 = vpack.i.b16 %v2778, %v2778
      %v2975 = vlaneseq
      %v2976 = vshrl.u32 %v2975, 7
      %v2977 = vsub.s32 0, %v2976
      %v2978 = vrot.slane %v2974, %v2977
      %v2980 = vsel %vm541, %v2978, 0
      %2982 = vmatprep.subr.bf16.mxu0 0
      %2983 = vmatpush1.bf16.msra.mxu0 %v1017
      %2984 = vmatprep.subr.bf16.mxu0 0
      %2985 = vmatpush1.bf16.msra.mxu0 %v1018
      %2986 = vmatprep.subr.bf16.mxu0 0
      %2987 = vmatpush1.bf16.msra.mxu0 0
      %2988 = vmatprep.subr.bf16.mxu0 0
      %2989 = vmatpush1.bf16.msra.mxu0 0
      %2990 = vmatprep.subr.bf16.mxu0 0
      %2991 = vmatpush1.bf16.msra.mxu0 0
      %2992 = vmatprep.subr.bf16.mxu0 0
      %2993 = vmatpush1.bf16.msra.mxu0 0
      %2994 = vmatprep.subr.bf16.mxu0 0
      %2995 = vmatpush1.bf16.msra.mxu0 0
      %2996 = vmatprep.subr.bf16.mxu0 0
      %2997 = vmatpush1.bf16.msra.mxu0 0
      %2998 = vmatprep.subr.bf16.mxu0 0
      %2999 = vmatpush1.bf16.msra.mxu0 0
      %3000 = vmatprep.subr.bf16.mxu0 0
      %3001 = vmatpush1.bf16.msra.mxu0 0
      %3002 = vmatprep.subr.bf16.mxu0 0
      %3003 = vmatpush1.bf16.msra.mxu0 0
      %3004 = vmatprep.subr.bf16.mxu0 0
      %3005 = vmatpush1.bf16.msra.mxu0 0
      %3006 = vmatprep.subr.bf16.mxu0 0
      %3007 = vmatpush1.bf16.msra.mxu0 0
      %3008 = vmatprep.subr.bf16.mxu0 0
      %3009 = vmatpush1.bf16.msra.mxu0 0
      %3010 = vmatprep.subr.bf16.mxu0 0
      %3011 = vmatpush1.bf16.msra.mxu0 0
      %3012 = vmatprep.subr.bf16.mxu0 0
      %3013 = vmatpush1.bf16.msra.mxu0 0
      %3014 = vmatprep.mubr.bf16.mxu0 0
      %3015 = vmatmul.mubr.bf16.gmra.mrb[0].mxu0 %v2980
      %v3016 = vpop.f32.mrb[0].mxu0
      %v3017 = vadd.f32 0.0, %v3016
      %v3018 = vpop.f32.mrb[0].mxu0
      %v3019 = vpop.f32.mrb[0].mxu0
      %v3020 = vpop.f32.mrb[0].mxu0
      %3021 = vdwg.mxu0
      %v3022 = vpack.i.b16 %v2779, %v2779
      %v3023 = vlaneseq
      %v3024 = vshrl.u32 %v3023, 7
      %v3025 = vsub.s32 0, %v3024
      %v3026 = vrot.slane %v3022, %v3025
      %v3028 = vsel %vm541, %v3026, 0
      %3030 = vmatprep.subr.bf16.mxu0 0
      %3031 = vmatpush1.bf16.msra.mxu0 %v1077
      %3032 = vmatprep.subr.bf16.mxu0 0
      %3033 = vmatpush1.bf16.msra.mxu0 %v1078
      %3034 = vmatprep.subr.bf16.mxu0 0
      %3035 = vmatpush1.bf16.msra.mxu0 0
      %3036 = vmatprep.subr.bf16.mxu0 0
      %3037 = vmatpush1.bf16.msra.mxu0 0
      %3038 = vmatprep.subr.bf16.mxu0 0
      %3039 = vmatpush1.bf16.msra.mxu0 0
      %3040 = vmatprep.subr.bf16.mxu0 0
      %3041 = vmatpush1.bf16.msra.mxu0 0
      %3042 = vmatprep.subr.bf16.mxu0 0
      %3043 = vmatpush1.bf16.msra.mxu0 0
      %3044 = vmatprep.subr.bf16.mxu0 0
      %3045 = vmatpush1.bf16.msra.mxu0 0
      %3046 = vmatprep.subr.bf16.mxu0 0
      %3047 = vmatpush1.bf16.msra.mxu0 0
      %3048 = vmatprep.subr.bf16.mxu0 0
      %3049 = vmatpush1.bf16.msra.mxu0 0
      %3050 = vmatprep.subr.bf16.mxu0 0
      %3051 = vmatpush1.bf16.msra.mxu0 0
      %3052 = vmatprep.subr.bf16.mxu0 0
      %3053 = vmatpush1.bf16.msra.mxu0 0
      %3054 = vmatprep.subr.bf16.mxu0 0
      %3055 = vmatpush1.bf16.msra.mxu0 0
      %3056 = vmatprep.subr.bf16.mxu0 0
      %3057 = vmatpush1.bf16.msra.mxu0 0
      %3058 = vmatprep.subr.bf16.mxu0 0
      %3059 = vmatpush1.bf16.msra.mxu0 0
      %3060 = vmatprep.subr.bf16.mxu0 0
      %3061 = vmatpush1.bf16.msra.mxu0 0
      %3062 = vmatprep.mubr.bf16.mxu0 0
      %3063 = vmatmul.mubr.bf16.gmra.mrb[0].mxu0 %v3028
      %v3064 = vpop.f32.mrb[0].mxu0
      %v3065 = vadd.f32 0.0, %v3064
      %v3066 = vpop.f32.mrb[0].mxu0
      %v3067 = vpop.f32.mrb[0].mxu0
      %v3068 = vpop.f32.mrb[0].mxu0
      %3069 = vdwg.mxu0
      %v3070 = vpack.i.b16 %v2780, %v2780
      %v3071 = vlaneseq
      %v3072 = vshrl.u32 %v3071, 7
      %v3073 = vsub.s32 0, %v3072
      %v3074 = vrot.slane %v3070, %v3073
      %v3076 = vsel %vm541, %v3074, 0
      %3078 = vmatprep.subr.bf16.mxu0 0
      %3079 = vmatpush1.bf16.msra.mxu0 %v1137
      %3080 = vmatprep.subr.bf16.mxu0 0
      %3081 = vmatpush1.bf16.msra.mxu0 %v1138
      %3082 = vmatprep.subr.bf16.mxu0 0
      %3083 = vmatpush1.bf16.msra.mxu0 0
      %3084 = vmatprep.subr.bf16.mxu0 0
      %3085 = vmatpush1.bf16.msra.mxu0 0
      %3086 = vmatprep.subr.bf16.mxu0 0
      %3087 = vmatpush1.bf16.msra.mxu0 0
      %3088 = vmatprep.subr.bf16.mxu0 0
      %3089 = vmatpush1.bf16.msra.mxu0 0
      %3090 = vmatprep.subr.bf16.mxu0 0
      %3091 = vmatpush1.bf16.msra.mxu0 0
      %3092 = vmatprep.subr.bf16.mxu0 0
      %3093 = vmatpush1.bf16.msra.mxu0 0
      %3094 = vmatprep.subr.bf16.mxu0 0
      %3095 = vmatpush1.bf16.msra.mxu0 0
      %3096 = vmatprep.subr.bf16.mxu0 0
      %3097 = vmatpush1.bf16.msra.mxu0 0
      %3098 = vmatprep.subr.bf16.mxu0 0
      %3099 = vmatpush1.bf16.msra.mxu0 0
      %3100 = vmatprep.subr.bf16.mxu0 0
      %3101 = vmatpush1.bf16.msra.mxu0 0
      %3102 = vmatprep.subr.bf16.mxu0 0
      %3103 = vmatpush1.bf16.msra.mxu0 0
      %3104 = vmatprep.subr.bf16.mxu0 0
      %3105 = vmatpush1.bf16.msra.mxu0 0
      %3106 = vmatprep.subr.bf16.mxu0 0
      %3107 = vmatpush1.bf16.msra.mxu0 0
      %3108 = vmatprep.subr.bf16.mxu0 0
      %3109 = vmatpush1.bf16.msra.mxu0 0
      %3110 = vmatprep.mubr.bf16.mxu0 0
      %3111 = vmatmul.mubr.bf16.gmra.mrb[0].mxu0 %v3076
      %v3112 = vpop.f32.mrb[0].mxu0
      %v3113 = vadd.f32 0.0, %v3112
      %v3114 = vpop.f32.mrb[0].mxu0
      %v3115 = vpop.f32.mrb[0].mxu0
      %v3116 = vpop.f32.mrb[0].mxu0
      %3117 = vdwg.mxu0
      %v3118 = vpack.i.b16 %v2781, %v2781
      %v3119 = vlaneseq
      %v3120 = vshrl.u32 %v3119, 7
      %v3121 = vsub.s32 0, %v3120
      %v3122 = vrot.slane %v3118, %v3121
      %v3124 = vsel %vm541, %v3122, 0
      %3126 = vmatprep.subr.bf16.mxu0 0
      %3127 = vmatpush1.bf16.msra.mxu0 %v1197
      %3128 = vmatprep.subr.bf16.mxu0 0
      %3129 = vmatpush1.bf16.msra.mxu0 %v1198
      %3130 = vmatprep.subr.bf16.mxu0 0
      %3131 = vmatpush1.bf16.msra.mxu0 0
      %3132 = vmatprep.subr.bf16.mxu0 0
      %3133 = vmatpush1.bf16.msra.mxu0 0
      %3134 = vmatprep.subr.bf16.mxu0 0
      %3135 = vmatpush1.bf16.msra.mxu0 0
      %3136 = vmatprep.subr.bf16.mxu0 0
      %3137 = vmatpush1.bf16.msra.mxu0 0
      %3138 = vmatprep.subr.bf16.mxu0 0
      %3139 = vmatpush1.bf16.msra.mxu0 0
      %3140 = vmatprep.subr.bf16.mxu0 0
      %3141 = vmatpush1.bf16.msra.mxu0 0
      %3142 = vmatprep.subr.bf16.mxu0 0
      %3143 = vmatpush1.bf16.msra.mxu0 0
      %3144 = vmatprep.subr.bf16.mxu0 0
      %3145 = vmatpush1.bf16.msra.mxu0 0
      %3146 = vmatprep.subr.bf16.mxu0 0
      %3147 = vmatpush1.bf16.msra.mxu0 0
      %3148 = vmatprep.subr.bf16.mxu0 0
      %3149 = vmatpush1.bf16.msra.mxu0 0
      %3150 = vmatprep.subr.bf16.mxu0 0
      %3151 = vmatpush1.bf16.msra.mxu0 0
      %3152 = vmatprep.subr.bf16.mxu0 0
      %3153 = vmatpush1.bf16.msra.mxu0 0
      %3154 = vmatprep.subr.bf16.mxu0 0
      %3155 = vmatpush1.bf16.msra.mxu0 0
      %3156 = vmatprep.subr.bf16.mxu0 0
      %3157 = vmatpush1.bf16.msra.mxu0 0
      %3158 = vmatprep.mubr.bf16.mxu0 0
      %3159 = vmatmul.mubr.bf16.gmra.mrb[0].mxu0 %v3124
      %v3160 = vpop.f32.mrb[0].mxu0
      %v3161 = vadd.f32 0.0, %v3160
      %v3162 = vpop.f32.mrb[0].mxu0
      %v3163 = vpop.f32.mrb[0].mxu0
      %v3164 = vpop.f32.mrb[0].mxu0
      %3165 = vdwg.mxu0
      %v3166 = vadd.f32 %v2743, %v1248
      %v3167 = vpack.c.bf16 %v3166, %v3166
      %3168 = vrot.lane.b32.xlu0 %v2748, 96
      %v3169 = vpop.permute.xlu0 %3168
      %v3178 = vrot.slane %v2873, 7
      %v3179 = vsel %vm1263, %v3178, %v2825
      %v3180 = vrot.slane %v2921, 6
      %v3181 = vsel %vm1266, %v3180, %v3179
      %v3182 = vrot.slane %v2969, 5
      %v3183 = vsel %vm1269, %v3182, %v3181
      %v3184 = vrot.slane %v3017, 4
      %v3185 = vsel %vm1272, %v3184, %v3183
      %v3186 = vrot.slane %v3065, 3
      %v3187 = vsel %vm1275, %v3186, %v3185
      %v3188 = vrot.slane %v3113, 2
      %v3189 = vsel %vm1278, %v3188, %v3187
      %v3190 = vrot.slane %v3161, 1
      %v3191 = vsel %vm1281, %v3190, %v3189
      %v3194 = vsel %vm1284, %v3167, 0
      %v3197 = vsel %vm1284, %v3169, 0
      %3199 = vmatprep.subr.bf16.mxu0 0
      %3200 = vmatpush1.bf16.xpose.msra.mxu0 %v3197
      %3201 = vmatprep.subr.bf16.mxu0 0
      %3202 = vmatpush1.bf16.xpose.msra.mxu0 0
      %3203 = vmatprep.subr.bf16.mxu0 0
      %3204 = vmatpush1.bf16.xpose.msra.mxu0 0
      %3205 = vmatprep.subr.bf16.mxu0 0
      %3206 = vmatpush1.bf16.xpose.msra.mxu0 0
      %3207 = vmatprep.subr.bf16.mxu0 0
      %3208 = vmatpush1.bf16.xpose.msra.mxu0 0
      %3209 = vmatprep.subr.bf16.mxu0 0
      %3210 = vmatpush1.bf16.xpose.msra.mxu0 0
      %3211 = vmatprep.subr.bf16.mxu0 0
      %3212 = vmatpush1.bf16.xpose.msra.mxu0 0
      %3213 = vmatprep.subr.bf16.mxu0 0
      %3214 = vmatpush1.bf16.xpose.msra.mxu0 0
      %3215 = vmatprep.subr.bf16.mxu0 0
      %3216 = vmatpush1.bf16.xpose.msra.mxu0 0
      %3217 = vmatprep.subr.bf16.mxu0 0
      %3218 = vmatpush1.bf16.xpose.msra.mxu0 0
      %3219 = vmatprep.subr.bf16.mxu0 0
      %3220 = vmatpush1.bf16.xpose.msra.mxu0 0
      %3221 = vmatprep.subr.bf16.mxu0 0
      %3222 = vmatpush1.bf16.xpose.msra.mxu0 0
      %3223 = vmatprep.subr.bf16.mxu0 0
      %3224 = vmatpush1.bf16.xpose.msra.mxu0 0
      %3225 = vmatprep.subr.bf16.mxu0 0
      %3226 = vmatpush1.bf16.xpose.msra.mxu0 0
      %3227 = vmatprep.subr.bf16.mxu0 0
      %3228 = vmatpush1.bf16.xpose.msra.mxu0 0
      %3229 = vmatprep.subr.bf16.mxu0 0
      %3230 = vmatpush1.bf16.xpose.msra.mxu0 0
      %3231 = vmatprep.mubr.bf16.mxu0 0
      %3232 = vmatmul.mubr.bf16.gmra.mrb[0].mxu0 %v3194
      %v3233 = vpop.f32.mrb[0].mxu0
      %v3234 = vadd.f32 %v3191, %v3233
      %v3235 = vpop.f32.mrb[0].mxu0
      %v3236 = vpop.f32.mrb[0].mxu0
      %v3237 = vpop.f32.mrb[0].mxu0
      %3238 = vdwg.mxu0
      %v3239 = vadd.f32 %v3234, %v654
      %v3240 = vsel %vm1332, %v3239, -inf
      %3241 = vmax.xlane.f32.xlu0 %v3240
      %v3242 = vpop.xlane.xlu0 %3241
      %v3243 = vsub.f32 %v3239, %v3242
      %v3244 = vmul.f32 %v3243, 1.442695
      %v3245 = vpow.pop %v3244
      %v3246 = vsel %vm1332, %v3245, 0.0
      %3247 = vadd.xlane.f32.xlu0 %v3246
      %v3248 = vpop.xlane.xlu0 %3247
      %v3249 = vrcp.pop %v3248
      %v3250 = vmul.f32 %v3245, %v3249
      %v3251 = vpack.c.bf16 %v3250, %v3250
      %3252 = vrot.lane.b32.xlu0 %v2748, 64
      %v3253 = vpop.permute.xlu0 %3252
      %v3255 = vsel %vm1332, %v3251, 0
      %v3258 = vsel %vm1350, %v3253, 0
      %3260 = vmatprep.subr.bf16.mxu0 0
      %3261 = vmatpush1.bf16.msra.mxu0 %v3258
      %3262 = vmatprep.subr.bf16.mxu0 0
      %3263 = vmatpush1.bf16.msra.mxu0 0
      %3264 = vmatprep.subr.bf16.mxu0 0
      %3265 = vmatpush1.bf16.msra.mxu0 0
      %3266 = vmatprep.subr.bf16.mxu0 0
      %3267 = vmatpush1.bf16.msra.mxu0 0
      %3268 = vmatprep.subr.bf16.mxu0 0
      %3269 = vmatpush1.bf16.msra.mxu0 0
      %3270 = vmatprep.subr.bf16.mxu0 0
      %3271 = vmatpush1.bf16.msra.mxu0 0
      %3272 = vmatprep.subr.bf16.mxu0 0
      %3273 = vmatpush1.bf16.msra.mxu0 0
      %3274 = vmatprep.subr.bf16.mxu0 0
      %3275 = vmatpush1.bf16.msra.mxu0 0
      %3276 = vmatprep.subr.bf16.mxu0 0
      %3277 = vmatpush1.bf16.msra.mxu0 0
      %3278 = vmatprep.subr.bf16.mxu0 0
      %3279 = vmatpush1.bf16.msra.mxu0 0
      %3280 = vmatprep.subr.bf16.mxu0 0
      %3281 = vmatpush1.bf16.msra.mxu0 0
      %3282 = vmatprep.subr.bf16.mxu0 0
      %3283 = vmatpush1.bf16.msra.mxu0 0
      %3284 = vmatprep.subr.bf16.mxu0 0
      %3285 = vmatpush1.bf16.msra.mxu0 0
      %3286 = vmatprep.subr.bf16.mxu0 0
      %3287 = vmatpush1.bf16.msra.mxu0 0
      %3288 = vmatprep.subr.bf16.mxu0 0
      %3289 = vmatpush1.bf16.msra.mxu0 0
      %3290 = vmatprep.subr.bf16.mxu0 0
      %3291 = vmatpush1.bf16.msra.mxu0 0
      %3292 = vmatprep.mubr.bf16.mxu0 0
      %3293 = vmatmul.mubr.bf16.gmra.mrb[0].mxu0 %v3255
      %v3294 = vpop.f32.mrb[0].mxu0
      %v3295 = vadd.f32 0.0, %v3294
      %v3296 = vpop.f32.mrb[0].mxu0
      %v3297 = vpop.f32.mrb[0].mxu0
      %v3298 = vpop.f32.mrb[0].mxu0
      %3299 = vdwg.mxu0
      %v3300 = vpack.c.bf16 %v3295, %v3295
      %3302 = vrot.lane.b32.xlu0 %v3167, 112
      %v3303 = vpop.permute.xlu0 %3302
      %3304 = vrot.lane.b32.xlu0 %v2748, 80
      %v3305 = vpop.permute.xlu0 %3304
      %3306 = vrot.lane.b32.xlu0 %v3191, 120
      %v3307 = vpop.permute.xlu0 %3306
      %v3310 = vsel %vm1284, %v3303, 0
      %v3313 = vsel %vm1284, %v3305, 0
      %3315 = vmatprep.subr.bf16.mxu0 0
      %3316 = vmatpush1.bf16.xpose.msra.mxu0 %v3313
      %3317 = vmatprep.subr.bf16.mxu0 0
      %3318 = vmatpush1.bf16.xpose.msra.mxu0 0
      %3319 = vmatprep.subr.bf16.mxu0 0
      %3320 = vmatpush1.bf16.xpose.msra.mxu0 0
      %3321 = vmatprep.subr.bf16.mxu0 0
      %3322 = vmatpush1.bf16.xpose.msra.mxu0 0
      %3323 = vmatprep.subr.bf16.mxu0 0
      %3324 = vmatpush1.bf16.xpose.msra.mxu0 0
      %3325 = vmatprep.subr.bf16.mxu0 0
      %3326 = vmatpush1.bf16.xpose.msra.mxu0 0
      %3327 = vmatprep.subr.bf16.mxu0 0
      %3328 = vmatpush1.bf16.xpose.msra.mxu0 0
      %3329 = vmatprep.subr.bf16.mxu0 0
      %3330 = vmatpush1.bf16.xpose.msra.mxu0 0
      %3331 = vmatprep.subr.bf16.mxu0 0
      %3332 = vmatpush1.bf16.xpose.msra.mxu0 0
      %3333 = vmatprep.subr.bf16.mxu0 0
      %3334 = vmatpush1.bf16.xpose.msra.mxu0 0
      %3335 = vmatprep.subr.bf16.mxu0 0
      %3336 = vmatpush1.bf16.xpose.msra.mxu0 0
      %3337 = vmatprep.subr.bf16.mxu0 0
      %3338 = vmatpush1.bf16.xpose.msra.mxu0 0
      %3339 = vmatprep.subr.bf16.mxu0 0
      %3340 = vmatpush1.bf16.xpose.msra.mxu0 0
      %3341 = vmatprep.subr.bf16.mxu0 0
      %3342 = vmatpush1.bf16.xpose.msra.mxu0 0
      %3343 = vmatprep.subr.bf16.mxu0 0
      %3344 = vmatpush1.bf16.xpose.msra.mxu0 0
      %3345 = vmatprep.subr.bf16.mxu0 0
      %3346 = vmatpush1.bf16.xpose.msra.mxu0 0
      %3347 = vmatprep.mubr.bf16.mxu0 0
      %3348 = vmatmul.mubr.bf16.gmra.mrb[0].mxu0 %v3310
      %v3349 = vpop.f32.mrb[0].mxu0
      %v3350 = vadd.f32 %v3307, %v3349
      %v3351 = vpop.f32.mrb[0].mxu0
      %v3352 = vpop.f32.mrb[0].mxu0
      %v3353 = vpop.f32.mrb[0].mxu0
      %3354 = vdwg.mxu0
      %v3355 = vadd.f32 %v3350, %v1451
      %v3356 = vsel %vm1332, %v3355, -inf
      %3357 = vmax.xlane.f32.xlu0 %v3356
      %v3358 = vpop.xlane.xlu0 %3357
      %v3359 = vsub.f32 %v3355, %v3358
      %v3360 = vmul.f32 %v3359, 1.442695
      %v3361 = vpow.pop %v3360
      %v3362 = vsel %vm1332, %v3361, 0.0
      %3363 = vadd.xlane.f32.xlu0 %v3362
      %v3364 = vpop.xlane.xlu0 %3363
      %v3365 = vrcp.pop %v3364
      %v3366 = vmul.f32 %v3361, %v3365
      %v3367 = vpack.c.bf16 %v3366, %v3366
      %3368 = vrot.lane.b32.xlu0 %v2748, 48
      %v3369 = vpop.permute.xlu0 %3368
      %v3371 = vsel %vm1332, %v3367, 0
      %v3374 = vsel %vm1350, %v3369, 0
      %3376 = vmatprep.subr.bf16.mxu0 0
      %3377 = vmatpush1.bf16.msra.mxu0 %v3374
      %3378 = vmatprep.subr.bf16.mxu0 0
      %3379 = vmatpush1.bf16.msra.mxu0 0
      %3380 = vmatprep.subr.bf16.mxu0 0
      %3381 = vmatpush1.bf16.msra.mxu0 0
      %3382 = vmatprep.subr.bf16.mxu0 0
      %3383 = vmatpush1.bf16.msra.mxu0 0
      %3384 = vmatprep.subr.bf16.mxu0 0
      %3385 = vmatpush1.bf16.msra.mxu0 0
      %3386 = vmatprep.subr.bf16.mxu0 0
      %3387 = vmatpush1.bf16.msra.mxu0 0
      %3388 = vmatprep.subr.bf16.mxu0 0
      %3389 = vmatpush1.bf16.msra.mxu0 0
      %3390 = vmatprep.subr.bf16.mxu0 0
      %3391 = vmatpush1.bf16.msra.mxu0 0
      %3392 = vmatprep.subr.bf16.mxu0 0
      %3393 = vmatpush1.bf16.msra.mxu0 0
      %3394 = vmatprep.subr.bf16.mxu0 0
      %3395 = vmatpush1.bf16.msra.mxu0 0
      %3396 = vmatprep.subr.bf16.mxu0 0
      %3397 = vmatpush1.bf16.msra.mxu0 0
      %3398 = vmatprep.subr.bf16.mxu0 0
      %3399 = vmatpush1.bf16.msra.mxu0 0
      %3400 = vmatprep.subr.bf16.mxu0 0
      %3401 = vmatpush1.bf16.msra.mxu0 0
      %3402 = vmatprep.subr.bf16.mxu0 0
      %3403 = vmatpush1.bf16.msra.mxu0 0
      %3404 = vmatprep.subr.bf16.mxu0 0
      %3405 = vmatpush1.bf16.msra.mxu0 0
      %3406 = vmatprep.subr.bf16.mxu0 0
      %3407 = vmatpush1.bf16.msra.mxu0 0
      %3408 = vmatprep.mubr.bf16.mxu0 0
      %3409 = vmatmul.mubr.bf16.gmra.mrb[0].mxu0 %v3371
      %v3410 = vpop.f32.mrb[0].mxu0
      %v3411 = vadd.f32 0.0, %v3410
      %v3412 = vpop.f32.mrb[0].mxu0
      %v3413 = vpop.f32.mrb[0].mxu0
      %v3414 = vpop.f32.mrb[0].mxu0
      %3415 = vdwg.mxu0
      %v3416 = vpack.c.bf16 %v3411, %v3411
      %v3418 = vsel %vm1284, %v3416, 0
      %3420 = vmatprep.subr.bf16.mxu0 0
      %3421 = vmatpush1.bf16.msra.mxu0 %v1519
      %3422 = vmatprep.subr.bf16.mxu0 0
      %3423 = vmatpush1.bf16.msra.mxu0 0
      %3424 = vmatprep.subr.bf16.mxu0 0
      %3425 = vmatpush1.bf16.msra.mxu0 0
      %3426 = vmatprep.subr.bf16.mxu0 0
      %3427 = vmatpush1.bf16.msra.mxu0 0
      %3428 = vmatprep.subr.bf16.mxu0 0
      %3429 = vmatpush1.bf16.msra.mxu0 0
      %3430 = vmatprep.subr.bf16.mxu0 0
      %3431 = vmatpush1.bf16.msra.mxu0 0
      %3432 = vmatprep.subr.bf16.mxu0 0
      %3433 = vmatpush1.bf16.msra.mxu0 0
      %3434 = vmatprep.subr.bf16.mxu0 0
      %3435 = vmatpush1.bf16.msra.mxu0 0
      %3436 = vmatprep.subr.bf16.mxu0 0
      %3437 = vmatpush1.bf16.msra.mxu0 0
      %3438 = vmatprep.subr.bf16.mxu0 0
      %3439 = vmatpush1.bf16.msra.mxu0 0
      %3440 = vmatprep.subr.bf16.mxu0 0
      %3441 = vmatpush1.bf16.msra.mxu0 0
      %3442 = vmatprep.subr.bf16.mxu0 0
      %3443 = vmatpush1.bf16.msra.mxu0 0
      %3444 = vmatprep.subr.bf16.mxu0 0
      %3445 = vmatpush1.bf16.msra.mxu0 0
      %3446 = vmatprep.subr.bf16.mxu0 0
      %3447 = vmatpush1.bf16.msra.mxu0 0
      %3448 = vmatprep.subr.bf16.mxu0 0
      %3449 = vmatpush1.bf16.msra.mxu0 0
      %3450 = vmatprep.subr.bf16.mxu0 0
      %3451 = vmatpush1.bf16.msra.mxu0 0
      %3452 = vmatprep.mubr.bf16.mxu0 0
      %3453 = vmatmul.mubr.bf16.gmra.mrb[0].mxu0 %v3418
      %v3454 = vpop.f32.mrb[0].mxu0
      %v3455 = vadd.f32 0.0, %v3454
      %v3456 = vpop.f32.mrb[0].mxu0
      %v3457 = vpop.f32.mrb[0].mxu0
      %v3458 = vpop.f32.mrb[0].mxu0
      %3459 = vdwg.mxu0
      %v3461 = vsel %vm1284, %v3300, 0
      %3463 = vmatprep.subr.bf16.mxu0 0
      %3464 = vmatpush1.bf16.msra.mxu0 %v1568
      %3465 = vmatprep.subr.bf16.mxu0 0
      %3466 = vmatpush1.bf16.msra.mxu0 0
      %3467 = vmatprep.subr.bf16.mxu0 0
      %3468 = vmatpush1.bf16.msra.mxu0 0
      %3469 = vmatprep.subr.bf16.mxu0 0
      %3470 = vmatpush1.bf16.msra.mxu0 0
      %3471 = vmatprep.subr.bf16.mxu0 0
      %3472 = vmatpush1.bf16.msra.mxu0 0
      %3473 = vmatprep.subr.bf16.mxu0 0
      %3474 = vmatpush1.bf16.msra.mxu0 0
      %3475 = vmatprep.subr.bf16.mxu0 0
      %3476 = vmatpush1.bf16.msra.mxu0 0
      %3477 = vmatprep.subr.bf16.mxu0 0
      %3478 = vmatpush1.bf16.msra.mxu0 0
      %3479 = vmatprep.subr.bf16.mxu0 0
      %3480 = vmatpush1.bf16.msra.mxu0 0
      %3481 = vmatprep.subr.bf16.mxu0 0
      %3482 = vmatpush1.bf16.msra.mxu0 0
      %3483 = vmatprep.subr.bf16.mxu0 0
      %3484 = vmatpush1.bf16.msra.mxu0 0
      %3485 = vmatprep.subr.bf16.mxu0 0
      %3486 = vmatpush1.bf16.msra.mxu0 0
      %3487 = vmatprep.subr.bf16.mxu0 0
      %3488 = vmatpush1.bf16.msra.mxu0 0
      %3489 = vmatprep.subr.bf16.mxu0 0
      %3490 = vmatpush1.bf16.msra.mxu0 0
      %3491 = vmatprep.subr.bf16.mxu0 0
      %3492 = vmatpush1.bf16.msra.mxu0 0
      %3493 = vmatprep.subr.bf16.mxu0 0
      %3494 = vmatpush1.bf16.msra.mxu0 0
      %3495 = vmatprep.mubr.bf16.mxu0 0
      %3496 = vmatmul.mubr.bf16.gmra.mrb[0].mxu0 %v3461
      %v3497 = vpop.f32.mrb[0].mxu0
      %v3498 = vadd.f32 %v3455, %v3497
      %v3499 = vpop.f32.mrb[0].mxu0
      %v3500 = vpop.f32.mrb[0].mxu0
      %v3501 = vpop.f32.mrb[0].mxu0
      %3502 = vdwg.mxu0
      %v3503 = vadd.f32 %v3498, %v1617
      %v3504 = vadd.f32 %v3503, %v2703
      %v3505 = vsel %vm541, %v3504, 0.0
      %3506 = vadd.xlane.f32.xlu0 %v3505
      %v3507 = vpop.xlane.xlu0 %3506
      %v3508 = vmul.f32 %v3507, %v1624
      %v3509 = vsub.f32 %v3504, %v3508
      %v3510 = vmul.f32 %v3509, %v3509
      %v3511 = vsel %vm541, %v3510, 0.0
      %3512 = vadd.xlane.f32.xlu0 %v3511
      %v3513 = vpop.xlane.xlu0 %3512
      %v3514 = vmul.f32 %v3513, %v1624
      %v3515 = vadd.f32 %v3514, 1e-05
      %v3516 = vrsqrt.pop %v3515
      %v3517 = vmul.f32 %v3509, %v3516
      %v3518 = vpack.c.bf16 %v3517, %v3517
      %v3520 = vsel %vm541, %v3518, 0
      %3522 = vmatprep.subr.bf16.mxu0 0
      %3523 = vmatpush1.bf16.msra.mxu0 %v1650
      %3524 = vmatprep.subr.bf16.mxu0 0
      %3525 = vmatpush1.bf16.msra.mxu0 %v1651
      %3526 = vmatprep.subr.bf16.mxu0 0
      %3527 = vmatpush1.bf16.msra.mxu0 0
      %3528 = vmatprep.subr.bf16.mxu0 0
      %3529 = vmatpush1.bf16.msra.mxu0 0
      %3530 = vmatprep.subr.bf16.mxu0 0
      %3531 = vmatpush1.bf16.msra.mxu0 0
      %3532 = vmatprep.subr.bf16.mxu0 0
      %3533 = vmatpush1.bf16.msra.mxu0 0
      %3534 = vmatprep.subr.bf16.mxu0 0
      %3535 = vmatpush1.bf16.msra.mxu0 0
      %3536 = vmatprep.subr.bf16.mxu0 0
      %3537 = vmatpush1.bf16.msra.mxu0 0
      %3538 = vmatprep.subr.bf16.mxu0 0
      %3539 = vmatpush1.bf16.msra.mxu0 0
      %3540 = vmatprep.subr.bf16.mxu0 0
      %3541 = vmatpush1.bf16.msra.mxu0 0
      %3542 = vmatprep.subr.bf16.mxu0 0
      %3543 = vmatpush1.bf16.msra.mxu0 0
      %3544 = vmatprep.subr.bf16.mxu0 0
      %3545 = vmatpush1.bf16.msra.mxu0 0
      %3546 = vmatprep.subr.bf16.mxu0 0
      %3547 = vmatpush1.bf16.msra.mxu0 0
      %3548 = vmatprep.subr.bf16.mxu0 0
      %3549 = vmatpush1.bf16.msra.mxu0 0
      %3550 = vmatprep.subr.bf16.mxu0 0
      %3551 = vmatpush1.bf16.msra.mxu0 0
      %3552 = vmatprep.subr.bf16.mxu0 0
      %3553 = vmatpush1.bf16.msra.mxu0 0
      %3554 = vmatprep.mubr.bf16.mxu0 0
      %3555 = vmatmul.mubr.bf16.gmra.mrb[0].mxu0 %v3520
      %v3556 = vpop.f32.mrb[0].mxu0
      %v3557 = vadd.f32 %v1640, %v3556
      %v3558 = vpop.f32.mrb[0].mxu0
      %v3559 = vpop.f32.mrb[0].mxu0
      %v3560 = vpop.f32.mrb[0].mxu0
      %3561 = vdwg.mxu0
      %v3562 = vmax.f32 %v3557, 0.0
      %v3563 = vpack.c.bf16 %v3562, %v3562
      %v3565 = vsel %vm1729, %v3563, 0
      %3567 = vmatprep.subr.bf16.mxu0 0
      %3568 = vmatpush1.bf16.msra.mxu0 %v1721
      %3569 = vmatprep.subr.bf16.mxu0 0
      %3570 = vmatpush1.bf16.msra.mxu0 %v1722
      %3571 = vmatprep.subr.bf16.mxu0 0
      %3572 = vmatpush1.bf16.msra.mxu0 %v1723
      %3573 = vmatprep.subr.bf16.mxu0 0
      %3574 = vmatpush1.bf16.msra.mxu0 %v1724
      %3575 = vmatprep.subr.bf16.mxu0 0
      %3576 = vmatpush1.bf16.msra.mxu0 0
      %3577 = vmatprep.subr.bf16.mxu0 0
      %3578 = vmatpush1.bf16.msra.mxu0 0
      %3579 = vmatprep.subr.bf16.mxu0 0
      %3580 = vmatpush1.bf16.msra.mxu0 0
      %3581 = vmatprep.subr.bf16.mxu0 0
      %3582 = vmatpush1.bf16.msra.mxu0 0
      %3583 = vmatprep.subr.bf16.mxu0 0
      %3584 = vmatpush1.bf16.msra.mxu0 0
      %3585 = vmatprep.subr.bf16.mxu0 0
      %3586 = vmatpush1.bf16.msra.mxu0 0
      %3587 = vmatprep.subr.bf16.mxu0 0
      %3588 = vmatpush1.bf16.msra.mxu0 0
      %3589 = vmatprep.subr.bf16.mxu0 0
      %3590 = vmatpush1.bf16.msra.mxu0 0
      %3591 = vmatprep.subr.bf16.mxu0 0
      %3592 = vmatpush1.bf16.msra.mxu0 0
      %3593 = vmatprep.subr.bf16.mxu0 0
      %3594 = vmatpush1.bf16.msra.mxu0 0
      %3595 = vmatprep.subr.bf16.mxu0 0
      %3596 = vmatpush1.bf16.msra.mxu0 0
      %3597 = vmatprep.subr.bf16.mxu0 0
      %3598 = vmatpush1.bf16.msra.mxu0 0
      %3599 = vmatprep.mubr.bf16.mxu0 0
      %3600 = vmatmul.mubr.bf16.gmra.mrb[0].mxu0 %v3565
      %v3601 = vpop.f32.mrb[0].mxu0
      %v3602 = vadd.f32 %v1703, %v3601
      %v3603 = vpop.f32.mrb[0].mxu0
      %v3604 = vpop.f32.mrb[0].mxu0
      %v3605 = vpop.f32.mrb[0].mxu0
      %3606 = vdwg.mxu0
      %v3607 = vadd.f32 %v3602, %v3517
      %v3608 = vsel %vm541, %v3607, 0.0
      %3609 = vadd.xlane.f32.xlu0 %v3608
      %v3610 = vpop.xlane.xlu0 %3609
      %v3611 = vmul.f32 %v3610, %v1624
      %v3612 = vsub.f32 %v3607, %v3611
      %v3613 = vmul.f32 %v3612, %v3612
      %v3614 = vsel %vm541, %v3613, 0.0
      %3615 = vadd.xlane.f32.xlu0 %v3614
      %v3616 = vpop.xlane.xlu0 %3615
      %v3617 = vmul.f32 %v3616, %v1624
      %v3618 = vadd.f32 %v3617, 1e-05
      %v3619 = vrsqrt.pop %v3618
      %v3620 = vmul.f32 %v3612, %v3619
      %3622 = vrot.lane.b32.xlu0 %v612, 32
      %v3623 = vpop.permute.xlu0 %3622
      %v3625 = vsel %vm541, %v3620, %v3623
      %3626 = vst [vmem:[%s523] sm:$0xff] %v3625
      %v3627 = vpack.c.bf16 %v3620, %v3620
      %v3628 = vld [vmem:[%s13] sm:$0xf]
      %v3629 = vld [vmem:[%s13 + $0x4] sm:$0xf]
      %v3630 = vld [vmem:[%s13 + $0x8] sm:$0xf]
      %v3631 = vld [vmem:[%s13 + $0xc] sm:$0xf]
      %v3632 = vld [vmem:[%s14] sm:$0x1]
      %v3634 = vlaneseq
      %v3635 = vshrl.u32 %v3634, 7
      %v3636 = vsub.s32 0, %v3635
      %v3637 = vrot.slane %v3632, %v3636
      %v3643 = vunpack.c.l.b16 %v3628
      %v3644 = vunpack.c.l.b16 %v3629
      %v3645 = vunpack.c.l.b16 %v3630
      %v3646 = vunpack.c.l.b16 %v3631
      %v3647 = vpack.c.b16 %v3644, %v3643
      %v3648 = vpack.c.b16 %v3646, %v3645
      %v3652 = vsel %vm541, %v3627, 0
      %3654 = vmatprep.subr.bf16.mxu0 0
      %3655 = vmatpush1.bf16.msra.mxu0 %v3647
      %3656 = vmatprep.subr.bf16.mxu0 0
      %3657 = vmatpush1.bf16.msra.mxu0 %v3648
      %3658 = vmatprep.subr.bf16.mxu0 0
      %3659 = vmatpush1.bf16.msra.mxu0 0
      %3660 = vmatprep.subr.bf16.mxu0 0
      %3661 = vmatpush1.bf16.msra.mxu0 0
      %3662 = vmatprep.subr.bf16.mxu0 0
      %3663 = vmatpush1.bf16.msra.mxu0 0
      %3664 = vmatprep.subr.bf16.mxu0 0
      %3665 = vmatpush1.bf16.msra.mxu0 0
      %3666 = vmatprep.subr.bf16.mxu0 0
      %3667 = vmatpush1.bf16.msra.mxu0 0
      %3668 = vmatprep.subr.bf16.mxu0 0
      %3669 = vmatpush1.bf16.msra.mxu0 0
      %3670 = vmatprep.subr.bf16.mxu0 0
      %3671 = vmatpush1.bf16.msra.mxu0 0
      %3672 = vmatprep.subr.bf16.mxu0 0
      %3673 = vmatpush1.bf16.msra.mxu0 0
      %3674 = vmatprep.subr.bf16.mxu0 0
      %3675 = vmatpush1.bf16.msra.mxu0 0
      %3676 = vmatprep.subr.bf16.mxu0 0
      %3677 = vmatpush1.bf16.msra.mxu0 0
      %3678 = vmatprep.subr.bf16.mxu0 0
      %3679 = vmatpush1.bf16.msra.mxu0 0
      %3680 = vmatprep.subr.bf16.mxu0 0
      %3681 = vmatpush1.bf16.msra.mxu0 0
      %3682 = vmatprep.subr.bf16.mxu0 0
      %3683 = vmatpush1.bf16.msra.mxu0 0
      %3684 = vmatprep.subr.bf16.mxu0 0
      %3685 = vmatpush1.bf16.msra.mxu0 0
      %3686 = vmatprep.mubr.bf16.mxu0 0
      %3687 = vmatmul.mubr.bf16.gmra.mrb[0].mxu0 %v3652
      %v3688 = vpop.f32.mrb[0].mxu0
      %v3689 = vadd.f32 %v3637, %v3688
      %v3690 = vpop.f32.mrb[0].mxu0
      %v3691 = vpop.f32.mrb[0].mxu0
      %v3692 = vpop.f32.mrb[0].mxu0
      %3693 = vdwg.mxu0
      %3694 = vst [vmem:[%s527] sm:$0xff] %v3689
      %p3695 = scmp.lt.s32.totalorder %s28, 1
      %s3696 = scalar_select %p3695, %s28, 1
      %s3697 = smul.addr %s3696, 8
      %s3698 = scalar_lea.vmem %s15, %s3697
      %p3699 = scmp.lt.s32.totalorder %s28, 1
      %s3700 = scalar_select %p3699, %s28, 1
      %s3701 = smul.addr %s3700, 8
      %s3702 = scalar_lea.vmem %s16, %s3701
      // Predicated region
      $region81: #{deq_transformer_lm_forward.1} parent=79 // pred_check
        %p3703 = pneg %p366
      $region82: #{deq_transformer_lm_forward.1} parent=79 // pred_check_branch
        %3705 = sbr.rel (%p3703) target = $region84
      $region83: #{deq_transformer_lm_forward.1} parent=79 // pred_region
        _
      $region84: #{deq_transformer_lm_forward.1} parent=79 // pred_fallthru
        _
      // Predicated region
      $region85: #{deq_transformer_lm_forward.1} parent=79 // pred_check
        %p3706 = pneg %p392
      $region86: #{deq_transformer_lm_forward.1} parent=79 // pred_check_branch
        %3708 = sbr.rel (%p3706) target = $region88
      $region87: #{deq_transformer_lm_forward.1} parent=79 // pred_region
        _
      $region88: #{deq_transformer_lm_forward.1} parent=79 // pred_fallthru
        _
    $region80: #{deq_transformer_lm_forward.1} parent=5 // pred_fallthru
      _
    %p3709 = scmp.le.s32.totalorder 2, %s23
    // Predicated region
    $region89: #{deq_transformer_lm_forward.1} parent=5 // pred_check
      %p3710 = pneg %p3709
    $region90: #{deq_transformer_lm_forward.1} parent=5 // pred_check_branch
      %3712 = sbr.rel (%p3710) target = $region92
    $region91: #{deq_transformer_lm_forward.1} parent=5 // pred_region
      %s3713 = ssub.s32 %s23, 2
      // Predicated region
      $region93: #{deq_transformer_lm_forward.1} parent=91 // pred_check
        %p3714 = pneg %p372
      $region94: #{deq_transformer_lm_forward.1} parent=91 // pred_check_branch
        %3716 = sbr.rel (%p3714) target = $region96
      $region95: #{deq_transformer_lm_forward.1} parent=91 // pred_region
        %p3717 = scmp.lt.s32.totalorder %s29, 1
        %s3718 = scalar_select %p3717, %s29, 1
        %s3719 = smul.addr %s3718, 8
        %s3720 = scalar_lea.vmem %s15, %s3719
      $region96: #{deq_transformer_lm_forward.1} parent=91 // pred_fallthru
        _
      // Predicated region
      $region97: #{deq_transformer_lm_forward.1} parent=91 // pred_check
        %p3721 = pneg %p398
      $region98: #{deq_transformer_lm_forward.1} parent=91 // pred_check_branch
        %3723 = sbr.rel (%p3721) target = $region100
      $region99: #{deq_transformer_lm_forward.1} parent=91 // pred_region
        %p3724 = scmp.lt.s32.totalorder %s29, 1
        %s3725 = scalar_select %p3724, %s29, 1
        %s3726 = smul.addr %s3725, 8
        %s3727 = scalar_lea.vmem %s16, %s3726
      $region100: #{deq_transformer_lm_forward.1} parent=91 // pred_fallthru
        _
    $region92: #{deq_transformer_lm_forward.1} parent=5 // pred_fallthru
      _
  $region6: #{deq_transformer_lm_forward.1} parent=0 // loop_footer
    %s27 = sadd.s32 1, %s23
  $region7: #{deq_transformer_lm_forward.1} parent=0 // loop_footer_branch
    %22 = sbr.rel target = $region3
  $region8: #{deq_transformer_lm_forward.1} parent=0 // loop_exit
    _

</llo_original>
